<compile_context>
chip_gen: v7x
topology: tpu7x:2x2x1
jax: 0.10.0
libtpu: 0.0.40
codegen_flags: <defaults>
</compile_context>

<pallas_src>
import functools

import jax
import jax.numpy as jnp
from jax import lax
from jax.experimental import pallas as pl
from jax.experimental.pallas import tpu as pltpu


# ---------------------------------------------------------------------------
# helpers shared by the kernel and the pure-JAX reference
# ---------------------------------------------------------------------------
_LN_EPS = 1e-5
_INV_SQRT2 = 0.7071067811865476


def _layer_norm(x, gamma, beta):
    mu = jnp.mean(x, axis=-1, keepdims=True)
    var = jnp.mean((x - mu) ** 2, axis=-1, keepdims=True)
    return (x - mu) * lax.rsqrt(var + _LN_EPS) * gamma + beta


def _gelu_exact(x):
    # exact (erf based) GELU, same as torch.nn.GELU() default
    return 0.5 * x * (1.0 + lax.erf(x * _INV_SQRT2))


# ---------------------------------------------------------------------------
# Pallas kernel: one (batch element, query tile) per grid step
# ---------------------------------------------------------------------------
def vit_block_kernel(
    x_ref,                     # (1, N, C)  full sequence of current batch element (f32)
    ln1g_ref, ln1b_ref,        # (1, C) f32
    wqkv_ref,                  # (C, 3C)    bf16 (PyTorch qkv.weight transposed)
    wproj_ref, bproj_ref,      # (C, C) bf16, (1, C) f32
    ln2g_ref, ln2b_ref,        # (1, C) f32
    wfc1_ref, bfc1_ref,        # (C, H) bf16, (1, H) f32
    wfc2_ref, bfc2_ref,        # (H, C) bf16, (1, C) f32
    o_ref,                     # (1, TQ, C)
    k_scr, v_scr,              # (N, C) bf16 lane-dense K / V, persistent across the t axis
    *, num_heads, scale, tq,
):
    t = pl.program_id(1)
    N, C = x_ref.shape[1], x_ref.shape[2]
    hd = C // num_heads
    bf16, f32 = jnp.bfloat16, jnp.float32

    ln1g, ln1b = ln1g_ref[0], ln1b_ref[0]

    # ---- once per batch element: K and V for the full sequence -> lane-dense scratch ----
    @pl.when(t == 0)
    def _():
        xn = _layer_norm(x_ref[0], ln1g, ln1b).astype(bf16)                 # (N, C)
        kv = jnp.dot(xn, wqkv_ref[:, C:], preferred_element_type=f32)       # (N, 2C) f32 acc
        # 128-lane-aligned slices -> unmasked, lane-dense stores.
        k_scr[...] = kv[:, :C].astype(bf16)
        v_scr[...] = kv[:, C:].astype(bf16)

    # ---- current query tile, sliced from the resident full-sequence block --------------
    start = pl.multiple_of(t * tq, tq)
    x_t = x_ref[0, pl.ds(start, tq), :]                                      # (TQ, C) f32
    xn_t = _layer_norm(x_t, ln1g, ln1b)
    q = jnp.dot(xn_t.astype(bf16), wqkv_ref[:, :C], preferred_element_type=f32)
    q = (q * scale).astype(bf16)                                             # (TQ, C)

    # Per-head attention.  hd (32 here / 64 for ViT-B/L) is the contraction dim of the
    # scores matmul either way, so per-head 2-D dots have the same MXU utilization as a
    # head-batched dot_general, while Q/K/V stay lane-dense (no (.., hd)-minor scratch and
    # no 32-lane masked stores); head split/merge are pure value ops (lane slice + concat).
    ctx = []
    for h in range(num_heads):
        sl = slice(h * hd, (h + 1) * hd)
        s = lax.dot_general(q[:, sl], k_scr[:, sl],                          # (TQ,hd)x(N,hd)^T
                            dimension_numbers=(((1,), (1,)), ((), ())),
                            preferred_element_type=f32)                      # (TQ, N)
        s = s - jnp.max(s, axis=-1, keepdims=True)
        p = jnp.exp(s)
        p = p * pl.reciprocal(jnp.sum(p, axis=-1, keepdims=True), approx=True)
        ctx.append(jnp.dot(p.astype(bf16), v_scr[:, sl],
                           preferred_element_type=f32))                      # (TQ, hd)
    attn = jnp.concatenate(ctx, axis=-1).astype(bf16)                        # (TQ, C)

    proj = jnp.dot(attn, wproj_ref[...], preferred_element_type=f32) + bproj_ref[0]
    x1 = x_t + proj                     # residual 1 (DropPath / dropout = identity)

    # ---- MLP on the same query tile -----------------------------------------------------
    xn2 = _layer_norm(x1, ln2g_ref[0], ln2b_ref[0])
    h1 = jnp.dot(xn2.astype(bf16), wfc1_ref[...], preferred_element_type=f32) + bfc1_ref[0]
    h1 = _gelu_exact(h1)
    h2 = jnp.dot(h1.astype(bf16), wfc2_ref[...], preferred_element_type=f32) + bfc2_ref[0]

    o_ref[0] = (x1 + h2).astype(o_ref.dtype)    # residual 2


# ---------------------------------------------------------------------------
# wrapper
# ---------------------------------------------------------------------------
_PARAM_ORDER = (
    "ln1_g", "ln1_b", "w_qkv", "w_proj", "b_proj",
    "ln2_g", "ln2_b", "w_fc1", "b_fc1", "w_fc2", "b_fc2",
)
_BF16_WEIGHTS = frozenset({"w_qkv", "w_proj", "w_fc1", "w_fc2"})


def _vmem_limit_bytes():
    # ~3/4 of physical VMEM: ~48 MiB on v7x (64 MiB/TC), ~96 MiB on v5e/v6e (128 MiB).
    try:
        cap = pltpu.get_tpu_info().vmem_capacity_bytes
        return min(int(cap) * 3 // 4, 128 * 1024 * 1024)
    except Exception:
        return 48 * 1024 * 1024


def vit_block(x, params, num_heads, *, q_tile=256):
    B, N, C = x.shape
    assert C % num_heads == 0
    hd = C // num_heads
    H = params["w_fc1"].shape[1]
    tq = q_tile if (q_tile <= N and N % q_tile == 0) else N   # single-tile fallback
    scale = float(hd ** -0.5)

    # bf16 matmul weights (f32 accumulation in-kernel); LN params / biases stay f32.
    weights = [params[k].astype(jnp.bfloat16 if k in _BF16_WEIGHTS else jnp.float32)
               for k in _PARAM_ORDER]

    kernel = functools.partial(vit_block_kernel,
                               num_heads=num_heads, scale=scale, tq=tq)

    # Weights: whole-array VMEM residents -> single copy, constant block, no rebuffering.
    w_spec = pl.BlockSpec(memory_space=pltpu.MemorySpace.VMEM)

    in_specs = ([pl.BlockSpec((1, N, C), lambda b, t: (b, 0, 0))]   # x: once per batch elem
                + [w_spec] * len(weights))
    out_spec = pl.BlockSpec((1, tq, C), lambda b, t: (b, t, 0))     # lane-dense output tile

    flops = B * (6 * N * C * C          # qkv projection
                 + 4 * N * N * C        # scores + context
                 + 2 * N * C * C        # output projection
                 + 4 * N * C * H)       # fc1 + fc2
    transcendentals = B * (num_heads * N * N + N * H + 4 * N)
    bytes_accessed = (2 * int(x.size) * x.dtype.itemsize            # x read + out write
                      + sum(int(w.size) * w.dtype.itemsize for w in weights))

    return pl.pallas_call(
        kernel,
        out_shape=jax.ShapeDtypeStruct((B, N, C), x.dtype),
        grid=(B, N // tq),
        in_specs=in_specs,
        out_specs=out_spec,
        scratch_shapes=[
            pltpu.VMEM((N, C), jnp.bfloat16),   # K (lane-dense, per batch element)
            pltpu.VMEM((N, C), jnp.bfloat16),   # V (lane-dense, per batch element)
        ],
        compiler_params=pltpu.CompilerParams(
            # batch axis parallel (both TCs on v7x for B >= 2); the query-tile axis carries
            # the K/V-scratch dependence and must stay arbitrary.
            dimension_semantics=("parallel", "arbitrary"),
            vmem_limit_bytes=_vmem_limit_bytes(),
        ),
        cost_estimate=pl.CostEstimate(
            flops=flops,
            transcendentals=transcendentals,
            bytes_accessed=bytes_accessed),
    )(x, *weights)


# ---------------------------------------------------------------------------
# pure-JAX reference (mirrors the PyTorch forward exactly, all f32)
# ---------------------------------------------------------------------------
def vit_block_reference(x, p, num_heads):
    B, N, C = x.shape
    hd = C // num_heads
    scale = hd ** -0.5

    xn = _layer_norm(x, p["ln1_g"][0], p["ln1_b"][0])
    qkv = xn @ p["w_qkv"]                                   # (B, N, 3C)
    qkv = qkv.reshape(B, N, 3, num_heads, hd).transpose(2, 0, 3, 1, 4)
    q, k, v = qkv[0], qkv[1], qkv[2]                        # (B, nh, N, hd)
    attn = jnp.einsum("bhnd,bhmd->bhnm", q, k) * scale
    attn = jax.nn.softmax(attn, axis=-1)
    out = jnp.einsum("bhnm,bhmd->bhnd", attn, v)            # (B, nh, N, hd)
    out = out.transpose(0, 2, 1, 3).reshape(B, N, C)
    x1 = x + out @ p["w_proj"] + p["b_proj"][0]

    xn2 = _layer_norm(x1, p["ln2_g"][0], p["ln2_b"][0])
    h = _gelu_exact(xn2 @ p["w_fc1"] + p["b_fc1"][0])
    return x1 + h @ p["w_fc2"] + p["b_fc2"][0]


# ---------------------------------------------------------------------------
# main
# ---------------------------------------------------------------------------
if __name__ == "__main__":
    # Small but layout-realistic: C is a multiple of 128 (lane width), N = 2 query tiles of
    # 128 so the sequence-tiled / persistent-K-V path is exercised, B = 2 (even) so the
    # parallel batch axis can shard across both TCs on v7x.
    B, N, C = 2, 256, 128
    num_heads = 4                # head_dim = 32
    mlp_hidden = int(C * 4.0)    # mlp_ratio = 4.0

    key = jax.random.PRNGKey(0)
    keys = jax.random.split(key, 12)
    f32 = jnp.float32

    params = {
        "ln1_g": (1.0 + 0.1 * jax.random.normal(keys[0], (1, C), f32)),
        "ln1_b": 0.1 * jax.random.normal(keys[1], (1, C), f32),
        "w_qkv": 0.05 * jax.random.normal(keys[2], (C, 3 * C), f32),   # qkv_bias=False
        "w_proj": 0.05 * jax.random.normal(keys[3], (C, C), f32),
        "b_proj": 0.05 * jax.random.normal(keys[4], (1, C), f32),
        "ln2_g": (1.0 + 0.1 * jax.random.normal(keys[5], (1, C), f32)),
        "ln2_b": 0.1 * jax.random.normal(keys[6], (1, C), f32),
        "w_fc1": 0.05 * jax.random.normal(keys[7], (C, mlp_hidden), f32),
        "b_fc1": 0.05 * jax.random.normal(keys[8], (1, mlp_hidden), f32),
        "w_fc2": 0.05 * jax.random.normal(keys[9], (mlp_hidden, C), f32),
        "b_fc2": 0.05 * jax.random.normal(keys[10], (1, C), f32),
    }
    x = jax.random.normal(keys[11], (B, N, C), f32)

    # q_tile=128 -> 2 query tiles per batch element (exercises the K/V-persistence path);
    # default q_tile=256 targets the 256-wide MXU on v6e/v7x for production shapes.
    out = jax.block_until_ready(vit_block(x, params, num_heads, q_tile=128))
    ref = jax.block_until_ready(vit_block_reference(x, params, num_heads))

    assert out.shape == (B, N, C) and out.dtype == jnp.float32
    # bf16 matmul operands (f32 accumulation) + approximate softmax reciprocal vs. the
    # all-f32 reference -> a few-percent absolute/relative tolerance.
    max_diff = float(jnp.max(jnp.abs(out - ref)))
    assert jnp.allclose(out, ref, atol=5e-2, rtol=5e-2), f"max abs diff = {max_diff}"
    print("KERNEL_OK")
</pallas_src>

<mosaic_0001>
module attributes {stable_mosaic.version = 11 : i64} {
  func.func @vit_block_kernel(%arg0: i32, %arg1: i32, %arg2: memref<1x256x128xf32, #tpu.memory_space<vmem>>, %arg3: memref<1x128xf32, #tpu.memory_space<vmem>>, %arg4: memref<1x128xf32, #tpu.memory_space<vmem>>, %arg5: memref<128x384xbf16, #tpu.memory_space<vmem>>, %arg6: memref<128x128xbf16, #tpu.memory_space<vmem>>, %arg7: memref<1x128xf32, #tpu.memory_space<vmem>>, %arg8: memref<1x128xf32, #tpu.memory_space<vmem>>, %arg9: memref<1x128xf32, #tpu.memory_space<vmem>>, %arg10: memref<128x512xbf16, #tpu.memory_space<vmem>>, %arg11: memref<1x512xf32, #tpu.memory_space<vmem>>, %arg12: memref<512x128xbf16, #tpu.memory_space<vmem>>, %arg13: memref<1x128xf32, #tpu.memory_space<vmem>>, %arg14: memref<1x128x128xf32, #tpu.memory_space<vmem>>, %arg15: memref<256x128xbf16, #tpu.memory_space<vmem>>, %arg16: memref<256x128xbf16, #tpu.memory_space<vmem>>) attributes {dimension_semantics = [#tpu.dimension_semantics<parallel>, #tpu.dimension_semantics<arbitrary>], iteration_bounds = array<i64: 2, 2>, scalar_prefetch = 0 : i64, scratch_operands = 2 : i64, tpu.core_type = #tpu.core_type<tc>, window_params = [{transform_indices = @transform_0, window_bounds = array<i64: 1, 256, 128>}, {pipeline_mode = #tpu.pipeline_mode<synchronous>, transform_indices = @transform_1, window_bounds = array<i64: 1, 128>}, {pipeline_mode = #tpu.pipeline_mode<synchronous>, transform_indices = @transform_2, window_bounds = array<i64: 1, 128>}, {pipeline_mode = #tpu.pipeline_mode<synchronous>, transform_indices = @transform_3, window_bounds = array<i64: 128, 384>}, {pipeline_mode = #tpu.pipeline_mode<synchronous>, transform_indices = @transform_4, window_bounds = array<i64: 128, 128>}, {pipeline_mode = #tpu.pipeline_mode<synchronous>, transform_indices = @transform_5, window_bounds = array<i64: 1, 128>}, {pipeline_mode = #tpu.pipeline_mode<synchronous>, transform_indices = @transform_6, window_bounds = array<i64: 1, 128>}, {pipeline_mode = #tpu.pipeline_mode<synchronous>, transform_indices = @transform_7, window_bounds = array<i64: 1, 128>}, {pipeline_mode = #tpu.pipeline_mode<synchronous>, transform_indices = @transform_8, window_bounds = array<i64: 128, 512>}, {pipeline_mode = #tpu.pipeline_mode<synchronous>, transform_indices = @transform_9, window_bounds = array<i64: 1, 512>}, {pipeline_mode = #tpu.pipeline_mode<synchronous>, transform_indices = @transform_10, window_bounds = array<i64: 512, 128>}, {pipeline_mode = #tpu.pipeline_mode<synchronous>, transform_indices = @transform_11, window_bounds = array<i64: 1, 128>}, {transform_indices = @transform_12, window_bounds = array<i64: 1, 128, 128>}]} {
    %c0 = arith.constant 0 : index
    %c0_0 = arith.constant 0 : index
    %0 = vector.load %arg3[%c0, %c0_0] : memref<1x128xf32, #tpu.memory_space<vmem>>, vector<1x128xf32>
    %1 = vector.shape_cast %0 : vector<1x128xf32> to vector<128xf32>
    %c0_1 = arith.constant 0 : index
    %c0_2 = arith.constant 0 : index
    %2 = vector.load %arg4[%c0_1, %c0_2] : memref<1x128xf32, #tpu.memory_space<vmem>>, vector<1x128xf32>
    %3 = vector.shape_cast %2 : vector<1x128xf32> to vector<128xf32>
    %c0_i32 = arith.constant 0 : i32
    %4 = arith.cmpi eq, %arg1, %c0_i32 : i32
    %5 = arith.extui %4 : i1 to i32
    %c0_i32_3 = arith.constant 0 : i32
    %6 = arith.cmpi ne, %5, %c0_i32_3 : i32
    scf.if %6 {
      %c0_73 = arith.constant 0 : index
      %c0_74 = arith.constant 0 : index
      %c0_75 = arith.constant 0 : index
      %172 = vector.load %arg2[%c0_73, %c0_74, %c0_75] : memref<1x256x128xf32, #tpu.memory_space<vmem>>, vector<1x256x128xf32>
      %173 = vector.shape_cast %172 : vector<1x256x128xf32> to vector<256x128xf32>
      %cst_76 = arith.constant dense<0.000000e+00> : vector<256xf32>
      %174 = vector.multi_reduction <add>, %173, %cst_76 [1] : vector<256x128xf32> to vector<256xf32>
      %175 = vector.shape_cast %174 : vector<256xf32> to vector<256x1xf32>
      %cst_77 = arith.constant 1.280000e+02 : f32
      %176 = vector.broadcast %cst_77 : f32 to vector<256x1xf32>
      %177 = arith.divf %175, %176 : vector<256x1xf32>
      %178 = vector.broadcast %177 : vector<256x1xf32> to vector<256x128xf32>
      %179 = arith.subf %173, %178 : vector<256x128xf32>
      %180 = arith.mulf %179, %179 : vector<256x128xf32>
      %cst_78 = arith.constant dense<0.000000e+00> : vector<256xf32>
      %181 = vector.multi_reduction <add>, %180, %cst_78 [1] : vector<256x128xf32> to vector<256xf32>
      %182 = vector.shape_cast %181 : vector<256xf32> to vector<256x1xf32>
      %cst_79 = arith.constant 1.280000e+02 : f32
      %183 = vector.broadcast %cst_79 : f32 to vector<256x1xf32>
      %184 = arith.divf %182, %183 : vector<256x1xf32>
      %185 = vector.broadcast %177 : vector<256x1xf32> to vector<256x128xf32>
      %186 = arith.subf %173, %185 : vector<256x128xf32>
      %cst_80 = arith.constant 9.99999974E-6 : f32
      %187 = vector.broadcast %cst_80 : f32 to vector<256x1xf32>
      %188 = arith.addf %184, %187 : vector<256x1xf32>
      %189 = math.rsqrt %188 : vector<256x1xf32>
      %190 = vector.broadcast %189 : vector<256x1xf32> to vector<256x128xf32>
      %191 = arith.mulf %186, %190 : vector<256x128xf32>
      %192 = vector.shape_cast %1 : vector<128xf32> to vector<1x128xf32>
      %193 = vector.broadcast %192 : vector<1x128xf32> to vector<256x128xf32>
      %194 = arith.mulf %191, %193 : vector<256x128xf32>
      %195 = vector.shape_cast %3 : vector<128xf32> to vector<1x128xf32>
      %196 = vector.broadcast %195 : vector<1x128xf32> to vector<256x128xf32>
      %197 = arith.addf %194, %196 : vector<256x128xf32>
      %198 = arith.truncf %197 : vector<256x128xf32> to vector<256x128xbf16>
      %c0_81 = arith.constant 0 : index
      %c128 = arith.constant 128 : index
      %199 = vector.load %arg5[%c0_81, %c128] : memref<128x384xbf16, #tpu.memory_space<vmem>>, vector<128x256xbf16>
      %cst_82 = arith.constant dense<0.000000e+00> : vector<256x256xf32>
      %200 = tpu.matmul %198, %199, %cst_82 {dimension_numbers = #tpu.dot_dimension_numbers<[1], [0], [0], [1], [0, 0, 1, 1], [], []>} : vector<256x128xbf16>, vector<128x256xbf16>, vector<256x256xf32> -> vector<256x256xf32>
      %201 = vector.extract_strided_slice %200 {offsets = [0, 0], sizes = [256, 128], strides = [1, 1]} : vector<256x256xf32> to vector<256x128xf32>
      %202 = arith.truncf %201 : vector<256x128xf32> to vector<256x128xbf16>
      %c0_83 = arith.constant 0 : index
      %c0_84 = arith.constant 0 : index
      %203 = vector.load %arg15[%c0_83, %c0_84] : memref<256x128xbf16, #tpu.memory_space<vmem>>, vector<256x128xbf16>
      tpu.vector_store %arg15[%c0_83, %c0_84], %202 {strides = array<i32>} : memref<256x128xbf16, #tpu.memory_space<vmem>>, vector<256x128xbf16>,
      %204 = vector.extract_strided_slice %200 {offsets = [0, 128], sizes = [256, 128], strides = [1, 1]} : vector<256x256xf32> to vector<256x128xf32>
      %205 = arith.truncf %204 : vector<256x128xf32> to vector<256x128xbf16>
      %c0_85 = arith.constant 0 : index
      %c0_86 = arith.constant 0 : index
      %206 = vector.load %arg16[%c0_85, %c0_86] : memref<256x128xbf16, #tpu.memory_space<vmem>>, vector<256x128xbf16>
      tpu.vector_store %arg16[%c0_85, %c0_86], %205 {strides = array<i32>} : memref<256x128xbf16, #tpu.memory_space<vmem>>, vector<256x128xbf16>,
    } else {
    }
    %c128_i32 = arith.constant 128 : i32
    %7 = arith.muli %arg1, %c128_i32 : i32
    %8 = tpu.assume_multiple %7, 128 : i32
    %c0_4 = arith.constant 0 : index
    %9 = arith.index_cast %8 : i32 to index
    %c0_5 = arith.constant 0 : index
    %10 = vector.load %arg2[%c0_4, %9, %c0_5] : memref<1x256x128xf32, #tpu.memory_space<vmem>>, vector<1x128x128xf32>
    %11 = vector.shape_cast %10 : vector<1x128x128xf32> to vector<128x128xf32>
    %cst = arith.constant dense<0.000000e+00> : vector<128xf32>
    %12 = vector.multi_reduction <add>, %11, %cst [1] : vector<128x128xf32> to vector<128xf32>
    %13 = vector.shape_cast %12 : vector<128xf32> to vector<128x1xf32>
    %cst_6 = arith.constant 1.280000e+02 : f32
    %14 = vector.broadcast %cst_6 : f32 to vector<128x1xf32>
    %15 = arith.divf %13, %14 : vector<128x1xf32>
    %16 = vector.broadcast %15 : vector<128x1xf32> to vector<128x128xf32>
    %17 = arith.subf %11, %16 : vector<128x128xf32>
    %18 = arith.mulf %17, %17 : vector<128x128xf32>
    %cst_7 = arith.constant dense<0.000000e+00> : vector<128xf32>
    %19 = vector.multi_reduction <add>, %18, %cst_7 [1] : vector<128x128xf32> to vector<128xf32>
    %20 = vector.shape_cast %19 : vector<128xf32> to vector<128x1xf32>
    %cst_8 = arith.constant 1.280000e+02 : f32
    %21 = vector.broadcast %cst_8 : f32 to vector<128x1xf32>
    %22 = arith.divf %20, %21 : vector<128x1xf32>
    %23 = vector.broadcast %15 : vector<128x1xf32> to vector<128x128xf32>
    %24 = arith.subf %11, %23 : vector<128x128xf32>
    %cst_9 = arith.constant 9.99999974E-6 : f32
    %25 = vector.broadcast %cst_9 : f32 to vector<128x1xf32>
    %26 = arith.addf %22, %25 : vector<128x1xf32>
    %27 = math.rsqrt %26 : vector<128x1xf32>
    %28 = vector.broadcast %27 : vector<128x1xf32> to vector<128x128xf32>
    %29 = arith.mulf %24, %28 : vector<128x128xf32>
    %30 = vector.shape_cast %1 : vector<128xf32> to vector<1x128xf32>
    %31 = vector.broadcast %30 : vector<1x128xf32> to vector<128x128xf32>
    %32 = arith.mulf %29, %31 : vector<128x128xf32>
    %33 = vector.shape_cast %3 : vector<128xf32> to vector<1x128xf32>
    %34 = vector.broadcast %33 : vector<1x128xf32> to vector<128x128xf32>
    %35 = arith.addf %32, %34 : vector<128x128xf32>
    %36 = arith.truncf %35 : vector<128x128xf32> to vector<128x128xbf16>
    %c0_10 = arith.constant 0 : index
    %c0_11 = arith.constant 0 : index
    %37 = vector.load %arg5[%c0_10, %c0_11] : memref<128x384xbf16, #tpu.memory_space<vmem>>, vector<128x128xbf16>
    %cst_12 = arith.constant dense<0.000000e+00> : vector<128x128xf32>
    %38 = tpu.matmul %36, %37, %cst_12 {dimension_numbers = #tpu.dot_dimension_numbers<[1], [0], [0], [1], [0, 0, 1, 1], [], []>} : vector<128x128xbf16>, vector<128x128xbf16>, vector<128x128xf32> -> vector<128x128xf32>
    %cst_13 = arith.constant 0.176776692 : f32
    %39 = vector.broadcast %cst_13 : f32 to vector<128x128xf32>
    %40 = arith.mulf %38, %39 : vector<128x128xf32>
    %41 = arith.truncf %40 : vector<128x128xf32> to vector<128x128xbf16>
    %42 = vector.extract_strided_slice %41 {offsets = [0, 0], sizes = [128, 32], strides = [1, 1]} : vector<128x128xbf16> to vector<128x32xbf16>
    %c0_14 = arith.constant 0 : index
    %c0_15 = arith.constant 0 : index
    %43 = vector.load %arg15[%c0_14, %c0_15] : memref<256x128xbf16, #tpu.memory_space<vmem>>, vector<256x32xbf16>
    %cst_16 = arith.constant dense<0.000000e+00> : vector<128x256xf32>
    %44 = tpu.matmul %42, %43, %cst_16 {dimension_numbers = #tpu.dot_dimension_numbers<[1], [1], [0], [0], [0, 0, 1, 0], [], []>} : vector<128x32xbf16>, vector<256x32xbf16>, vector<128x256xf32> -> vector<128x256xf32>
    %cst_17 = arith.constant dense<0xFF800000> : vector<128xf32>
    %45 = vector.multi_reduction <maximumf>, %44, %cst_17 [1] : vector<128x256xf32> to vector<128xf32>
    %46 = vector.shape_cast %45 : vector<128xf32> to vector<128x1xf32>
    %47 = vector.broadcast %46 : vector<128x1xf32> to vector<128x256xf32>
    %48 = arith.subf %44, %47 : vector<128x256xf32>
    %49 = math.exp %48 : vector<128x256xf32>
    %cst_18 = arith.constant dense<0.000000e+00> : vector<128xf32>
    %50 = vector.multi_reduction <add>, %49, %cst_18 [1] : vector<128x256xf32> to vector<128xf32>
    %51 = vector.shape_cast %50 : vector<128xf32> to vector<128x1xf32>
    %52 = tpu.reciprocal %51 {approx = true} : vector<128x1xf32> -> vector<128x1xf32>
    %53 = vector.broadcast %52 : vector<128x1xf32> to vector<128x256xf32>
    %54 = arith.mulf %49, %53 : vector<128x256xf32>
    %55 = arith.truncf %54 : vector<128x256xf32> to vector<128x256xbf16>
    %c0_19 = arith.constant 0 : index
    %c0_20 = arith.constant 0 : index
    %56 = vector.load %arg16[%c0_19, %c0_20] : memref<256x128xbf16, #tpu.memory_space<vmem>>, vector<256x32xbf16>
    %cst_21 = arith.constant dense<0.000000e+00> : vector<128x32xf32>
    %57 = tpu.matmul %55, %56, %cst_21 {dimension_numbers = #tpu.dot_dimension_numbers<[1], [0], [0], [1], [0, 0, 1, 1], [], []>} : vector<128x256xbf16>, vector<256x32xbf16>, vector<128x32xf32> -> vector<128x32xf32>
    %58 = vector.extract_strided_slice %41 {offsets = [0, 32], sizes = [128, 32], strides = [1, 1]} : vector<128x128xbf16> to vector<128x32xbf16>
    %c0_22 = arith.constant 0 : index
    %c32 = arith.constant 32 : index
    %59 = vector.load %arg15[%c0_22, %c32] : memref<256x128xbf16, #tpu.memory_space<vmem>>, vector<256x32xbf16>
    %cst_23 = arith.constant dense<0.000000e+00> : vector<128x256xf32>
    %60 = tpu.matmul %58, %59, %cst_23 {dimension_numbers = #tpu.dot_dimension_numbers<[1], [1], [0], [0], [0, 0, 1, 0], [], []>} : vector<128x32xbf16>, vector<256x32xbf16>, vector<128x256xf32> -> vector<128x256xf32>
    %cst_24 = arith.constant dense<0xFF800000> : vector<128xf32>
    %61 = vector.multi_reduction <maximumf>, %60, %cst_24 [1] : vector<128x256xf32> to vector<128xf32>
    %62 = vector.shape_cast %61 : vector<128xf32> to vector<128x1xf32>
    %63 = vector.broadcast %62 : vector<128x1xf32> to vector<128x256xf32>
    %64 = arith.subf %60, %63 : vector<128x256xf32>
    %65 = math.exp %64 : vector<128x256xf32>
    %cst_25 = arith.constant dense<0.000000e+00> : vector<128xf32>
    %66 = vector.multi_reduction <add>, %65, %cst_25 [1] : vector<128x256xf32> to vector<128xf32>
    %67 = vector.shape_cast %66 : vector<128xf32> to vector<128x1xf32>
    %68 = tpu.reciprocal %67 {approx = true} : vector<128x1xf32> -> vector<128x1xf32>
    %69 = vector.broadcast %68 : vector<128x1xf32> to vector<128x256xf32>
    %70 = arith.mulf %65, %69 : vector<128x256xf32>
    %71 = arith.truncf %70 : vector<128x256xf32> to vector<128x256xbf16>
    %c0_26 = arith.constant 0 : index
    %c32_27 = arith.constant 32 : index
    %72 = vector.load %arg16[%c0_26, %c32_27] : memref<256x128xbf16, #tpu.memory_space<vmem>>, vector<256x32xbf16>
    %cst_28 = arith.constant dense<0.000000e+00> : vector<128x32xf32>
    %73 = tpu.matmul %71, %72, %cst_28 {dimension_numbers = #tpu.dot_dimension_numbers<[1], [0], [0], [1], [0, 0, 1, 1], [], []>} : vector<128x256xbf16>, vector<256x32xbf16>, vector<128x32xf32> -> vector<128x32xf32>
    %74 = vector.extract_strided_slice %41 {offsets = [0, 64], sizes = [128, 32], strides = [1, 1]} : vector<128x128xbf16> to vector<128x32xbf16>
    %c0_29 = arith.constant 0 : index
    %c64 = arith.constant 64 : index
    %75 = vector.load %arg15[%c0_29, %c64] : memref<256x128xbf16, #tpu.memory_space<vmem>>, vector<256x32xbf16>
    %cst_30 = arith.constant dense<0.000000e+00> : vector<128x256xf32>
    %76 = tpu.matmul %74, %75, %cst_30 {dimension_numbers = #tpu.dot_dimension_numbers<[1], [1], [0], [0], [0, 0, 1, 0], [], []>} : vector<128x32xbf16>, vector<256x32xbf16>, vector<128x256xf32> -> vector<128x256xf32>
    %cst_31 = arith.constant dense<0xFF800000> : vector<128xf32>
    %77 = vector.multi_reduction <maximumf>, %76, %cst_31 [1] : vector<128x256xf32> to vector<128xf32>
    %78 = vector.shape_cast %77 : vector<128xf32> to vector<128x1xf32>
    %79 = vector.broadcast %78 : vector<128x1xf32> to vector<128x256xf32>
    %80 = arith.subf %76, %79 : vector<128x256xf32>
    %81 = math.exp %80 : vector<128x256xf32>
    %cst_32 = arith.constant dense<0.000000e+00> : vector<128xf32>
    %82 = vector.multi_reduction <add>, %81, %cst_32 [1] : vector<128x256xf32> to vector<128xf32>
    %83 = vector.shape_cast %82 : vector<128xf32> to vector<128x1xf32>
    %84 = tpu.reciprocal %83 {approx = true} : vector<128x1xf32> -> vector<128x1xf32>
    %85 = vector.broadcast %84 : vector<128x1xf32> to vector<128x256xf32>
    %86 = arith.mulf %81, %85 : vector<128x256xf32>
    %87 = arith.truncf %86 : vector<128x256xf32> to vector<128x256xbf16>
    %c0_33 = arith.constant 0 : index
    %c64_34 = arith.constant 64 : index
    %88 = vector.load %arg16[%c0_33, %c64_34] : memref<256x128xbf16, #tpu.memory_space<vmem>>, vector<256x32xbf16>
    %cst_35 = arith.constant dense<0.000000e+00> : vector<128x32xf32>
    %89 = tpu.matmul %87, %88, %cst_35 {dimension_numbers = #tpu.dot_dimension_numbers<[1], [0], [0], [1], [0, 0, 1, 1], [], []>} : vector<128x256xbf16>, vector<256x32xbf16>, vector<128x32xf32> -> vector<128x32xf32>
    %90 = vector.extract_strided_slice %41 {offsets = [0, 96], sizes = [128, 32], strides = [1, 1]} : vector<128x128xbf16> to vector<128x32xbf16>
    %c0_36 = arith.constant 0 : index
    %c96 = arith.constant 96 : index
    %91 = vector.load %arg15[%c0_36, %c96] : memref<256x128xbf16, #tpu.memory_space<vmem>>, vector<256x32xbf16>
    %cst_37 = arith.constant dense<0.000000e+00> : vector<128x256xf32>
    %92 = tpu.matmul %90, %91, %cst_37 {dimension_numbers = #tpu.dot_dimension_numbers<[1], [1], [0], [0], [0, 0, 1, 0], [], []>} : vector<128x32xbf16>, vector<256x32xbf16>, vector<128x256xf32> -> vector<128x256xf32>
    %cst_38 = arith.constant dense<0xFF800000> : vector<128xf32>
    %93 = vector.multi_reduction <maximumf>, %92, %cst_38 [1] : vector<128x256xf32> to vector<128xf32>
    %94 = vector.shape_cast %93 : vector<128xf32> to vector<128x1xf32>
    %95 = vector.broadcast %94 : vector<128x1xf32> to vector<128x256xf32>
    %96 = arith.subf %92, %95 : vector<128x256xf32>
    %97 = math.exp %96 : vector<128x256xf32>
    %cst_39 = arith.constant dense<0.000000e+00> : vector<128xf32>
    %98 = vector.multi_reduction <add>, %97, %cst_39 [1] : vector<128x256xf32> to vector<128xf32>
    %99 = vector.shape_cast %98 : vector<128xf32> to vector<128x1xf32>
    %100 = tpu.reciprocal %99 {approx = true} : vector<128x1xf32> -> vector<128x1xf32>
    %101 = vector.broadcast %100 : vector<128x1xf32> to vector<128x256xf32>
    %102 = arith.mulf %97, %101 : vector<128x256xf32>
    %103 = arith.truncf %102 : vector<128x256xf32> to vector<128x256xbf16>
    %c0_40 = arith.constant 0 : index
    %c96_41 = arith.constant 96 : index
    %104 = vector.load %arg16[%c0_40, %c96_41] : memref<256x128xbf16, #tpu.memory_space<vmem>>, vector<256x32xbf16>
    %cst_42 = arith.constant dense<0.000000e+00> : vector<128x32xf32>
    %105 = tpu.matmul %103, %104, %cst_42 {dimension_numbers = #tpu.dot_dimension_numbers<[1], [0], [0], [1], [0, 0, 1, 1], [], []>} : vector<128x256xbf16>, vector<256x32xbf16>, vector<128x32xf32> -> vector<128x32xf32>
    %106 = tpu.concatenate %57, %73, %89, %105 in 1 : vector<128x32xf32>, vector<128x32xf32>, vector<128x32xf32>, vector<128x32xf32> -> vector<128x128xf32>
    %107 = arith.truncf %106 : vector<128x128xf32> to vector<128x128xbf16>
    %c0_43 = arith.constant 0 : index
    %c0_44 = arith.constant 0 : index
    %108 = vector.load %arg6[%c0_43, %c0_44] : memref<128x128xbf16, #tpu.memory_space<vmem>>, vector<128x128xbf16>
    %cst_45 = arith.constant dense<0.000000e+00> : vector<128x128xf32>
    %109 = tpu.matmul %107, %108, %cst_45 {dimension_numbers = #tpu.dot_dimension_numbers<[1], [0], [0], [1], [0, 0, 1, 1], [], []>} : vector<128x128xbf16>, vector<128x128xbf16>, vector<128x128xf32> -> vector<128x128xf32>
    %c0_46 = arith.constant 0 : index
    %c0_47 = arith.constant 0 : index
    %110 = vector.load %arg7[%c0_46, %c0_47] : memref<1x128xf32, #tpu.memory_space<vmem>>, vector<1x128xf32>
    %111 = vector.shape_cast %110 : vector<1x128xf32> to vector<128xf32>
    %112 = vector.shape_cast %111 : vector<128xf32> to vector<1x128xf32>
    %113 = vector.broadcast %112 : vector<1x128xf32> to vector<128x128xf32>
    %114 = arith.addf %109, %113 : vector<128x128xf32>
    %115 = arith.addf %11, %114 : vector<128x128xf32>
    %c0_48 = arith.constant 0 : index
    %c0_49 = arith.constant 0 : index
    %116 = vector.load %arg8[%c0_48, %c0_49] : memref<1x128xf32, #tpu.memory_space<vmem>>, vector<1x128xf32>
    %117 = vector.shape_cast %116 : vector<1x128xf32> to vector<128xf32>
    %c0_50 = arith.constant 0 : index
    %c0_51 = arith.constant 0 : index
    %118 = vector.load %arg9[%c0_50, %c0_51] : memref<1x128xf32, #tpu.memory_space<vmem>>, vector<1x128xf32>
    %119 = vector.shape_cast %118 : vector<1x128xf32> to vector<128xf32>
    %cst_52 = arith.constant dense<0.000000e+00> : vector<128xf32>
    %120 = vector.multi_reduction <add>, %115, %cst_52 [1] : vector<128x128xf32> to vector<128xf32>
    %121 = vector.shape_cast %120 : vector<128xf32> to vector<128x1xf32>
    %cst_53 = arith.constant 1.280000e+02 : f32
    %122 = vector.broadcast %cst_53 : f32 to vector<128x1xf32>
    %123 = arith.divf %121, %122 : vector<128x1xf32>
    %124 = vector.broadcast %123 : vector<128x1xf32> to vector<128x128xf32>
    %125 = arith.subf %115, %124 : vector<128x128xf32>
    %126 = arith.mulf %125, %125 : vector<128x128xf32>
    %cst_54 = arith.constant dense<0.000000e+00> : vector<128xf32>
    %127 = vector.multi_reduction <add>, %126, %cst_54 [1] : vector<128x128xf32> to vector<128xf32>
    %128 = vector.shape_cast %127 : vector<128xf32> to vector<128x1xf32>
    %cst_55 = arith.constant 1.280000e+02 : f32
    %129 = vector.broadcast %cst_55 : f32 to vector<128x1xf32>
    %130 = arith.divf %128, %129 : vector<128x1xf32>
    %131 = vector.broadcast %123 : vector<128x1xf32> to vector<128x128xf32>
    %132 = arith.subf %115, %131 : vector<128x128xf32>
    %cst_56 = arith.constant 9.99999974E-6 : f32
    %133 = vector.broadcast %cst_56 : f32 to vector<128x1xf32>
    %134 = arith.addf %130, %133 : vector<128x1xf32>
    %135 = math.rsqrt %134 : vector<128x1xf32>
    %136 = vector.broadcast %135 : vector<128x1xf32> to vector<128x128xf32>
    %137 = arith.mulf %132, %136 : vector<128x128xf32>
    %138 = vector.shape_cast %117 : vector<128xf32> to vector<1x128xf32>
    %139 = vector.broadcast %138 : vector<1x128xf32> to vector<128x128xf32>
    %140 = arith.mulf %137, %139 : vector<128x128xf32>
    %141 = vector.shape_cast %119 : vector<128xf32> to vector<1x128xf32>
    %142 = vector.broadcast %141 : vector<1x128xf32> to vector<128x128xf32>
    %143 = arith.addf %140, %142 : vector<128x128xf32>
    %144 = arith.truncf %143 : vector<128x128xf32> to vector<128x128xbf16>
    %c0_57 = arith.constant 0 : index
    %c0_58 = arith.constant 0 : index
    %145 = vector.load %arg10[%c0_57, %c0_58] : memref<128x512xbf16, #tpu.memory_space<vmem>>, vector<128x512xbf16>
    %cst_59 = arith.constant dense<0.000000e+00> : vector<128x512xf32>
    %146 = tpu.matmul %144, %145, %cst_59 {dimension_numbers = #tpu.dot_dimension_numbers<[1], [0], [0], [1], [0, 0, 1, 1], [], []>} : vector<128x128xbf16>, vector<128x512xbf16>, vector<128x512xf32> -> vector<128x512xf32>
    %c0_60 = arith.constant 0 : index
    %c0_61 = arith.constant 0 : index
    %147 = vector.load %arg11[%c0_60, %c0_61] : memref<1x512xf32, #tpu.memory_space<vmem>>, vector<1x512xf32>
    %148 = vector.shape_cast %147 : vector<1x512xf32> to vector<512xf32>
    %149 = vector.shape_cast %148 : vector<512xf32> to vector<1x512xf32>
    %150 = vector.broadcast %149 : vector<1x512xf32> to vector<128x512xf32>
    %151 = arith.addf %146, %150 : vector<128x512xf32>
    %cst_62 = arith.constant 5.000000e-01 : f32
    %152 = vector.broadcast %cst_62 : f32 to vector<128x512xf32>
    %153 = arith.mulf %152, %151 : vector<128x512xf32>
    %cst_63 = arith.constant 0.707106769 : f32
    %154 = vector.broadcast %cst_63 : f32 to vector<128x512xf32>
    %155 = arith.mulf %151, %154 : vector<128x512xf32>
    %156 = math.erf %155 : vector<128x512xf32>
    %cst_64 = arith.constant 1.000000e+00 : f32
    %157 = vector.broadcast %cst_64 : f32 to vector<128x512xf32>
    %158 = arith.addf %157, %156 : vector<128x512xf32>
    %159 = arith.mulf %153, %158 : vector<128x512xf32>
    %160 = arith.truncf %159 : vector<128x512xf32> to vector<128x512xbf16>
    %c0_65 = arith.constant 0 : index
    %c0_66 = arith.constant 0 : index
    %161 = vector.load %arg12[%c0_65, %c0_66] : memref<512x128xbf16, #tpu.memory_space<vmem>>, vector<512x128xbf16>
    %cst_67 = arith.constant dense<0.000000e+00> : vector<128x128xf32>
    %162 = tpu.matmul %160, %161, %cst_67 {dimension_numbers = #tpu.dot_dimension_numbers<[1], [0], [0], [1], [0, 0, 1, 1], [], []>} : vector<128x512xbf16>, vector<512x128xbf16>, vector<128x128xf32> -> vector<128x128xf32>
    %c0_68 = arith.constant 0 : index
    %c0_69 = arith.constant 0 : index
    %163 = vector.load %arg13[%c0_68, %c0_69] : memref<1x128xf32, #tpu.memory_space<vmem>>, vector<1x128xf32>
    %164 = vector.shape_cast %163 : vector<1x128xf32> to vector<128xf32>
    %165 = vector.shape_cast %164 : vector<128xf32> to vector<1x128xf32>
    %166 = vector.broadcast %165 : vector<1x128xf32> to vector<128x128xf32>
    %167 = arith.addf %162, %166 : vector<128x128xf32>
    %168 = arith.addf %115, %167 : vector<128x128xf32>
    %c0_70 = arith.constant 0 : index
    %c0_71 = arith.constant 0 : index
    %c0_72 = arith.constant 0 : index
    %169 = vector.load %arg14[%c0_70, %c0_71, %c0_72] : memref<1x128x128xf32, #tpu.memory_space<vmem>>, vector<1x128x128xf32>
    %170 = vector.shape_cast %169 : vector<1x128x128xf32> to vector<128x128xf32>
    %171 = vector.shape_cast %168 : vector<128x128xf32> to vector<1x128x128xf32>
    tpu.vector_store %arg14[%c0_70, %c0_71, %c0_72], %171 {strides = array<i32>} : memref<1x128x128xf32, #tpu.memory_space<vmem>>, vector<1x128x128xf32>,
    return
  }
  func.func @transform_0(%arg0: i32, %arg1: i32) -> (i32, i32, i32) {
    %c0_i32 = arith.constant 0 : i32
    %c0_i32_0 = arith.constant 0 : i32
    %c0_i32_1 = arith.constant 0 : i32
    return %arg0, %c0_i32, %c0_i32_0 : i32, i32, i32
  }
  func.func @transform_1(%arg0: i32, %arg1: i32) -> (i32, i32) {
    %c0_i32 = arith.constant 0 : i32
    %c0_i32_0 = arith.constant 0 : i32
    %c0_i32_1 = arith.constant 0 : i32
    return %c0_i32, %c0_i32_0 : i32, i32
  }
  func.func @transform_2(%arg0: i32, %arg1: i32) -> (i32, i32) {
    %c0_i32 = arith.constant 0 : i32
    %c0_i32_0 = arith.constant 0 : i32
    %c0_i32_1 = arith.constant 0 : i32
    return %c0_i32, %c0_i32_0 : i32, i32
  }
  func.func @transform_3(%arg0: i32, %arg1: i32) -> (i32, i32) {
    %c0_i32 = arith.constant 0 : i32
    %c0_i32_0 = arith.constant 0 : i32
    %c0_i32_1 = arith.constant 0 : i32
    return %c0_i32, %c0_i32_0 : i32, i32
  }
  func.func @transform_4(%arg0: i32, %arg1: i32) -> (i32, i32) {
    %c0_i32 = arith.constant 0 : i32
    %c0_i32_0 = arith.constant 0 : i32
    %c0_i32_1 = arith.constant 0 : i32
    return %c0_i32, %c0_i32_0 : i32, i32
  }
  func.func @transform_5(%arg0: i32, %arg1: i32) -> (i32, i32) {
    %c0_i32 = arith.constant 0 : i32
    %c0_i32_0 = arith.constant 0 : i32
    %c0_i32_1 = arith.constant 0 : i32
    return %c0_i32, %c0_i32_0 : i32, i32
  }
  func.func @transform_6(%arg0: i32, %arg1: i32) -> (i32, i32) {
    %c0_i32 = arith.constant 0 : i32
    %c0_i32_0 = arith.constant 0 : i32
    %c0_i32_1 = arith.constant 0 : i32
    return %c0_i32, %c0_i32_0 : i32, i32
  }
  func.func @transform_7(%arg0: i32, %arg1: i32) -> (i32, i32) {
    %c0_i32 = arith.constant 0 : i32
    %c0_i32_0 = arith.constant 0 : i32
    %c0_i32_1 = arith.constant 0 : i32
    return %c0_i32, %c0_i32_0 : i32, i32
  }
  func.func @transform_8(%arg0: i32, %arg1: i32) -> (i32, i32) {
    %c0_i32 = arith.constant 0 : i32
    %c0_i32_0 = arith.constant 0 : i32
    %c0_i32_1 = arith.constant 0 : i32
    return %c0_i32, %c0_i32_0 : i32, i32
  }
  func.func @transform_9(%arg0: i32, %arg1: i32) -> (i32, i32) {
    %c0_i32 = arith.constant 0 : i32
    %c0_i32_0 = arith.constant 0 : i32
    %c0_i32_1 = arith.constant 0 : i32
    return %c0_i32, %c0_i32_0 : i32, i32
  }
  func.func @transform_10(%arg0: i32, %arg1: i32) -> (i32, i32) {
    %c0_i32 = arith.constant 0 : i32
    %c0_i32_0 = arith.constant 0 : i32
    %c0_i32_1 = arith.constant 0 : i32
    return %c0_i32, %c0_i32_0 : i32, i32
  }
  func.func @transform_11(%arg0: i32, %arg1: i32) -> (i32, i32) {
    %c0_i32 = arith.constant 0 : i32
    %c0_i32_0 = arith.constant 0 : i32
    %c0_i32_1 = arith.constant 0 : i32
    return %c0_i32, %c0_i32_0 : i32, i32
  }
  func.func @transform_12(%arg0: i32, %arg1: i32) -> (i32, i32, i32) {
    %c0_i32 = arith.constant 0 : i32
    %c0_i32_0 = arith.constant 0 : i32
    return %arg0, %arg1, %c0_i32 : i32, i32, i32
  }
}

</mosaic_0001>

<llo_original>
// kernel: tpu_custom_call.1
$region0: #{tpu_custom_call.1}
  #allocation0 [shape = 'u32[]', space=smem, size = 0x4, offset = 0x4, fixed_abs, tag = 'smem constant byte address 0x4 - core index']
  #allocation1 [shape = 'u32[144,128]{1,0:T(1,128)}', space=vmem, size = 0x12000, scoped, tag = 'internal scratch']
  #allocation2 [shape = 'bf16[256,128]{1,0:T(16,128)(2,1)}', space=vmem, size = 0x10000, scoped, tag = 'scratch operand']
  #allocation3 [shape = 'bf16[256,128]{1,0:T(16,128)(2,1)}', space=vmem, size = 0x10000, scoped, tag = 'scratch operand']
  %s0 = inlined_call_operand.hbm [shape: f32[2,256,128], index: 0, kind: input, shape index: {}]
  %s1 = inlined_call_operand.vmem [shape: f32[1,128], index: 1, kind: input, shape index: {}]
  %s2 = inlined_call_operand.vmem [shape: f32[1,128], index: 2, kind: input, shape index: {}]
  %s3 = inlined_call_operand.hbm [shape: bf16[128,384], index: 3, kind: input, shape index: {}]
  %s4 = inlined_call_operand.hbm [shape: bf16[128,128], index: 4, kind: input, shape index: {}]
  %s5 = inlined_call_operand.vmem [shape: f32[1,128], index: 5, kind: input, shape index: {}]
  %s6 = inlined_call_operand.vmem [shape: f32[1,128], index: 6, kind: input, shape index: {}]
  %s7 = inlined_call_operand.vmem [shape: f32[1,128], index: 7, kind: input, shape index: {}]
  %s8 = inlined_call_operand.hbm [shape: bf16[128,512], index: 8, kind: input, shape index: {}]
  %s9 = inlined_call_operand.vmem [shape: f32[1,512], index: 9, kind: input, shape index: {}]
  %s10 = inlined_call_operand.hbm [shape: bf16[512,128], index: 10, kind: input, shape index: {}]
  %s11 = inlined_call_operand.vmem [shape: f32[1,128], index: 11, kind: input, shape index: {}]
  %s12 = inlined_call_operand.hbm [shape: f32[2,256,128], index: 12, kind: output, shape index: {}]
  %s13 = sld [smem:[#allocation0]]
  $region105: #{tpu_custom_call.1} parent=0
    _
  %s15 = ssub.s32 1, %s13
  %s16 = scalar_select 0, %s15, %s13
  $region1: #{tpu_custom_call.1} parent=0
    #allocation4 [shape = 'u8[262144]{0}', space=vmem, size = 0x40000, scoped, tag = 'input window, operand 0']
    #allocation5 [shape = 's32[2]{0}', space=sflag, size = 0x8, scoped, tag = 'scoped memory for tpu_custom_call.1']
    #allocation6 [shape = 's32[2]{0}', space=sflag, size = 0x8, scoped, tag = 'scoped memory for tpu_custom_call.1']
    #allocation7 [shape = 'u8[98304]{0}', space=vmem, size = 0x18000, scoped, tag = 'input window, operand 3, single buffered']
    #allocation8 [shape = 's32[1]{0}', space=sflag, size = 0x4, scoped, tag = 'scoped memory for tpu_custom_call.1']
    #allocation9 [shape = 'u8[32768]{0}', space=vmem, size = 0x8000, scoped, tag = 'input window, operand 4, single buffered']
    #allocation10 [shape = 'u8[131072]{0}', space=vmem, size = 0x20000, scoped, tag = 'input window, operand 8, single buffered']
    #allocation11 [shape = 's32[1]{0}', space=sflag, size = 0x4, scoped, tag = 'scoped memory for tpu_custom_call.1']
    #allocation12 [shape = 'u8[131072]{0}', space=vmem, size = 0x20000, scoped, tag = 'input window, operand 10, single buffered']
    #allocation13 [shape = 'u8[131072]{0}', space=vmem, size = 0x20000, scoped, tag = 'output window, operand 0']
    %17 = vsyncpa [#allocation5], 0
    %s18 = scalar_lea.sflag [#allocation5], 1
    %19 = vsyncpa %s18, 0
    %20 = vsyncpa [#allocation8], 0
    %21 = vsyncpa [#allocation11], 0
    %22 = vsyncpa [#allocation6], 0
    %s23 = scalar_lea.sflag [#allocation6], 1
    %24 = vsyncpa %s23, 0
    loop: start=0, step=1, limit=6
    $region2: #{tpu_custom_call.1} parent=1 // loop_pre_header
      _
    $region3: #{tpu_custom_call.1} parent=1 // loop_header
      %s26 = sphi 0, %s30
      %p27 = scmp.ge.s32.totalorder %s26, 6
      %s33 = sphi 0, %s45
      %s34 = sphi 0, %s41
      %s35 = sphi 0, %s33
      %s36 = sphi 0, %s34
      %s37 = sphi 0, %s35
      %s38 = sphi 0, %s36
      %s48 = sphi 0, %s50
      %s51 = sphi 0, %s48
      %s52 = sphi 0, %s51
      %s68 = sphi 0, %s52
      %s72 = sphi 0, %s72
      %s74 = sphi 0, %s72
      %s75 = sphi 0, %s74
      %s89 = sphi 0, %s75
      %s93 = sphi 0, %s93
      %s95 = sphi 0, %s93
      %s96 = sphi 0, %s95
      %s110 = sphi 0, %s96
      %s114 = sphi 0, %s114
      %s116 = sphi 0, %s114
      %s117 = sphi 0, %s116
      %s131 = sphi 0, %s117
      %s135 = sphi 0, %s135
      %s137 = sphi 0, %s135
      %s138 = sphi 0, %s137
      %s152 = sphi 0, %s138
      %s156 = sphi 0, %s156
      %s158 = sphi 0, %s156
      %s159 = sphi 0, %s158
      %s173 = sphi 0, %s159
      %s177 = sphi 0, %s177
      %s179 = sphi 0, %s177
      %s180 = sphi 0, %s179
      %s194 = sphi 0, %s180
      %s198 = sphi 0, %s198
      %s200 = sphi 0, %s198
      %s201 = sphi 0, %s200
      %s215 = sphi 0, %s201
      %s219 = sphi 0, %s219
      %s221 = sphi 0, %s219
      %s222 = sphi 0, %s221
      %s236 = sphi 0, %s222
      %s240 = sphi 0, %s240
      %s242 = sphi 0, %s240
      %s243 = sphi 0, %s242
      %s257 = sphi 0, %s243
      %s261 = sphi 0, %s261
      %s263 = sphi 0, %s261
      %s264 = sphi 0, %s263
      %s278 = sphi 0, %s264
      %s282 = sphi 0, %s282
      %s284 = sphi 0, %s282
      %s285 = sphi 0, %s284
      %s299 = sphi 0, %s285
      %s307 = sphi 0, %s309
      %s310 = sphi 0, %s307
      %s311 = sphi 0, %s310
      %s327 = sphi 0, %s311
    $region4: #{tpu_custom_call.1} parent=1 // loop_header_branch
      %29 = sbr.rel (%p27) target = $region8
    $region5: #{tpu_custom_call.1} parent=1 // loop_body
      %s31 = ssub.s32 %s26, 1
      %s32 = ssub.s32 %s26, 2
      %s39 = sadd.s32 1, %s34
      %p40 = scmp.ge.s32.totalorder %s39, 2
      %s41 = scalar_select %p40, 0, %s39
      %s42 = sadd.s32 1, %s33
      %s43 = scalar_select %p40, %s42, %s33
      %p44 = scmp.ge.s32.totalorder %s43, 2
      %s45 = scalar_select %p44, 0, %s43
      %s46 = ssub.s32 %s33, %s45
      %p47 = scmp.eq.s32.totalorder %s46, 0
      %s49 = sadd.s32 %s48, 1
      %s50 = scalar_select %p47, %s48, %s49
      %p53 = pneg %p47
      %p54 = scmp.eq.s32.totalorder %s26, 3
      %p55 = por %p53, %p54
      %p56 = scmp.ne.s32.totalorder %s48, %s51
      %p57 = scmp.eq.s32.totalorder %s26, 0
      %p58 = por %p56, %p57
      %p59 = scmp.ne.s32.totalorder %s48, %s51
      %p60 = scmp.eq.s32.totalorder %s31, 3
      %p61 = por %p59, %p60
      %p62 = scmp.ne.s32.totalorder %s51, %s52
      %p63 = scmp.eq.s32.totalorder %s31, 0
      %p64 = por %p62, %p63
      %p65 = scmp.ne.s32.totalorder %s51, %s52
      %p66 = scmp.eq.s32.totalorder %s32, 3
      %p67 = por %p65, %p66
      %p69 = scmp.ne.s32.totalorder %s52, %s68
      %p70 = scmp.eq.s32.totalorder %s32, 0
      %p71 = por %p69, %p70
      %s73 = sadd.s32 %s72, 1
      %p76 = scmp.eq.s32.totalorder %s26, 3
      %p77 = scmp.ne.s32.totalorder %s72, %s74
      %p78 = scmp.eq.s32.totalorder %s26, 0
      %p79 = por %p77, %p78
      %p80 = scmp.ne.s32.totalorder %s72, %s74
      %p81 = scmp.eq.s32.totalorder %s31, 3
      %p82 = por %p80, %p81
      %p83 = scmp.ne.s32.totalorder %s74, %s75
      %p84 = scmp.eq.s32.totalorder %s31, 0
      %p85 = por %p83, %p84
      %p86 = scmp.ne.s32.totalorder %s74, %s75
      %p87 = scmp.eq.s32.totalorder %s32, 3
      %p88 = por %p86, %p87
      %p90 = scmp.ne.s32.totalorder %s75, %s89
      %p91 = scmp.eq.s32.totalorder %s32, 0
      %p92 = por %p90, %p91
      %s94 = sadd.s32 %s93, 1
      %p97 = scmp.eq.s32.totalorder %s26, 3
      %p98 = scmp.ne.s32.totalorder %s93, %s95
      %p99 = scmp.eq.s32.totalorder %s26, 0
      %p100 = por %p98, %p99
      %p101 = scmp.ne.s32.totalorder %s93, %s95
      %p102 = scmp.eq.s32.totalorder %s31, 3
      %p103 = por %p101, %p102
      %p104 = scmp.ne.s32.totalorder %s95, %s96
      %p105 = scmp.eq.s32.totalorder %s31, 0
      %p106 = por %p104, %p105
      %p107 = scmp.ne.s32.totalorder %s95, %s96
      %p108 = scmp.eq.s32.totalorder %s32, 3
      %p109 = por %p107, %p108
      %p111 = scmp.ne.s32.totalorder %s96, %s110
      %p112 = scmp.eq.s32.totalorder %s32, 0
      %p113 = por %p111, %p112
      %s115 = sadd.s32 %s114, 1
      %p118 = scmp.eq.s32.totalorder %s26, 3
      %p119 = scmp.ne.s32.totalorder %s114, %s116
      %p120 = scmp.eq.s32.totalorder %s26, 0
      %p121 = por %p119, %p120
      %p122 = scmp.ne.s32.totalorder %s114, %s116
      %p123 = scmp.eq.s32.totalorder %s31, 3
      %p124 = por %p122, %p123
      %p125 = scmp.ne.s32.totalorder %s116, %s117
      %p126 = scmp.eq.s32.totalorder %s31, 0
      %p127 = por %p125, %p126
      %p128 = scmp.ne.s32.totalorder %s116, %s117
      %p129 = scmp.eq.s32.totalorder %s32, 3
      %p130 = por %p128, %p129
      %p132 = scmp.ne.s32.totalorder %s117, %s131
      %p133 = scmp.eq.s32.totalorder %s32, 0
      %p134 = por %p132, %p133
      %s136 = sadd.s32 %s135, 1
      %p139 = scmp.eq.s32.totalorder %s26, 3
      %p140 = scmp.ne.s32.totalorder %s135, %s137
      %p141 = scmp.eq.s32.totalorder %s26, 0
      %p142 = por %p140, %p141
      %p143 = scmp.ne.s32.totalorder %s135, %s137
      %p144 = scmp.eq.s32.totalorder %s31, 3
      %p145 = por %p143, %p144
      %p146 = scmp.ne.s32.totalorder %s137, %s138
      %p147 = scmp.eq.s32.totalorder %s31, 0
      %p148 = por %p146, %p147
      %p149 = scmp.ne.s32.totalorder %s137, %s138
      %p150 = scmp.eq.s32.totalorder %s32, 3
      %p151 = por %p149, %p150
      %p153 = scmp.ne.s32.totalorder %s138, %s152
      %p154 = scmp.eq.s32.totalorder %s32, 0
      %p155 = por %p153, %p154
      %s157 = sadd.s32 %s156, 1
      %p160 = scmp.eq.s32.totalorder %s26, 3
      %p161 = scmp.ne.s32.totalorder %s156, %s158
      %p162 = scmp.eq.s32.totalorder %s26, 0
      %p163 = por %p161, %p162
      %p164 = scmp.ne.s32.totalorder %s156, %s158
      %p165 = scmp.eq.s32.totalorder %s31, 3
      %p166 = por %p164, %p165
      %p167 = scmp.ne.s32.totalorder %s158, %s159
      %p168 = scmp.eq.s32.totalorder %s31, 0
      %p169 = por %p167, %p168
      %p170 = scmp.ne.s32.totalorder %s158, %s159
      %p171 = scmp.eq.s32.totalorder %s32, 3
      %p172 = por %p170, %p171
      %p174 = scmp.ne.s32.totalorder %s159, %s173
      %p175 = scmp.eq.s32.totalorder %s32, 0
      %p176 = por %p174, %p175
      %s178 = sadd.s32 %s177, 1
      %p181 = scmp.eq.s32.totalorder %s26, 3
      %p182 = scmp.ne.s32.totalorder %s177, %s179
      %p183 = scmp.eq.s32.totalorder %s26, 0
      %p184 = por %p182, %p183
      %p185 = scmp.ne.s32.totalorder %s177, %s179
      %p186 = scmp.eq.s32.totalorder %s31, 3
      %p187 = por %p185, %p186
      %p188 = scmp.ne.s32.totalorder %s179, %s180
      %p189 = scmp.eq.s32.totalorder %s31, 0
      %p190 = por %p188, %p189
      %p191 = scmp.ne.s32.totalorder %s179, %s180
      %p192 = scmp.eq.s32.totalorder %s32, 3
      %p193 = por %p191, %p192
      %p195 = scmp.ne.s32.totalorder %s180, %s194
      %p196 = scmp.eq.s32.totalorder %s32, 0
      %p197 = por %p195, %p196
      %s199 = sadd.s32 %s198, 1
      %p202 = scmp.eq.s32.totalorder %s26, 3
      %p203 = scmp.ne.s32.totalorder %s198, %s200
      %p204 = scmp.eq.s32.totalorder %s26, 0
      %p205 = por %p203, %p204
      %p206 = scmp.ne.s32.totalorder %s198, %s200
      %p207 = scmp.eq.s32.totalorder %s31, 3
      %p208 = por %p206, %p207
      %p209 = scmp.ne.s32.totalorder %s200, %s201
      %p210 = scmp.eq.s32.totalorder %s31, 0
      %p211 = por %p209, %p210
      %p212 = scmp.ne.s32.totalorder %s200, %s201
      %p213 = scmp.eq.s32.totalorder %s32, 3
      %p214 = por %p212, %p213
      %p216 = scmp.ne.s32.totalorder %s201, %s215
      %p217 = scmp.eq.s32.totalorder %s32, 0
      %p218 = por %p216, %p217
      %s220 = sadd.s32 %s219, 1
      %p223 = scmp.eq.s32.totalorder %s26, 3
      %p224 = scmp.ne.s32.totalorder %s219, %s221
      %p225 = scmp.eq.s32.totalorder %s26, 0
      %p226 = por %p224, %p225
      %p227 = scmp.ne.s32.totalorder %s219, %s221
      %p228 = scmp.eq.s32.totalorder %s31, 3
      %p229 = por %p227, %p228
      %p230 = scmp.ne.s32.totalorder %s221, %s222
      %p231 = scmp.eq.s32.totalorder %s31, 0
      %p232 = por %p230, %p231
      %p233 = scmp.ne.s32.totalorder %s221, %s222
      %p234 = scmp.eq.s32.totalorder %s32, 3
      %p235 = por %p233, %p234
      %p237 = scmp.ne.s32.totalorder %s222, %s236
      %p238 = scmp.eq.s32.totalorder %s32, 0
      %p239 = por %p237, %p238
      %s241 = sadd.s32 %s240, 1
      %p244 = scmp.eq.s32.totalorder %s26, 3
      %p245 = scmp.ne.s32.totalorder %s240, %s242
      %p246 = scmp.eq.s32.totalorder %s26, 0
      %p247 = por %p245, %p246
      %p248 = scmp.ne.s32.totalorder %s240, %s242
      %p249 = scmp.eq.s32.totalorder %s31, 3
      %p250 = por %p248, %p249
      %p251 = scmp.ne.s32.totalorder %s242, %s243
      %p252 = scmp.eq.s32.totalorder %s31, 0
      %p253 = por %p251, %p252
      %p254 = scmp.ne.s32.totalorder %s242, %s243
      %p255 = scmp.eq.s32.totalorder %s32, 3
      %p256 = por %p254, %p255
      %p258 = scmp.ne.s32.totalorder %s243, %s257
      %p259 = scmp.eq.s32.totalorder %s32, 0
      %p260 = por %p258, %p259
      %s262 = sadd.s32 %s261, 1
      %p265 = scmp.eq.s32.totalorder %s26, 3
      %p266 = scmp.ne.s32.totalorder %s261, %s263
      %p267 = scmp.eq.s32.totalorder %s26, 0
      %p268 = por %p266, %p267
      %p269 = scmp.ne.s32.totalorder %s261, %s263
      %p270 = scmp.eq.s32.totalorder %s31, 3
      %p271 = por %p269, %p270
      %p272 = scmp.ne.s32.totalorder %s263, %s264
      %p273 = scmp.eq.s32.totalorder %s31, 0
      %p274 = por %p272, %p273
      %p275 = scmp.ne.s32.totalorder %s263, %s264
      %p276 = scmp.eq.s32.totalorder %s32, 3
      %p277 = por %p275, %p276
      %p279 = scmp.ne.s32.totalorder %s264, %s278
      %p280 = scmp.eq.s32.totalorder %s32, 0
      %p281 = por %p279, %p280
      %s283 = sadd.s32 %s282, 1
      %p286 = scmp.eq.s32.totalorder %s26, 3
      %p287 = scmp.ne.s32.totalorder %s282, %s284
      %p288 = scmp.eq.s32.totalorder %s26, 0
      %p289 = por %p287, %p288
      %p290 = scmp.ne.s32.totalorder %s282, %s284
      %p291 = scmp.eq.s32.totalorder %s31, 3
      %p292 = por %p290, %p291
      %p293 = scmp.ne.s32.totalorder %s284, %s285
      %p294 = scmp.eq.s32.totalorder %s31, 0
      %p295 = por %p293, %p294
      %p296 = scmp.ne.s32.totalorder %s284, %s285
      %p297 = scmp.eq.s32.totalorder %s32, 3
      %p298 = por %p296, %p297
      %p300 = scmp.ne.s32.totalorder %s285, %s299
      %p301 = scmp.eq.s32.totalorder %s32, 0
      %p302 = por %p300, %p301
      %s303 = ssub.s32 %s33, %s45
      %s304 = ssub.s32 %s34, %s41
      %s305 = sor.u32 %s303, %s304
      %p306 = scmp.eq.s32.totalorder %s305, 0
      %s308 = sadd.s32 %s307, 1
      %s309 = scalar_select %p306, %s307, %s308
      %p312 = pneg %p306
      %p313 = scmp.eq.s32.totalorder %s26, 3
      %p314 = por %p312, %p313
      %p315 = scmp.ne.s32.totalorder %s307, %s310
      %p316 = scmp.eq.s32.totalorder %s26, 0
      %p317 = por %p315, %p316
      %p318 = scmp.ne.s32.totalorder %s307, %s310
      %p319 = scmp.eq.s32.totalorder %s31, 3
      %p320 = por %p318, %p319
      %p321 = scmp.ne.s32.totalorder %s310, %s311
      %p322 = scmp.eq.s32.totalorder %s31, 0
      %p323 = por %p321, %p322
      %p324 = scmp.ne.s32.totalorder %s310, %s311
      %p325 = scmp.eq.s32.totalorder %s32, 3
      %p326 = por %p324, %p325
      %p328 = scmp.ne.s32.totalorder %s311, %s327
      %p329 = scmp.eq.s32.totalorder %s32, 0
      %p330 = por %p328, %p329
      %p331 = scmp.le.s32.totalorder 1, %s26
      %p332 = scmp.lt.s32.totalorder %s26, 5
      %p333 = pnand %p331, %p332
      %p334 = pneg %p333
      // Predicated region
      $region9: #{tpu_custom_call.1} parent=5 // pred_check
        _
      $region10: #{tpu_custom_call.1} parent=5 // pred_check_branch
        %336 = sbr.rel (%p333) target = $region12
      $region11: #{tpu_custom_call.1} parent=5 // pred_region
        %s337 = ssub.s32 %s26, 1
        // Predicated region
        $region13: #{tpu_custom_call.1} parent=11 // pred_check
          %p338 = pneg %p85
        $region14: #{tpu_custom_call.1} parent=11 // pred_check_branch
          %340 = sbr.rel (%p338) target = $region16
        $region15: #{tpu_custom_call.1} parent=11 // pred_region
          _
        $region16: #{tpu_custom_call.1} parent=11 // pred_fallthru
          _
        // Predicated region
        $region17: #{tpu_custom_call.1} parent=11 // pred_check
          %p341 = pneg %p106
        $region18: #{tpu_custom_call.1} parent=11 // pred_check_branch
          %343 = sbr.rel (%p341) target = $region20
        $region19: #{tpu_custom_call.1} parent=11 // pred_region
          _
        $region20: #{tpu_custom_call.1} parent=11 // pred_fallthru
          _
        // Predicated region
        $region21: #{tpu_custom_call.1} parent=11 // pred_check
          %p344 = pneg %p127
        $region22: #{tpu_custom_call.1} parent=11 // pred_check_branch
          %346 = sbr.rel (%p344) target = $region24
        $region23: #{tpu_custom_call.1} parent=11 // pred_region
          %s348 = ssub.s32 3072, 3072
          %349 = vsyncadd [#allocation8], %s348
          %s350 = sshll.u32 [#allocation7], 4
          %s351 = int_to_ptr.vmem [resolvable:$true] %s350
          %356 = dma.hbm_to_vmem [thread:$0]  %s3, 3072, %s351, [#allocation8], 192, 192, 12
        $region24: #{tpu_custom_call.1} parent=11 // pred_fallthru
          _
        // Predicated region
        $region25: #{tpu_custom_call.1} parent=11 // pred_check
          %p357 = pneg %p148
        $region26: #{tpu_custom_call.1} parent=11 // pred_check_branch
          %359 = sbr.rel (%p357) target = $region28
        $region27: #{tpu_custom_call.1} parent=11 // pred_region
          %s361 = ssub.s32 1024, 1024
          %362 = vsyncadd [#allocation8], %s361
          %s363 = sshll.u32 [#allocation9], 4
          %s364 = int_to_ptr.vmem [resolvable:$true] %s363
          %369 = dma.hbm_to_vmem [thread:$0]  %s4, 1024, %s364, [#allocation8], 64, 64, 4
        $region28: #{tpu_custom_call.1} parent=11 // pred_fallthru
          _
        // Predicated region
        $region29: #{tpu_custom_call.1} parent=11 // pred_check
          %p370 = pneg %p169
        $region30: #{tpu_custom_call.1} parent=11 // pred_check_branch
          %372 = sbr.rel (%p370) target = $region32
        $region31: #{tpu_custom_call.1} parent=11 // pred_region
          _
        $region32: #{tpu_custom_call.1} parent=11 // pred_fallthru
          _
        // Predicated region
        $region33: #{tpu_custom_call.1} parent=11 // pred_check
          %p373 = pneg %p190
        $region34: #{tpu_custom_call.1} parent=11 // pred_check_branch
          %375 = sbr.rel (%p373) target = $region36
        $region35: #{tpu_custom_call.1} parent=11 // pred_region
          _
        $region36: #{tpu_custom_call.1} parent=11 // pred_fallthru
          _
        // Predicated region
        $region37: #{tpu_custom_call.1} parent=11 // pred_check
          %p376 = pneg %p211
        $region38: #{tpu_custom_call.1} parent=11 // pred_check_branch
          %378 = sbr.rel (%p376) target = $region40
        $region39: #{tpu_custom_call.1} parent=11 // pred_region
          _
        $region40: #{tpu_custom_call.1} parent=11 // pred_fallthru
          _
        // Predicated region
        $region41: #{tpu_custom_call.1} parent=11 // pred_check
          %p379 = pneg %p232
        $region42: #{tpu_custom_call.1} parent=11 // pred_check_branch
          %381 = sbr.rel (%p379) target = $region44
        $region43: #{tpu_custom_call.1} parent=11 // pred_region
          %s383 = ssub.s32 4096, 4096
          %384 = vsyncadd [#allocation11], %s383
          %s385 = sshll.u32 [#allocation10], 4
          %s386 = int_to_ptr.vmem [resolvable:$true] %s385
          %391 = dma.hbm_to_vmem [thread:$0]  %s8, 4096, %s386, [#allocation11], 256, 256, 16
        $region44: #{tpu_custom_call.1} parent=11 // pred_fallthru
          _
        // Predicated region
        $region45: #{tpu_custom_call.1} parent=11 // pred_check
          %p392 = pneg %p253
        $region46: #{tpu_custom_call.1} parent=11 // pred_check_branch
          %394 = sbr.rel (%p392) target = $region48
        $region47: #{tpu_custom_call.1} parent=11 // pred_region
          _
        $region48: #{tpu_custom_call.1} parent=11 // pred_fallthru
          _
        // Predicated region
        $region49: #{tpu_custom_call.1} parent=11 // pred_check
          %p395 = pneg %p274
        $region50: #{tpu_custom_call.1} parent=11 // pred_check_branch
          %397 = sbr.rel (%p395) target = $region52
        $region51: #{tpu_custom_call.1} parent=11 // pred_region
          %s399 = ssub.s32 4096, 4096
          %400 = vsyncadd [#allocation11], %s399
          %s401 = sshll.u32 [#allocation12], 4
          %s402 = int_to_ptr.vmem [resolvable:$true] %s401
          %407 = dma.hbm_to_vmem [thread:$0]  %s10, 4096, %s402, [#allocation11], 64, 64, 4
        $region52: #{tpu_custom_call.1} parent=11 // pred_fallthru
          _
        // Predicated region
        $region53: #{tpu_custom_call.1} parent=11 // pred_check
          %p408 = pneg %p295
        $region54: #{tpu_custom_call.1} parent=11 // pred_check_branch
          %410 = sbr.rel (%p408) target = $region56
        $region55: #{tpu_custom_call.1} parent=11 // pred_region
          _
        $region56: #{tpu_custom_call.1} parent=11 // pred_fallthru
          _
      $region12: #{tpu_custom_call.1} parent=5 // pred_fallthru
        _
      %p411 = scmp.lt.s32.totalorder %s26, 4
      // Predicated region
      $region57: #{tpu_custom_call.1} parent=5 // pred_check
        %p412 = pneg %p411
      $region58: #{tpu_custom_call.1} parent=5 // pred_check_branch
        %414 = sbr.rel (%p412) target = $region60
      $region59: #{tpu_custom_call.1} parent=5 // pred_region
        // Predicated region
        $region61: #{tpu_custom_call.1} parent=59 // pred_check
          %p415 = pneg %p58
        $region62: #{tpu_custom_call.1} parent=59 // pred_check_branch
          %417 = sbr.rel (%p415) target = $region64
        $region63: #{tpu_custom_call.1} parent=59 // pred_region
          %s418 = sand.u32 %s48, 1
          %s419 = scalar_lea.sflag [#allocation5], %s418
          %s420 = sand.u32 %s48, 1
          %s421 = smul.addr %s420, 256
          %s422 = scalar_lea.vmem [#allocation4], %s421
          %s424 = ssub.s32 4096, 4096
          %425 = vsyncadd %s419, %s424
          %s426 = smul.addr %s33, 32
          %s427 = smul.addr %s426, 128
          %s428 = scalar_lea.hbm %s0, %s427
          %s429 = sshll.u32 %s422, 4
          %s430 = int_to_ptr.vmem [resolvable:$true] %s429
          %435 = dma.hbm_to_vmem [thread:$0]  %s428, 4096, %s430, %s419, 128, 128, 8
        $region64: #{tpu_custom_call.1} parent=59 // pred_fallthru
          _
      $region60: #{tpu_custom_call.1} parent=5 // pred_fallthru
        _
      %p436 = scmp.le.s32.totalorder 1, %s26
      %p437 = scmp.lt.s32.totalorder %s26, 5
      %p438 = pnand %p436, %p437
      %p439 = pneg %p438
      // Predicated region
      $region65: #{tpu_custom_call.1} parent=5 // pred_check
        _
      $region66: #{tpu_custom_call.1} parent=5 // pred_check_branch
        %441 = sbr.rel (%p438) target = $region68
      $region67: #{tpu_custom_call.1} parent=5 // pred_region
        %s442 = ssub.s32 %s26, 1
        %s443 = sand.u32 %s51, 1
        %s444 = scalar_lea.sflag [#allocation5], %s443
        %s445 = sand.u32 %s51, 1
        %s446 = smul.addr %s445, 256
        %s447 = scalar_lea.vmem [#allocation4], %s446
        // Predicated region
        $region69: #{tpu_custom_call.1} parent=67 // pred_check
          %p448 = pneg %p64
        $region70: #{tpu_custom_call.1} parent=67 // pred_check_branch
          %450 = sbr.rel (%p448) target = $region72
        $region71: #{tpu_custom_call.1} parent=67 // pred_region
          %451 = dma.done %s444, 4096
        $region72: #{tpu_custom_call.1} parent=67 // pred_fallthru
          _
        // Predicated region
        $region73: #{tpu_custom_call.1} parent=67 // pred_check
          %p452 = pneg %p127
        $region74: #{tpu_custom_call.1} parent=67 // pred_check_branch
          %454 = sbr.rel (%p452) target = $region76
        $region75: #{tpu_custom_call.1} parent=67 // pred_region
          %455 = dma.done [#allocation8], 3072
        $region76: #{tpu_custom_call.1} parent=67 // pred_fallthru
          _
        // Predicated region
        $region77: #{tpu_custom_call.1} parent=67 // pred_check
          %p456 = pneg %p148
        $region78: #{tpu_custom_call.1} parent=67 // pred_check_branch
          %458 = sbr.rel (%p456) target = $region80
        $region79: #{tpu_custom_call.1} parent=67 // pred_region
          %459 = dma.done [#allocation8], 1024
        $region80: #{tpu_custom_call.1} parent=67 // pred_fallthru
          _
        // Predicated region
        $region81: #{tpu_custom_call.1} parent=67 // pred_check
          %p460 = pneg %p232
        $region82: #{tpu_custom_call.1} parent=67 // pred_check_branch
          %462 = sbr.rel (%p460) target = $region84
        $region83: #{tpu_custom_call.1} parent=67 // pred_region
          %463 = dma.done [#allocation11], 4096
        $region84: #{tpu_custom_call.1} parent=67 // pred_fallthru
          _
        // Predicated region
        $region85: #{tpu_custom_call.1} parent=67 // pred_check
          %p464 = pneg %p274
        $region86: #{tpu_custom_call.1} parent=67 // pred_check_branch
          %466 = sbr.rel (%p464) target = $region88
        $region87: #{tpu_custom_call.1} parent=67 // pred_region
          %467 = dma.done [#allocation11], 4096
        $region88: #{tpu_custom_call.1} parent=67 // pred_fallthru
          _
        %s468 = sand.u32 %s51, 1
        %s469 = scalar_lea.sflag [#allocation5], %s468
        %s470 = sand.u32 %s51, 1
        %s471 = smul.addr %s470, 256
        %s472 = scalar_lea.vmem [#allocation4], %s471
        %p473 = pneg %p64
        %p474 = pneg %p61
        %p475 = pneg %p85
        %p476 = pneg %p82
        %p477 = pneg %p106
        %p478 = pneg %p103
        %p479 = pneg %p127
        %p480 = pneg %p124
        %p481 = pneg %p148
        %p482 = pneg %p145
        %p483 = pneg %p169
        %p484 = pneg %p166
        %p485 = pneg %p190
        %p486 = pneg %p187
        %p487 = pneg %p211
        %p488 = pneg %p208
        %p489 = pneg %p232
        %p490 = pneg %p229
        %p491 = pneg %p253
        %p492 = pneg %p250
        %p493 = pneg %p274
        %p494 = pneg %p271
        %p495 = pneg %p295
        %p496 = pneg %p292
        %p497 = pneg %p323
        %p498 = pneg %p320
        %s499 = sand.u32 %s310, 1
        %s500 = scalar_lea.sflag [#allocation6], %s499
        %s501 = sand.u32 %s310, 1
        %s502 = smul.addr %s501, 128
        %s503 = scalar_lea.vmem [#allocation13], %s502
        %s504 = smul.u32 16, %s36
        %v506 = vld [vmem:[%s1] sm:$0x1]
        %v507 = vld [vmem:[%s2] sm:$0x1]
        %p508 = scmp.eq.s32.totalorder %s36, 0
        // Predicated region
        $region89: #{tpu_custom_call.1} parent=67 // pred_check
          %p509 = pneg %p508
        $region90: #{tpu_custom_call.1} parent=67 // pred_check_branch
          %511 = sbr.rel (%p509) target = $region92
        $region91: #{tpu_custom_call.1} parent=67 // pred_region
          %v512 = vld [vmem:[%s447] sm:$0xff]
          %v513 = vld [vmem:[%s447 + $0x8] sm:$0xff]
          %v514 = vld [vmem:[%s447 + $0x10] sm:$0xff]
          %v515 = vld [vmem:[%s447 + $0x18] sm:$0xff]
          %v516 = vld [vmem:[%s447 + $0x20] sm:$0xff]
          %v517 = vld [vmem:[%s447 + $0x28] sm:$0xff]
          %v518 = vld [vmem:[%s447 + $0x30] sm:$0xff]
          %v519 = vld [vmem:[%s447 + $0x38] sm:$0xff]
          %v520 = vld [vmem:[%s447 + $0x40] sm:$0xff]
          %v521 = vld [vmem:[%s447 + $0x48] sm:$0xff]
          %v522 = vld [vmem:[%s447 + $0x50] sm:$0xff]
          %v523 = vld [vmem:[%s447 + $0x58] sm:$0xff]
          %v524 = vld [vmem:[%s447 + $0x60] sm:$0xff]
          %v525 = vld [vmem:[%s447 + $0x68] sm:$0xff]
          %v526 = vld [vmem:[%s447 + $0x70] sm:$0xff]
          %v527 = vld [vmem:[%s447 + $0x78] sm:$0xff]
          %v528 = vld [vmem:[%s447 + $0x80] sm:$0xff]
          %v529 = vld [vmem:[%s447 + $0x88] sm:$0xff]
          %v530 = vld [vmem:[%s447 + $0x90] sm:$0xff]
          %v531 = vld [vmem:[%s447 + $0x98] sm:$0xff]
          %v532 = vld [vmem:[%s447 + $0xa0] sm:$0xff]
          %v533 = vld [vmem:[%s447 + $0xa8] sm:$0xff]
          %v534 = vld [vmem:[%s447 + $0xb0] sm:$0xff]
          %v535 = vld [vmem:[%s447 + $0xb8] sm:$0xff]
          %v536 = vld [vmem:[%s447 + $0xc0] sm:$0xff]
          %v537 = vld [vmem:[%s447 + $0xc8] sm:$0xff]
          %v538 = vld [vmem:[%s447 + $0xd0] sm:$0xff]
          %v539 = vld [vmem:[%s447 + $0xd8] sm:$0xff]
          %v540 = vld [vmem:[%s447 + $0xe0] sm:$0xff]
          %v541 = vld [vmem:[%s447 + $0xe8] sm:$0xff]
          %v542 = vld [vmem:[%s447 + $0xf0] sm:$0xff]
          %v543 = vld [vmem:[%s447 + $0xf8] sm:$0xff]
          %544 = vadd.xlane.f32.xlu0 %v512
          %v545 = vpop.xlane.xlu0 %544
          %546 = vadd.xlane.f32.xlu0 %v513
          %v547 = vpop.xlane.xlu0 %546
          %548 = vadd.xlane.f32.xlu0 %v514
          %v549 = vpop.xlane.xlu0 %548
          %550 = vadd.xlane.f32.xlu0 %v515
          %v551 = vpop.xlane.xlu0 %550
          %552 = vadd.xlane.f32.xlu0 %v516
          %v553 = vpop.xlane.xlu0 %552
          %554 = vadd.xlane.f32.xlu0 %v517
          %v555 = vpop.xlane.xlu0 %554
          %556 = vadd.xlane.f32.xlu0 %v518
          %v557 = vpop.xlane.xlu0 %556
          %558 = vadd.xlane.f32.xlu0 %v519
          %v559 = vpop.xlane.xlu0 %558
          %560 = vadd.xlane.f32.xlu0 %v520
          %v561 = vpop.xlane.xlu0 %560
          %562 = vadd.xlane.f32.xlu0 %v521
          %v563 = vpop.xlane.xlu0 %562
          %564 = vadd.xlane.f32.xlu0 %v522
          %v565 = vpop.xlane.xlu0 %564
          %566 = vadd.xlane.f32.xlu0 %v523
          %v567 = vpop.xlane.xlu0 %566
          %568 = vadd.xlane.f32.xlu0 %v524
          %v569 = vpop.xlane.xlu0 %568
          %570 = vadd.xlane.f32.xlu0 %v525
          %v571 = vpop.xlane.xlu0 %570
          %572 = vadd.xlane.f32.xlu0 %v526
          %v573 = vpop.xlane.xlu0 %572
          %574 = vadd.xlane.f32.xlu0 %v527
          %v575 = vpop.xlane.xlu0 %574
          %576 = vadd.xlane.f32.xlu0 %v528
          %v577 = vpop.xlane.xlu0 %576
          %578 = vadd.xlane.f32.xlu0 %v529
          %v579 = vpop.xlane.xlu0 %578
          %580 = vadd.xlane.f32.xlu0 %v530
          %v581 = vpop.xlane.xlu0 %580
          %582 = vadd.xlane.f32.xlu0 %v531
          %v583 = vpop.xlane.xlu0 %582
          %584 = vadd.xlane.f32.xlu0 %v532
          %v585 = vpop.xlane.xlu0 %584
          %586 = vadd.xlane.f32.xlu0 %v533
          %v587 = vpop.xlane.xlu0 %586
          %588 = vadd.xlane.f32.xlu0 %v534
          %v589 = vpop.xlane.xlu0 %588
          %590 = vadd.xlane.f32.xlu0 %v535
          %v591 = vpop.xlane.xlu0 %590
          %592 = vadd.xlane.f32.xlu0 %v536
          %v593 = vpop.xlane.xlu0 %592
          %594 = vadd.xlane.f32.xlu0 %v537
          %v595 = vpop.xlane.xlu0 %594
          %596 = vadd.xlane.f32.xlu0 %v538
          %v597 = vpop.xlane.xlu0 %596
          %598 = vadd.xlane.f32.xlu0 %v539
          %v599 = vpop.xlane.xlu0 %598
          %600 = vadd.xlane.f32.xlu0 %v540
          %v601 = vpop.xlane.xlu0 %600
          %602 = vadd.xlane.f32.xlu0 %v541
          %v603 = vpop.xlane.xlu0 %602
          %604 = vadd.xlane.f32.xlu0 %v542
          %v605 = vpop.xlane.xlu0 %604
          %606 = vadd.xlane.f32.xlu0 %v543
          %v607 = vpop.xlane.xlu0 %606
          %v608 = vrcp.pop 128.0
          %v609 = vmul.f32 %v545, %v608
          %v610 = vmul.f32 %v547, %v608
          %v611 = vmul.f32 %v549, %v608
          %v612 = vmul.f32 %v551, %v608
          %v613 = vmul.f32 %v553, %v608
          %v614 = vmul.f32 %v555, %v608
          %v615 = vmul.f32 %v557, %v608
          %v616 = vmul.f32 %v559, %v608
          %v617 = vmul.f32 %v561, %v608
          %v618 = vmul.f32 %v563, %v608
          %v619 = vmul.f32 %v565, %v608
          %v620 = vmul.f32 %v567, %v608
          %v621 = vmul.f32 %v569, %v608
          %v622 = vmul.f32 %v571, %v608
          %v623 = vmul.f32 %v573, %v608
          %v624 = vmul.f32 %v575, %v608
          %v625 = vmul.f32 %v577, %v608
          %v626 = vmul.f32 %v579, %v608
          %v627 = vmul.f32 %v581, %v608
          %v628 = vmul.f32 %v583, %v608
          %v629 = vmul.f32 %v585, %v608
          %v630 = vmul.f32 %v587, %v608
          %v631 = vmul.f32 %v589, %v608
          %v632 = vmul.f32 %v591, %v608
          %v633 = vmul.f32 %v593, %v608
          %v634 = vmul.f32 %v595, %v608
          %v635 = vmul.f32 %v597, %v608
          %v636 = vmul.f32 %v599, %v608
          %v637 = vmul.f32 %v601, %v608
          %v638 = vmul.f32 %v603, %v608
          %v639 = vmul.f32 %v605, %v608
          %v640 = vmul.f32 %v607, %v608
          %v641 = vsub.f32 %v512, %v609
          %v642 = vsub.f32 %v513, %v610
          %v643 = vsub.f32 %v514, %v611
          %v644 = vsub.f32 %v515, %v612
          %v645 = vsub.f32 %v516, %v613
          %v646 = vsub.f32 %v517, %v614
          %v647 = vsub.f32 %v518, %v615
          %v648 = vsub.f32 %v519, %v616
          %v649 = vsub.f32 %v520, %v617
          %v650 = vsub.f32 %v521, %v618
          %v651 = vsub.f32 %v522, %v619
          %v652 = vsub.f32 %v523, %v620
          %v653 = vsub.f32 %v524, %v621
          %v654 = vsub.f32 %v525, %v622
          %v655 = vsub.f32 %v526, %v623
          %v656 = vsub.f32 %v527, %v624
          %v657 = vsub.f32 %v528, %v625
          %v658 = vsub.f32 %v529, %v626
          %v659 = vsub.f32 %v530, %v627
          %v660 = vsub.f32 %v531, %v628
          %v661 = vsub.f32 %v532, %v629
          %v662 = vsub.f32 %v533, %v630
          %v663 = vsub.f32 %v534, %v631
          %v664 = vsub.f32 %v535, %v632
          %v665 = vsub.f32 %v536, %v633
          %v666 = vsub.f32 %v537, %v634
          %v667 = vsub.f32 %v538, %v635
          %v668 = vsub.f32 %v539, %v636
          %v669 = vsub.f32 %v540, %v637
          %v670 = vsub.f32 %v541, %v638
          %v671 = vsub.f32 %v542, %v639
          %v672 = vsub.f32 %v543, %v640
          %v673 = vmul.f32 %v641, %v641
          %v674 = vmul.f32 %v642, %v642
          %v675 = vmul.f32 %v643, %v643
          %v676 = vmul.f32 %v644, %v644
          %v677 = vmul.f32 %v645, %v645
          %v678 = vmul.f32 %v646, %v646
          %v679 = vmul.f32 %v647, %v647
          %v680 = vmul.f32 %v648, %v648
          %v681 = vmul.f32 %v649, %v649
          %v682 = vmul.f32 %v650, %v650
          %v683 = vmul.f32 %v651, %v651
          %v684 = vmul.f32 %v652, %v652
          %v685 = vmul.f32 %v653, %v653
          %v686 = vmul.f32 %v654, %v654
          %v687 = vmul.f32 %v655, %v655
          %v688 = vmul.f32 %v656, %v656
          %v689 = vmul.f32 %v657, %v657
          %v690 = vmul.f32 %v658, %v658
          %v691 = vmul.f32 %v659, %v659
          %v692 = vmul.f32 %v660, %v660
          %v693 = vmul.f32 %v661, %v661
          %v694 = vmul.f32 %v662, %v662
          %v695 = vmul.f32 %v663, %v663
          %v696 = vmul.f32 %v664, %v664
          %v697 = vmul.f32 %v665, %v665
          %v698 = vmul.f32 %v666, %v666
          %v699 = vmul.f32 %v667, %v667
          %v700 = vmul.f32 %v668, %v668
          %v701 = vmul.f32 %v669, %v669
          %v702 = vmul.f32 %v670, %v670
          %v703 = vmul.f32 %v671, %v671
          %v704 = vmul.f32 %v672, %v672
          %705 = vadd.xlane.f32.xlu0 %v673
          %v706 = vpop.xlane.xlu0 %705
          %707 = vadd.xlane.f32.xlu0 %v674
          %v708 = vpop.xlane.xlu0 %707
          %709 = vadd.xlane.f32.xlu0 %v675
          %v710 = vpop.xlane.xlu0 %709
          %711 = vadd.xlane.f32.xlu0 %v676
          %v712 = vpop.xlane.xlu0 %711
          %713 = vadd.xlane.f32.xlu0 %v677
          %v714 = vpop.xlane.xlu0 %713
          %715 = vadd.xlane.f32.xlu0 %v678
          %v716 = vpop.xlane.xlu0 %715
          %717 = vadd.xlane.f32.xlu0 %v679
          %v718 = vpop.xlane.xlu0 %717
          %719 = vadd.xlane.f32.xlu0 %v680
          %v720 = vpop.xlane.xlu0 %719
          %721 = vadd.xlane.f32.xlu0 %v681
          %v722 = vpop.xlane.xlu0 %721
          %723 = vadd.xlane.f32.xlu0 %v682
          %v724 = vpop.xlane.xlu0 %723
          %725 = vadd.xlane.f32.xlu0 %v683
          %v726 = vpop.xlane.xlu0 %725
          %727 = vadd.xlane.f32.xlu0 %v684
          %v728 = vpop.xlane.xlu0 %727
          %729 = vadd.xlane.f32.xlu0 %v685
          %v730 = vpop.xlane.xlu0 %729
          %731 = vadd.xlane.f32.xlu0 %v686
          %v732 = vpop.xlane.xlu0 %731
          %733 = vadd.xlane.f32.xlu0 %v687
          %v734 = vpop.xlane.xlu0 %733
          %735 = vadd.xlane.f32.xlu0 %v688
          %v736 = vpop.xlane.xlu0 %735
          %737 = vadd.xlane.f32.xlu0 %v689
          %v738 = vpop.xlane.xlu0 %737
          %739 = vadd.xlane.f32.xlu0 %v690
          %v740 = vpop.xlane.xlu0 %739
          %741 = vadd.xlane.f32.xlu0 %v691
          %v742 = vpop.xlane.xlu0 %741
          %743 = vadd.xlane.f32.xlu0 %v692
          %v744 = vpop.xlane.xlu0 %743
          %745 = vadd.xlane.f32.xlu0 %v693
          %v746 = vpop.xlane.xlu0 %745
          %747 = vadd.xlane.f32.xlu0 %v694
          %v748 = vpop.xlane.xlu0 %747
          %749 = vadd.xlane.f32.xlu0 %v695
          %v750 = vpop.xlane.xlu0 %749
          %751 = vadd.xlane.f32.xlu0 %v696
          %v752 = vpop.xlane.xlu0 %751
          %753 = vadd.xlane.f32.xlu0 %v697
          %v754 = vpop.xlane.xlu0 %753
          %755 = vadd.xlane.f32.xlu0 %v698
          %v756 = vpop.xlane.xlu0 %755
          %757 = vadd.xlane.f32.xlu0 %v699
          %v758 = vpop.xlane.xlu0 %757
          %759 = vadd.xlane.f32.xlu0 %v700
          %v760 = vpop.xlane.xlu0 %759
          %761 = vadd.xlane.f32.xlu0 %v701
          %v762 = vpop.xlane.xlu0 %761
          %763 = vadd.xlane.f32.xlu0 %v702
          %v764 = vpop.xlane.xlu0 %763
          %765 = vadd.xlane.f32.xlu0 %v703
          %v766 = vpop.xlane.xlu0 %765
          %767 = vadd.xlane.f32.xlu0 %v704
          %v768 = vpop.xlane.xlu0 %767
          %v769 = vmul.f32 %v706, %v608
          %v770 = vmul.f32 %v708, %v608
          %v771 = vmul.f32 %v710, %v608
          %v772 = vmul.f32 %v712, %v608
          %v773 = vmul.f32 %v714, %v608
          %v774 = vmul.f32 %v716, %v608
          %v775 = vmul.f32 %v718, %v608
          %v776 = vmul.f32 %v720, %v608
          %v777 = vmul.f32 %v722, %v608
          %v778 = vmul.f32 %v724, %v608
          %v779 = vmul.f32 %v726, %v608
          %v780 = vmul.f32 %v728, %v608
          %v781 = vmul.f32 %v730, %v608
          %v782 = vmul.f32 %v732, %v608
          %v783 = vmul.f32 %v734, %v608
          %v784 = vmul.f32 %v736, %v608
          %v785 = vmul.f32 %v738, %v608
          %v786 = vmul.f32 %v740, %v608
          %v787 = vmul.f32 %v742, %v608
          %v788 = vmul.f32 %v744, %v608
          %v789 = vmul.f32 %v746, %v608
          %v790 = vmul.f32 %v748, %v608
          %v791 = vmul.f32 %v750, %v608
          %v792 = vmul.f32 %v752, %v608
          %v793 = vmul.f32 %v754, %v608
          %v794 = vmul.f32 %v756, %v608
          %v795 = vmul.f32 %v758, %v608
          %v796 = vmul.f32 %v760, %v608
          %v797 = vmul.f32 %v762, %v608
          %v798 = vmul.f32 %v764, %v608
          %v799 = vmul.f32 %v766, %v608
          %v800 = vmul.f32 %v768, %v608
          %v801 = vadd.f32 %v769, 1e-05
          %v802 = vadd.f32 %v770, 1e-05
          %v803 = vadd.f32 %v771, 1e-05
          %v804 = vadd.f32 %v772, 1e-05
          %v805 = vadd.f32 %v773, 1e-05
          %v806 = vadd.f32 %v774, 1e-05
          %v807 = vadd.f32 %v775, 1e-05
          %v808 = vadd.f32 %v776, 1e-05
          %v809 = vadd.f32 %v777, 1e-05
          %v810 = vadd.f32 %v778, 1e-05
          %v811 = vadd.f32 %v779, 1e-05
          %v812 = vadd.f32 %v780, 1e-05
          %v813 = vadd.f32 %v781, 1e-05
          %v814 = vadd.f32 %v782, 1e-05
          %v815 = vadd.f32 %v783, 1e-05
          %v816 = vadd.f32 %v784, 1e-05
          %v817 = vadd.f32 %v785, 1e-05
          %v818 = vadd.f32 %v786, 1e-05
          %v819 = vadd.f32 %v787, 1e-05
          %v820 = vadd.f32 %v788, 1e-05
          %v821 = vadd.f32 %v789, 1e-05
          %v822 = vadd.f32 %v790, 1e-05
          %v823 = vadd.f32 %v791, 1e-05
          %v824 = vadd.f32 %v792, 1e-05
          %v825 = vadd.f32 %v793, 1e-05
          %v826 = vadd.f32 %v794, 1e-05
          %v827 = vadd.f32 %v795, 1e-05
          %v828 = vadd.f32 %v796, 1e-05
          %v829 = vadd.f32 %v797, 1e-05
          %v830 = vadd.f32 %v798, 1e-05
          %v831 = vadd.f32 %v799, 1e-05
          %v832 = vadd.f32 %v800, 1e-05
          %v833 = vrsqrt.pop %v801
          %v834 = vrsqrt.pop %v802
          %v835 = vrsqrt.pop %v803
          %v836 = vrsqrt.pop %v804
          %v837 = vrsqrt.pop %v805
          %v838 = vrsqrt.pop %v806
          %v839 = vrsqrt.pop %v807
          %v840 = vrsqrt.pop %v808
          %v841 = vrsqrt.pop %v809
          %v842 = vrsqrt.pop %v810
          %v843 = vrsqrt.pop %v811
          %v844 = vrsqrt.pop %v812
          %v845 = vrsqrt.pop %v813
          %v846 = vrsqrt.pop %v814
          %v847 = vrsqrt.pop %v815
          %v848 = vrsqrt.pop %v816
          %v849 = vrsqrt.pop %v817
          %v850 = vrsqrt.pop %v818
          %v851 = vrsqrt.pop %v819
          %v852 = vrsqrt.pop %v820
          %v853 = vrsqrt.pop %v821
          %v854 = vrsqrt.pop %v822
          %v855 = vrsqrt.pop %v823
          %v856 = vrsqrt.pop %v824
          %v857 = vrsqrt.pop %v825
          %v858 = vrsqrt.pop %v826
          %v859 = vrsqrt.pop %v827
          %v860 = vrsqrt.pop %v828
          %v861 = vrsqrt.pop %v829
          %v862 = vrsqrt.pop %v830
          %v863 = vrsqrt.pop %v831
          %v864 = vrsqrt.pop %v832
          %v865 = vmul.f32 %v641, %v833
          %v866 = vmul.f32 %v642, %v834
          %v867 = vmul.f32 %v643, %v835
          %v868 = vmul.f32 %v644, %v836
          %v869 = vmul.f32 %v645, %v837
          %v870 = vmul.f32 %v646, %v838
          %v871 = vmul.f32 %v647, %v839
          %v872 = vmul.f32 %v648, %v840
          %v873 = vmul.f32 %v649, %v841
          %v874 = vmul.f32 %v650, %v842
          %v875 = vmul.f32 %v651, %v843
          %v876 = vmul.f32 %v652, %v844
          %v877 = vmul.f32 %v653, %v845
          %v878 = vmul.f32 %v654, %v846
          %v879 = vmul.f32 %v655, %v847
          %v880 = vmul.f32 %v656, %v848
          %v881 = vmul.f32 %v657, %v849
          %v882 = vmul.f32 %v658, %v850
          %v883 = vmul.f32 %v659, %v851
          %v884 = vmul.f32 %v660, %v852
          %v885 = vmul.f32 %v661, %v853
          %v886 = vmul.f32 %v662, %v854
          %v887 = vmul.f32 %v663, %v855
          %v888 = vmul.f32 %v664, %v856
          %v889 = vmul.f32 %v665, %v857
          %v890 = vmul.f32 %v666, %v858
          %v891 = vmul.f32 %v667, %v859
          %v892 = vmul.f32 %v668, %v860
          %v893 = vmul.f32 %v669, %v861
          %v894 = vmul.f32 %v670, %v862
          %v895 = vmul.f32 %v671, %v863
          %v896 = vmul.f32 %v672, %v864
          %v898 = vlaneseq
          %v899 = vshrl.u32 %v898, 7
          %v900 = vsub.s32 0, %v899
          %v901 = vrot.slane %v506, %v900
          %v903 = vmul.f32 %v865, %v901
          %v904 = vmul.f32 %v866, %v901
          %v905 = vmul.f32 %v867, %v901
          %v906 = vmul.f32 %v868, %v901
          %v907 = vmul.f32 %v869, %v901
          %v908 = vmul.f32 %v870, %v901
          %v909 = vmul.f32 %v871, %v901
          %v910 = vmul.f32 %v872, %v901
          %v911 = vmul.f32 %v873, %v901
          %v912 = vmul.f32 %v874, %v901
          %v913 = vmul.f32 %v875, %v901
          %v914 = vmul.f32 %v876, %v901
          %v915 = vmul.f32 %v877, %v901
          %v916 = vmul.f32 %v878, %v901
          %v917 = vmul.f32 %v879, %v901
          %v918 = vmul.f32 %v880, %v901
          %v919 = vmul.f32 %v881, %v901
          %v920 = vmul.f32 %v882, %v901
          %v921 = vmul.f32 %v883, %v901
          %v922 = vmul.f32 %v884, %v901
          %v923 = vmul.f32 %v885, %v901
          %v924 = vmul.f32 %v886, %v901
          %v925 = vmul.f32 %v887, %v901
          %v926 = vmul.f32 %v888, %v901
          %v927 = vmul.f32 %v889, %v901
          %v928 = vmul.f32 %v890, %v901
          %v929 = vmul.f32 %v891, %v901
          %v930 = vmul.f32 %v892, %v901
          %v931 = vmul.f32 %v893, %v901
          %v932 = vmul.f32 %v894, %v901
          %v933 = vmul.f32 %v895, %v901
          %v934 = vmul.f32 %v896, %v901
          %v936 = vlaneseq
          %v937 = vshrl.u32 %v936, 7
          %v938 = vsub.s32 0, %v937
          %v939 = vrot.slane %v507, %v938
          %v941 = vadd.f32 %v903, %v939
          %v942 = vadd.f32 %v904, %v939
          %v943 = vadd.f32 %v905, %v939
          %v944 = vadd.f32 %v906, %v939
          %v945 = vadd.f32 %v907, %v939
          %v946 = vadd.f32 %v908, %v939
          %v947 = vadd.f32 %v909, %v939
          %v948 = vadd.f32 %v910, %v939
          %v949 = vadd.f32 %v911, %v939
          %v950 = vadd.f32 %v912, %v939
          %v951 = vadd.f32 %v913, %v939
          %v952 = vadd.f32 %v914, %v939
          %v953 = vadd.f32 %v915, %v939
          %v954 = vadd.f32 %v916, %v939
          %v955 = vadd.f32 %v917, %v939
          %v956 = vadd.f32 %v918, %v939
          %v957 = vadd.f32 %v919, %v939
          %v958 = vadd.f32 %v920, %v939
          %v959 = vadd.f32 %v921, %v939
          %v960 = vadd.f32 %v922, %v939
          %v961 = vadd.f32 %v923, %v939
          %v962 = vadd.f32 %v924, %v939
          %v963 = vadd.f32 %v925, %v939
          %v964 = vadd.f32 %v926, %v939
          %v965 = vadd.f32 %v927, %v939
          %v966 = vadd.f32 %v928, %v939
          %v967 = vadd.f32 %v929, %v939
          %v968 = vadd.f32 %v930, %v939
          %v969 = vadd.f32 %v931, %v939
          %v970 = vadd.f32 %v932, %v939
          %v971 = vadd.f32 %v933, %v939
          %v972 = vadd.f32 %v934, %v939
          %v973 = vpack.c.bf16 %v942, %v941
          %v974 = vpack.c.bf16 %v944, %v943
          %v975 = vpack.c.bf16 %v946, %v945
          %v976 = vpack.c.bf16 %v948, %v947
          %v977 = vpack.c.bf16 %v950, %v949
          %v978 = vpack.c.bf16 %v952, %v951
          %v979 = vpack.c.bf16 %v954, %v953
          %v980 = vpack.c.bf16 %v956, %v955
          %v981 = vpack.c.bf16 %v958, %v957
          %v982 = vpack.c.bf16 %v960, %v959
          %v983 = vpack.c.bf16 %v962, %v961
          %v984 = vpack.c.bf16 %v964, %v963
          %v985 = vpack.c.bf16 %v966, %v965
          %v986 = vpack.c.bf16 %v968, %v967
          %v987 = vpack.c.bf16 %v970, %v969
          %v988 = vpack.c.bf16 %v972, %v971
          %v989 = vld [vmem:[#allocation7 + $0x4] sm:$0xff]
          %v990 = vld [vmem:[#allocation7 + $0x10] sm:$0xff]
          %v991 = vld [vmem:[#allocation7 + $0x1c] sm:$0xff]
          %v992 = vld [vmem:[#allocation7 + $0x28] sm:$0xff]
          %v993 = vld [vmem:[#allocation7 + $0x34] sm:$0xff]
          %v994 = vld [vmem:[#allocation7 + $0x40] sm:$0xff]
          %v995 = vld [vmem:[#allocation7 + $0x4c] sm:$0xff]
          %v996 = vld [vmem:[#allocation7 + $0x58] sm:$0xff]
          %v997 = vld [vmem:[#allocation7 + $0x64] sm:$0xff]
          %v998 = vld [vmem:[#allocation7 + $0x70] sm:$0xff]
          %v999 = vld [vmem:[#allocation7 + $0x7c] sm:$0xff]
          %v1000 = vld [vmem:[#allocation7 + $0x88] sm:$0xff]
          %v1001 = vld [vmem:[#allocation7 + $0x94] sm:$0xff]
          %v1002 = vld [vmem:[#allocation7 + $0xa0] sm:$0xff]
          %v1003 = vld [vmem:[#allocation7 + $0xac] sm:$0xff]
          %v1004 = vld [vmem:[#allocation7 + $0xb8] sm:$0xff]
          %v1021 = vunpack.c.l.b16 %v989
          %v1022 = vunpack.c.h.b16 %v989
          %v1023 = vunpack.c.l.b16 %v990
          %v1024 = vunpack.c.h.b16 %v990
          %v1025 = vunpack.c.l.b16 %v991
          %v1026 = vunpack.c.h.b16 %v991
          %v1027 = vunpack.c.l.b16 %v992
          %v1028 = vunpack.c.h.b16 %v992
          %v1029 = vunpack.c.l.b16 %v993
          %v1030 = vunpack.c.h.b16 %v993
          %v1031 = vunpack.c.l.b16 %v994
          %v1032 = vunpack.c.h.b16 %v994
          %v1033 = vunpack.c.l.b16 %v995
          %v1034 = vunpack.c.h.b16 %v995
          %v1035 = vunpack.c.l.b16 %v996
          %v1036 = vunpack.c.h.b16 %v996
          %v1037 = vunpack.c.l.b16 %v997
          %v1038 = vunpack.c.h.b16 %v997
          %v1039 = vunpack.c.l.b16 %v998
          %v1040 = vunpack.c.h.b16 %v998
          %v1041 = vunpack.c.l.b16 %v999
          %v1042 = vunpack.c.h.b16 %v999
          %v1043 = vunpack.c.l.b16 %v1000
          %v1044 = vunpack.c.h.b16 %v1000
          %v1045 = vunpack.c.l.b16 %v1001
          %v1046 = vunpack.c.h.b16 %v1001
          %v1047 = vunpack.c.l.b16 %v1002
          %v1048 = vunpack.c.h.b16 %v1002
          %v1049 = vunpack.c.l.b16 %v1003
          %v1050 = vunpack.c.h.b16 %v1003
          %v1051 = vunpack.c.l.b16 %v1004
          %v1052 = vunpack.c.h.b16 %v1004
          %v1053 = vpack.c.b16 %v1023, %v1021
          %v1054 = vpack.c.b16 %v1024, %v1022
          %v1055 = vpack.c.b16 %v1027, %v1025
          %v1056 = vpack.c.b16 %v1028, %v1026
          %v1057 = vpack.c.b16 %v1031, %v1029
          %v1058 = vpack.c.b16 %v1032, %v1030
          %v1059 = vpack.c.b16 %v1035, %v1033
          %v1060 = vpack.c.b16 %v1036, %v1034
          %v1061 = vpack.c.b16 %v1039, %v1037
          %v1062 = vpack.c.b16 %v1040, %v1038
          %v1063 = vpack.c.b16 %v1043, %v1041
          %v1064 = vpack.c.b16 %v1044, %v1042
          %v1065 = vpack.c.b16 %v1047, %v1045
          %v1066 = vpack.c.b16 %v1048, %v1046
          %v1067 = vpack.c.b16 %v1051, %v1049
          %v1068 = vpack.c.b16 %v1052, %v1050
          %1085 = vmatprep.subr.bf16.mxu0 %v1054
          %1086 = vmatpush1.bf16.msra.mxu0 %v1053
          %1087 = vmatprep.subr.bf16.mxu0 %v1056
          %1088 = vmatpush1.bf16.msra.mxu0 %v1055
          %1089 = vmatprep.subr.bf16.mxu0 %v1058
          %1090 = vmatpush1.bf16.msra.mxu0 %v1057
          %1091 = vmatprep.subr.bf16.mxu0 %v1060
          %1092 = vmatpush1.bf16.msra.mxu0 %v1059
          %1093 = vmatprep.subr.bf16.mxu0 %v1062
          %1094 = vmatpush1.bf16.msra.mxu0 %v1061
          %1095 = vmatprep.subr.bf16.mxu0 %v1064
          %1096 = vmatpush1.bf16.msra.mxu0 %v1063
          %1097 = vmatprep.subr.bf16.mxu0 %v1066
          %1098 = vmatpush1.bf16.msra.mxu0 %v1065
          %1099 = vmatprep.subr.bf16.mxu0 %v1068
          %1100 = vmatpush1.bf16.msra.mxu0 %v1067
          %1101 = vmatprep.subr.bf16.mxu0 0
          %1102 = vmatpush1.bf16.msra.mxu0 0
          %1103 = vmatprep.subr.bf16.mxu0 0
          %1104 = vmatpush1.bf16.msra.mxu0 0
          %1105 = vmatprep.subr.bf16.mxu0 0
          %1106 = vmatpush1.bf16.msra.mxu0 0
          %1107 = vmatprep.subr.bf16.mxu0 0
          %1108 = vmatpush1.bf16.msra.mxu0 0
          %1109 = vmatprep.subr.bf16.mxu0 0
          %1110 = vmatpush1.bf16.msra.mxu0 0
          %1111 = vmatprep.subr.bf16.mxu0 0
          %1112 = vmatpush1.bf16.msra.mxu0 0
          %1113 = vmatprep.subr.bf16.mxu0 0
          %1114 = vmatpush1.bf16.msra.mxu0 0
          %1115 = vmatprep.subr.bf16.mxu0 0
          %1116 = vmatpush1.bf16.msra.mxu0 0
          %1117 = vmatprep.mubr.bf16.mxu0 0
          %1118 = vmatmul.mubr.bf16.gmra.mrb[0].mxu0 %v973
          %v1119 = vpop.f32.mrb[0].mxu0
          %v1120 = vadd.f32 0.0, %v1119
          %v1121 = vpop.f32.mrb[0].mxu0
          %v1122 = vadd.f32 0.0, %v1121
          %v1123 = vpop.f32.mrb[0].mxu0
          %v1124 = vadd.f32 0.0, %v1123
          %v1125 = vpop.f32.mrb[0].mxu0
          %v1126 = vadd.f32 0.0, %v1125
          %1127 = vmatprep.mubr.bf16.mxu0 0
          %1128 = vmatmul.mubr.bf16.gmra.mrb[0].mxu0 %v974
          %v1129 = vpop.f32.mrb[0].mxu0
          %v1130 = vadd.f32 0.0, %v1129
          %v1131 = vpop.f32.mrb[0].mxu0
          %v1132 = vadd.f32 0.0, %v1131
          %v1133 = vpop.f32.mrb[0].mxu0
          %v1134 = vadd.f32 0.0, %v1133
          %v1135 = vpop.f32.mrb[0].mxu0
          %v1136 = vadd.f32 0.0, %v1135
          %1137 = vmatprep.mubr.bf16.mxu0 0
          %1138 = vmatmul.mubr.bf16.gmra.mrb[0].mxu0 %v975
          %v1139 = vpop.f32.mrb[0].mxu0
          %v1140 = vadd.f32 0.0, %v1139
          %v1141 = vpop.f32.mrb[0].mxu0
          %v1142 = vadd.f32 0.0, %v1141
          %v1143 = vpop.f32.mrb[0].mxu0
          %v1144 = vadd.f32 0.0, %v1143
          %v1145 = vpop.f32.mrb[0].mxu0
          %v1146 = vadd.f32 0.0, %v1145
          %1147 = vmatprep.mubr.bf16.mxu0 0
          %1148 = vmatmul.mubr.bf16.gmra.mrb[0].mxu0 %v976
          %v1149 = vpop.f32.mrb[0].mxu0
          %v1150 = vadd.f32 0.0, %v1149
          %v1151 = vpop.f32.mrb[0].mxu0
          %v1152 = vadd.f32 0.0, %v1151
          %v1153 = vpop.f32.mrb[0].mxu0
          %v1154 = vadd.f32 0.0, %v1153
          %v1155 = vpop.f32.mrb[0].mxu0
          %v1156 = vadd.f32 0.0, %v1155
          %1157 = vmatprep.mubr.bf16.mxu0 0
          %1158 = vmatmul.mubr.bf16.gmra.mrb[0].mxu0 %v977
          %v1159 = vpop.f32.mrb[0].mxu0
          %v1160 = vadd.f32 0.0, %v1159
          %v1161 = vpop.f32.mrb[0].mxu0
          %v1162 = vadd.f32 0.0, %v1161
          %v1163 = vpop.f32.mrb[0].mxu0
          %v1164 = vadd.f32 0.0, %v1163
          %v1165 = vpop.f32.mrb[0].mxu0
          %v1166 = vadd.f32 0.0, %v1165
          %1167 = vmatprep.mubr.bf16.mxu0 0
          %1168 = vmatmul.mubr.bf16.gmra.mrb[0].mxu0 %v978
          %v1169 = vpop.f32.mrb[0].mxu0
          %v1170 = vadd.f32 0.0, %v1169
          %v1171 = vpop.f32.mrb[0].mxu0
          %v1172 = vadd.f32 0.0, %v1171
          %v1173 = vpop.f32.mrb[0].mxu0
          %v1174 = vadd.f32 0.0, %v1173
          %v1175 = vpop.f32.mrb[0].mxu0
          %v1176 = vadd.f32 0.0, %v1175
          %1177 = vmatprep.mubr.bf16.mxu0 0
          %1178 = vmatmul.mubr.bf16.gmra.mrb[0].mxu0 %v979
          %v1179 = vpop.f32.mrb[0].mxu0
          %v1180 = vadd.f32 0.0, %v1179
          %v1181 = vpop.f32.mrb[0].mxu0
          %v1182 = vadd.f32 0.0, %v1181
          %v1183 = vpop.f32.mrb[0].mxu0
          %v1184 = vadd.f32 0.0, %v1183
          %v1185 = vpop.f32.mrb[0].mxu0
          %v1186 = vadd.f32 0.0, %v1185
          %1187 = vmatprep.mubr.bf16.mxu0 0
          %1188 = vmatmul.mubr.bf16.gmra.mrb[0].mxu0 %v980
          %v1189 = vpop.f32.mrb[0].mxu0
          %v1190 = vadd.f32 0.0, %v1189
          %v1191 = vpop.f32.mrb[0].mxu0
          %v1192 = vadd.f32 0.0, %v1191
          %v1193 = vpop.f32.mrb[0].mxu0
          %v1194 = vadd.f32 0.0, %v1193
          %v1195 = vpop.f32.mrb[0].mxu0
          %v1196 = vadd.f32 0.0, %v1195
          %1197 = vmatprep.mubr.bf16.mxu0 0
          %1198 = vmatmul.mubr.bf16.gmra.mrb[0].mxu0 %v981
          %v1199 = vpop.f32.mrb[0].mxu0
          %v1200 = vadd.f32 0.0, %v1199
          %v1201 = vpop.f32.mrb[0].mxu0
          %v1202 = vadd.f32 0.0, %v1201
          %v1203 = vpop.f32.mrb[0].mxu0
          %v1204 = vadd.f32 0.0, %v1203
          %v1205 = vpop.f32.mrb[0].mxu0
          %v1206 = vadd.f32 0.0, %v1205
          %1207 = vmatprep.mubr.bf16.mxu0 0
          %1208 = vmatmul.mubr.bf16.gmra.mrb[0].mxu0 %v982
          %v1209 = vpop.f32.mrb[0].mxu0
          %v1210 = vadd.f32 0.0, %v1209
          %v1211 = vpop.f32.mrb[0].mxu0
          %v1212 = vadd.f32 0.0, %v1211
          %v1213 = vpop.f32.mrb[0].mxu0
          %v1214 = vadd.f32 0.0, %v1213
          %v1215 = vpop.f32.mrb[0].mxu0
          %v1216 = vadd.f32 0.0, %v1215
          %1217 = vmatprep.mubr.bf16.mxu0 0
          %1218 = vmatmul.mubr.bf16.gmra.mrb[0].mxu0 %v983
          %v1219 = vpop.f32.mrb[0].mxu0
          %v1220 = vadd.f32 0.0, %v1219
          %v1221 = vpop.f32.mrb[0].mxu0
          %v1222 = vadd.f32 0.0, %v1221
          %v1223 = vpop.f32.mrb[0].mxu0
          %v1224 = vadd.f32 0.0, %v1223
          %v1225 = vpop.f32.mrb[0].mxu0
          %v1226 = vadd.f32 0.0, %v1225
          %1227 = vmatprep.mubr.bf16.mxu0 0
          %1228 = vmatmul.mubr.bf16.gmra.mrb[0].mxu0 %v984
          %v1229 = vpop.f32.mrb[0].mxu0
          %v1230 = vadd.f32 0.0, %v1229
          %v1231 = vpop.f32.mrb[0].mxu0
          %v1232 = vadd.f32 0.0, %v1231
          %v1233 = vpop.f32.mrb[0].mxu0
          %v1234 = vadd.f32 0.0, %v1233
          %v1235 = vpop.f32.mrb[0].mxu0
          %v1236 = vadd.f32 0.0, %v1235
          %1237 = vmatprep.mubr.bf16.mxu0 0
          %1238 = vmatmul.mubr.bf16.gmra.mrb[0].mxu0 %v985
          %v1239 = vpop.f32.mrb[0].mxu0
          %v1240 = vadd.f32 0.0, %v1239
          %v1241 = vpop.f32.mrb[0].mxu0
          %v1242 = vadd.f32 0.0, %v1241
          %v1243 = vpop.f32.mrb[0].mxu0
          %v1244 = vadd.f32 0.0, %v1243
          %v1245 = vpop.f32.mrb[0].mxu0
          %v1246 = vadd.f32 0.0, %v1245
          %1247 = vmatprep.mubr.bf16.mxu0 0
          %1248 = vmatmul.mubr.bf16.gmra.mrb[0].mxu0 %v986
          %v1249 = vpop.f32.mrb[0].mxu0
          %v1250 = vadd.f32 0.0, %v1249
          %v1251 = vpop.f32.mrb[0].mxu0
          %v1252 = vadd.f32 0.0, %v1251
          %v1253 = vpop.f32.mrb[0].mxu0
          %v1254 = vadd.f32 0.0, %v1253
          %v1255 = vpop.f32.mrb[0].mxu0
          %v1256 = vadd.f32 0.0, %v1255
          %1257 = vmatprep.mubr.bf16.mxu0 0
          %1258 = vmatmul.mubr.bf16.gmra.mrb[0].mxu0 %v987
          %v1259 = vpop.f32.mrb[0].mxu0
          %v1260 = vadd.f32 0.0, %v1259
          %v1261 = vpop.f32.mrb[0].mxu0
          %v1262 = vadd.f32 0.0, %v1261
          %v1263 = vpop.f32.mrb[0].mxu0
          %v1264 = vadd.f32 0.0, %v1263
          %v1265 = vpop.f32.mrb[0].mxu0
          %v1266 = vadd.f32 0.0, %v1265
          %1267 = vmatprep.mubr.bf16.mxu0 0
          %1268 = vmatmul.mubr.bf16.gmra.mrb[0].mxu0 %v988
          %v1269 = vpop.f32.mrb[0].mxu0
          %v1270 = vadd.f32 0.0, %v1269
          %v1271 = vpop.f32.mrb[0].mxu0
          %v1272 = vadd.f32 0.0, %v1271
          %v1273 = vpop.f32.mrb[0].mxu0
          %v1274 = vadd.f32 0.0, %v1273
          %v1275 = vpop.f32.mrb[0].mxu0
          %v1276 = vadd.f32 0.0, %v1275
          %1277 = vdwg.mxu0
          %v1278 = vpack.c.bf16 %v1124, %v1120
          %v1279 = vpack.c.bf16 %v1134, %v1130
          %v1280 = vpack.c.bf16 %v1144, %v1140
          %v1281 = vpack.c.bf16 %v1154, %v1150
          %v1282 = vpack.c.bf16 %v1164, %v1160
          %v1283 = vpack.c.bf16 %v1174, %v1170
          %v1284 = vpack.c.bf16 %v1184, %v1180
          %v1285 = vpack.c.bf16 %v1194, %v1190
          %v1286 = vpack.c.bf16 %v1204, %v1200
          %v1287 = vpack.c.bf16 %v1214, %v1210
          %v1288 = vpack.c.bf16 %v1224, %v1220
          %v1289 = vpack.c.bf16 %v1234, %v1230
          %v1290 = vpack.c.bf16 %v1244, %v1240
          %v1291 = vpack.c.bf16 %v1254, %v1250
          %v1292 = vpack.c.bf16 %v1264, %v1260
          %v1293 = vpack.c.bf16 %v1274, %v1270
          %1294 = vst [vmem:[#allocation2] sm:$0xff] %v1278
          %1295 = vst [vmem:[#allocation2 + $0x8] sm:$0xff] %v1279
          %1296 = vst [vmem:[#allocation2 + $0x10] sm:$0xff] %v1280
          %1297 = vst [vmem:[#allocation2 + $0x18] sm:$0xff] %v1281
          %1298 = vst [vmem:[#allocation2 + $0x20] sm:$0xff] %v1282
          %1299 = vst [vmem:[#allocation2 + $0x28] sm:$0xff] %v1283
          %1300 = vst [vmem:[#allocation2 + $0x30] sm:$0xff] %v1284
          %1301 = vst [vmem:[#allocation2 + $0x38] sm:$0xff] %v1285
          %1302 = vst [vmem:[#allocation2 + $0x40] sm:$0xff] %v1286
          %1303 = vst [vmem:[#allocation2 + $0x48] sm:$0xff] %v1287
          %1304 = vst [vmem:[#allocation2 + $0x50] sm:$0xff] %v1288
          %1305 = vst [vmem:[#allocation2 + $0x58] sm:$0xff] %v1289
          %1306 = vst [vmem:[#allocation2 + $0x60] sm:$0xff] %v1290
          %1307 = vst [vmem:[#allocation2 + $0x68] sm:$0xff] %v1291
          %1308 = vst [vmem:[#allocation2 + $0x70] sm:$0xff] %v1292
          %1309 = vst [vmem:[#allocation2 + $0x78] sm:$0xff] %v1293
          %v1310 = vpack.c.bf16 %v1126, %v1122
          %v1311 = vpack.c.bf16 %v1136, %v1132
          %v1312 = vpack.c.bf16 %v1146, %v1142
          %v1313 = vpack.c.bf16 %v1156, %v1152
          %v1314 = vpack.c.bf16 %v1166, %v1162
          %v1315 = vpack.c.bf16 %v1176, %v1172
          %v1316 = vpack.c.bf16 %v1186, %v1182
          %v1317 = vpack.c.bf16 %v1196, %v1192
          %v1318 = vpack.c.bf16 %v1206, %v1202
          %v1319 = vpack.c.bf16 %v1216, %v1212
          %v1320 = vpack.c.bf16 %v1226, %v1222
          %v1321 = vpack.c.bf16 %v1236, %v1232
          %v1322 = vpack.c.bf16 %v1246, %v1242
          %v1323 = vpack.c.bf16 %v1256, %v1252
          %v1324 = vpack.c.bf16 %v1266, %v1262
          %v1325 = vpack.c.bf16 %v1276, %v1272
          %1326 = vst [vmem:[#allocation3] sm:$0xff] %v1310
          %1327 = vst [vmem:[#allocation3 + $0x8] sm:$0xff] %v1311
          %1328 = vst [vmem:[#allocation3 + $0x10] sm:$0xff] %v1312
          %1329 = vst [vmem:[#allocation3 + $0x18] sm:$0xff] %v1313
          %1330 = vst [vmem:[#allocation3 + $0x20] sm:$0xff] %v1314
          %1331 = vst [vmem:[#allocation3 + $0x28] sm:$0xff] %v1315
          %1332 = vst [vmem:[#allocation3 + $0x30] sm:$0xff] %v1316
          %1333 = vst [vmem:[#allocation3 + $0x38] sm:$0xff] %v1317
          %1334 = vst [vmem:[#allocation3 + $0x40] sm:$0xff] %v1318
          %1335 = vst [vmem:[#allocation3 + $0x48] sm:$0xff] %v1319
          %1336 = vst [vmem:[#allocation3 + $0x50] sm:$0xff] %v1320
          %1337 = vst [vmem:[#allocation3 + $0x58] sm:$0xff] %v1321
          %1338 = vst [vmem:[#allocation3 + $0x60] sm:$0xff] %v1322
          %1339 = vst [vmem:[#allocation3 + $0x68] sm:$0xff] %v1323
          %1340 = vst [vmem:[#allocation3 + $0x70] sm:$0xff] %v1324
          %1341 = vst [vmem:[#allocation3 + $0x78] sm:$0xff] %v1325
        $region92: #{tpu_custom_call.1} parent=67 // pred_fallthru
          _
        %s1342 = smul.u32 %s36, 128
        %s1343 = scalar_lea.vmem %s447, %s1342 [#allocation4]
        %v1344 = vld [vmem:[%s1343] sm:$0xff]
        %v1345 = vld [vmem:[%s1343 + $0x8] sm:$0xff]
        %v1346 = vld [vmem:[%s1343 + $0x10] sm:$0xff]
        %v1347 = vld [vmem:[%s1343 + $0x18] sm:$0xff]
        %v1348 = vld [vmem:[%s1343 + $0x20] sm:$0xff]
        %v1349 = vld [vmem:[%s1343 + $0x28] sm:$0xff]
        %v1350 = vld [vmem:[%s1343 + $0x30] sm:$0xff]
        %v1351 = vld [vmem:[%s1343 + $0x38] sm:$0xff]
        %v1352 = vld [vmem:[%s1343 + $0x40] sm:$0xff]
        %v1353 = vld [vmem:[%s1343 + $0x48] sm:$0xff]
        %v1354 = vld [vmem:[%s1343 + $0x50] sm:$0xff]
        %v1355 = vld [vmem:[%s1343 + $0x58] sm:$0xff]
        %v1356 = vld [vmem:[%s1343 + $0x60] sm:$0xff]
        %v1357 = vld [vmem:[%s1343 + $0x68] sm:$0xff]
        %v1358 = vld [vmem:[%s1343 + $0x70] sm:$0xff]
        %v1359 = vld [vmem:[%s1343 + $0x78] sm:$0xff]
        %1360 = vadd.xlane.f32.xlu0 %v1344
        %v1361 = vpop.xlane.xlu0 %1360
        %1362 = vadd.xlane.f32.xlu0 %v1345
        %v1363 = vpop.xlane.xlu0 %1362
        %1364 = vadd.xlane.f32.xlu0 %v1346
        %v1365 = vpop.xlane.xlu0 %1364
        %1366 = vadd.xlane.f32.xlu0 %v1347
        %v1367 = vpop.xlane.xlu0 %1366
        %1368 = vadd.xlane.f32.xlu0 %v1348
        %v1369 = vpop.xlane.xlu0 %1368
        %1370 = vadd.xlane.f32.xlu0 %v1349
        %v1371 = vpop.xlane.xlu0 %1370
        %1372 = vadd.xlane.f32.xlu0 %v1350
        %v1373 = vpop.xlane.xlu0 %1372
        %1374 = vadd.xlane.f32.xlu0 %v1351
        %v1375 = vpop.xlane.xlu0 %1374
        %1376 = vadd.xlane.f32.xlu0 %v1352
        %v1377 = vpop.xlane.xlu0 %1376
        %1378 = vadd.xlane.f32.xlu0 %v1353
        %v1379 = vpop.xlane.xlu0 %1378
        %1380 = vadd.xlane.f32.xlu0 %v1354
        %v1381 = vpop.xlane.xlu0 %1380
        %1382 = vadd.xlane.f32.xlu0 %v1355
        %v1383 = vpop.xlane.xlu0 %1382
        %1384 = vadd.xlane.f32.xlu0 %v1356
        %v1385 = vpop.xlane.xlu0 %1384
        %1386 = vadd.xlane.f32.xlu0 %v1357
        %v1387 = vpop.xlane.xlu0 %1386
        %1388 = vadd.xlane.f32.xlu0 %v1358
        %v1389 = vpop.xlane.xlu0 %1388
        %1390 = vadd.xlane.f32.xlu0 %v1359
        %v1391 = vpop.xlane.xlu0 %1390
        %v1392 = vrcp.pop 128.0
        %v1393 = vmul.f32 %v1361, %v1392
        %v1394 = vmul.f32 %v1363, %v1392
        %v1395 = vmul.f32 %v1365, %v1392
        %v1396 = vmul.f32 %v1367, %v1392
        %v1397 = vmul.f32 %v1369, %v1392
        %v1398 = vmul.f32 %v1371, %v1392
        %v1399 = vmul.f32 %v1373, %v1392
        %v1400 = vmul.f32 %v1375, %v1392
        %v1401 = vmul.f32 %v1377, %v1392
        %v1402 = vmul.f32 %v1379, %v1392
        %v1403 = vmul.f32 %v1381, %v1392
        %v1404 = vmul.f32 %v1383, %v1392
        %v1405 = vmul.f32 %v1385, %v1392
        %v1406 = vmul.f32 %v1387, %v1392
        %v1407 = vmul.f32 %v1389, %v1392
        %v1408 = vmul.f32 %v1391, %v1392
        %v1409 = vsub.f32 %v1344, %v1393
        %v1410 = vsub.f32 %v1345, %v1394
        %v1411 = vsub.f32 %v1346, %v1395
        %v1412 = vsub.f32 %v1347, %v1396
        %v1413 = vsub.f32 %v1348, %v1397
        %v1414 = vsub.f32 %v1349, %v1398
        %v1415 = vsub.f32 %v1350, %v1399
        %v1416 = vsub.f32 %v1351, %v1400
        %v1417 = vsub.f32 %v1352, %v1401
        %v1418 = vsub.f32 %v1353, %v1402
        %v1419 = vsub.f32 %v1354, %v1403
        %v1420 = vsub.f32 %v1355, %v1404
        %v1421 = vsub.f32 %v1356, %v1405
        %v1422 = vsub.f32 %v1357, %v1406
        %v1423 = vsub.f32 %v1358, %v1407
        %v1424 = vsub.f32 %v1359, %v1408
        %v1425 = vmul.f32 %v1409, %v1409
        %v1426 = vmul.f32 %v1410, %v1410
        %v1427 = vmul.f32 %v1411, %v1411
        %v1428 = vmul.f32 %v1412, %v1412
        %v1429 = vmul.f32 %v1413, %v1413
        %v1430 = vmul.f32 %v1414, %v1414
        %v1431 = vmul.f32 %v1415, %v1415
        %v1432 = vmul.f32 %v1416, %v1416
        %v1433 = vmul.f32 %v1417, %v1417
        %v1434 = vmul.f32 %v1418, %v1418
        %v1435 = vmul.f32 %v1419, %v1419
        %v1436 = vmul.f32 %v1420, %v1420
        %v1437 = vmul.f32 %v1421, %v1421
        %v1438 = vmul.f32 %v1422, %v1422
        %v1439 = vmul.f32 %v1423, %v1423
        %v1440 = vmul.f32 %v1424, %v1424
        %1441 = vadd.xlane.f32.xlu0 %v1425
        %v1442 = vpop.xlane.xlu0 %1441
        %1443 = vadd.xlane.f32.xlu0 %v1426
        %v1444 = vpop.xlane.xlu0 %1443
        %1445 = vadd.xlane.f32.xlu0 %v1427
        %v1446 = vpop.xlane.xlu0 %1445
        %1447 = vadd.xlane.f32.xlu0 %v1428
        %v1448 = vpop.xlane.xlu0 %1447
        %1449 = vadd.xlane.f32.xlu0 %v1429
        %v1450 = vpop.xlane.xlu0 %1449
        %1451 = vadd.xlane.f32.xlu0 %v1430
        %v1452 = vpop.xlane.xlu0 %1451
        %1453 = vadd.xlane.f32.xlu0 %v1431
        %v1454 = vpop.xlane.xlu0 %1453
        %1455 = vadd.xlane.f32.xlu0 %v1432
        %v1456 = vpop.xlane.xlu0 %1455
        %1457 = vadd.xlane.f32.xlu0 %v1433
        %v1458 = vpop.xlane.xlu0 %1457
        %1459 = vadd.xlane.f32.xlu0 %v1434
        %v1460 = vpop.xlane.xlu0 %1459
        %1461 = vadd.xlane.f32.xlu0 %v1435
        %v1462 = vpop.xlane.xlu0 %1461
        %1463 = vadd.xlane.f32.xlu0 %v1436
        %v1464 = vpop.xlane.xlu0 %1463
        %1465 = vadd.xlane.f32.xlu0 %v1437
        %v1466 = vpop.xlane.xlu0 %1465
        %1467 = vadd.xlane.f32.xlu0 %v1438
        %v1468 = vpop.xlane.xlu0 %1467
        %1469 = vadd.xlane.f32.xlu0 %v1439
        %v1470 = vpop.xlane.xlu0 %1469
        %1471 = vadd.xlane.f32.xlu0 %v1440
        %v1472 = vpop.xlane.xlu0 %1471
        %v1473 = vmul.f32 %v1442, %v1392
        %v1474 = vmul.f32 %v1444, %v1392
        %v1475 = vmul.f32 %v1446, %v1392
        %v1476 = vmul.f32 %v1448, %v1392
        %v1477 = vmul.f32 %v1450, %v1392
        %v1478 = vmul.f32 %v1452, %v1392
        %v1479 = vmul.f32 %v1454, %v1392
        %v1480 = vmul.f32 %v1456, %v1392
        %v1481 = vmul.f32 %v1458, %v1392
        %v1482 = vmul.f32 %v1460, %v1392
        %v1483 = vmul.f32 %v1462, %v1392
        %v1484 = vmul.f32 %v1464, %v1392
        %v1485 = vmul.f32 %v1466, %v1392
        %v1486 = vmul.f32 %v1468, %v1392
        %v1487 = vmul.f32 %v1470, %v1392
        %v1488 = vmul.f32 %v1472, %v1392
        %v1489 = vadd.f32 %v1473, 1e-05
        %v1490 = vadd.f32 %v1474, 1e-05
        %v1491 = vadd.f32 %v1475, 1e-05
        %v1492 = vadd.f32 %v1476, 1e-05
        %v1493 = vadd.f32 %v1477, 1e-05
        %v1494 = vadd.f32 %v1478, 1e-05
        %v1495 = vadd.f32 %v1479, 1e-05
        %v1496 = vadd.f32 %v1480, 1e-05
        %v1497 = vadd.f32 %v1481, 1e-05
        %v1498 = vadd.f32 %v1482, 1e-05
        %v1499 = vadd.f32 %v1483, 1e-05
        %v1500 = vadd.f32 %v1484, 1e-05
        %v1501 = vadd.f32 %v1485, 1e-05
        %v1502 = vadd.f32 %v1486, 1e-05
        %v1503 = vadd.f32 %v1487, 1e-05
        %v1504 = vadd.f32 %v1488, 1e-05
        %v1505 = vrsqrt.pop %v1489
        %v1506 = vrsqrt.pop %v1490
        %v1507 = vrsqrt.pop %v1491
        %v1508 = vrsqrt.pop %v1492
        %v1509 = vrsqrt.pop %v1493
        %v1510 = vrsqrt.pop %v1494
        %v1511 = vrsqrt.pop %v1495
        %v1512 = vrsqrt.pop %v1496
        %v1513 = vrsqrt.pop %v1497
        %v1514 = vrsqrt.pop %v1498
        %v1515 = vrsqrt.pop %v1499
        %v1516 = vrsqrt.pop %v1500
        %v1517 = vrsqrt.pop %v1501
        %v1518 = vrsqrt.pop %v1502
        %v1519 = vrsqrt.pop %v1503
        %v1520 = vrsqrt.pop %v1504
        %v1521 = vmul.f32 %v1409, %v1505
        %v1522 = vmul.f32 %v1410, %v1506
        %v1523 = vmul.f32 %v1411, %v1507
        %v1524 = vmul.f32 %v1412, %v1508
        %v1525 = vmul.f32 %v1413, %v1509
        %v1526 = vmul.f32 %v1414, %v1510
        %v1527 = vmul.f32 %v1415, %v1511
        %v1528 = vmul.f32 %v1416, %v1512
        %v1529 = vmul.f32 %v1417, %v1513
        %v1530 = vmul.f32 %v1418, %v1514
        %v1531 = vmul.f32 %v1419, %v1515
        %v1532 = vmul.f32 %v1420, %v1516
        %v1533 = vmul.f32 %v1421, %v1517
        %v1534 = vmul.f32 %v1422, %v1518
        %v1535 = vmul.f32 %v1423, %v1519
        %v1536 = vmul.f32 %v1424, %v1520
        %v1538 = vlaneseq
        %v1539 = vshrl.u32 %v1538, 7
        %v1540 = vsub.s32 0, %v1539
        %v1541 = vrot.slane %v506, %v1540
        %v1543 = vmul.f32 %v1521, %v1541
        %v1544 = vmul.f32 %v1522, %v1541
        %v1545 = vmul.f32 %v1523, %v1541
        %v1546 = vmul.f32 %v1524, %v1541
        %v1547 = vmul.f32 %v1525, %v1541
        %v1548 = vmul.f32 %v1526, %v1541
        %v1549 = vmul.f32 %v1527, %v1541
        %v1550 = vmul.f32 %v1528, %v1541
        %v1551 = vmul.f32 %v1529, %v1541
        %v1552 = vmul.f32 %v1530, %v1541
        %v1553 = vmul.f32 %v1531, %v1541
        %v1554 = vmul.f32 %v1532, %v1541
        %v1555 = vmul.f32 %v1533, %v1541
        %v1556 = vmul.f32 %v1534, %v1541
        %v1557 = vmul.f32 %v1535, %v1541
        %v1558 = vmul.f32 %v1536, %v1541
        %v1560 = vlaneseq
        %v1561 = vshrl.u32 %v1560, 7
        %v1562 = vsub.s32 0, %v1561
        %v1563 = vrot.slane %v507, %v1562
        %v1565 = vadd.f32 %v1543, %v1563
        %v1566 = vadd.f32 %v1544, %v1563
        %v1567 = vadd.f32 %v1545, %v1563
        %v1568 = vadd.f32 %v1546, %v1563
        %v1569 = vadd.f32 %v1547, %v1563
        %v1570 = vadd.f32 %v1548, %v1563
        %v1571 = vadd.f32 %v1549, %v1563
        %v1572 = vadd.f32 %v1550, %v1563
        %v1573 = vadd.f32 %v1551, %v1563
        %v1574 = vadd.f32 %v1552, %v1563
        %v1575 = vadd.f32 %v1553, %v1563
        %v1576 = vadd.f32 %v1554, %v1563
        %v1577 = vadd.f32 %v1555, %v1563
        %v1578 = vadd.f32 %v1556, %v1563
        %v1579 = vadd.f32 %v1557, %v1563
        %v1580 = vadd.f32 %v1558, %v1563
        %v1581 = vpack.c.bf16 %v1566, %v1565
        %v1582 = vpack.c.bf16 %v1568, %v1567
        %v1583 = vpack.c.bf16 %v1570, %v1569
        %v1584 = vpack.c.bf16 %v1572, %v1571
        %v1585 = vpack.c.bf16 %v1574, %v1573
        %v1586 = vpack.c.bf16 %v1576, %v1575
        %v1587 = vpack.c.bf16 %v1578, %v1577
        %v1588 = vpack.c.bf16 %v1580, %v1579
        %v1589 = vld [vmem:[#allocation7] sm:$0xf]
        %v1590 = vld [vmem:[#allocation7 + $0xc] sm:$0xf]
        %v1591 = vld [vmem:[#allocation7 + $0x18] sm:$0xf]
        %v1592 = vld [vmem:[#allocation7 + $0x24] sm:$0xf]
        %v1593 = vld [vmem:[#allocation7 + $0x30] sm:$0xf]
        %v1594 = vld [vmem:[#allocation7 + $0x3c] sm:$0xf]
        %v1595 = vld [vmem:[#allocation7 + $0x48] sm:$0xf]
        %v1596 = vld [vmem:[#allocation7 + $0x54] sm:$0xf]
        %v1597 = vld [vmem:[#allocation7 + $0x60] sm:$0xf]
        %v1598 = vld [vmem:[#allocation7 + $0x6c] sm:$0xf]
        %v1599 = vld [vmem:[#allocation7 + $0x78] sm:$0xf]
        %v1600 = vld [vmem:[#allocation7 + $0x84] sm:$0xf]
        %v1601 = vld [vmem:[#allocation7 + $0x90] sm:$0xf]
        %v1602 = vld [vmem:[#allocation7 + $0x9c] sm:$0xf]
        %v1603 = vld [vmem:[#allocation7 + $0xa8] sm:$0xf]
        %v1604 = vld [vmem:[#allocation7 + $0xb4] sm:$0xf]
        %v1621 = vunpack.c.l.b16 %v1589
        %v1622 = vunpack.c.l.b16 %v1590
        %v1623 = vunpack.c.l.b16 %v1591
        %v1624 = vunpack.c.l.b16 %v1592
        %v1625 = vunpack.c.l.b16 %v1593
        %v1626 = vunpack.c.l.b16 %v1594
        %v1627 = vunpack.c.l.b16 %v1595
        %v1628 = vunpack.c.l.b16 %v1596
        %v1629 = vunpack.c.l.b16 %v1597
        %v1630 = vunpack.c.l.b16 %v1598
        %v1631 = vunpack.c.l.b16 %v1599
        %v1632 = vunpack.c.l.b16 %v1600
        %v1633 = vunpack.c.l.b16 %v1601
        %v1634 = vunpack.c.l.b16 %v1602
        %v1635 = vunpack.c.l.b16 %v1603
        %v1636 = vunpack.c.l.b16 %v1604
        %v1637 = vpack.c.b16 %v1622, %v1621
        %v1638 = vpack.c.b16 %v1624, %v1623
        %v1639 = vpack.c.b16 %v1626, %v1625
        %v1640 = vpack.c.b16 %v1628, %v1627
        %v1641 = vpack.c.b16 %v1630, %v1629
        %v1642 = vpack.c.b16 %v1632, %v1631
        %v1643 = vpack.c.b16 %v1634, %v1633
        %v1644 = vpack.c.b16 %v1636, %v1635
        %1653 = vmatprep.subr.bf16.mxu0 0
        %1654 = vmatpush1.bf16.msra.mxu0 %v1637
        %1655 = vmatprep.subr.bf16.mxu0 0
        %1656 = vmatpush1.bf16.msra.mxu0 %v1638
        %1657 = vmatprep.subr.bf16.mxu0 0
        %1658 = vmatpush1.bf16.msra.mxu0 %v1639
        %1659 = vmatprep.subr.bf16.mxu0 0
        %1660 = vmatpush1.bf16.msra.mxu0 %v1640
        %1661 = vmatprep.subr.bf16.mxu0 0
        %1662 = vmatpush1.bf16.msra.mxu0 %v1641
        %1663 = vmatprep.subr.bf16.mxu0 0
        %1664 = vmatpush1.bf16.msra.mxu0 %v1642
        %1665 = vmatprep.subr.bf16.mxu0 0
        %1666 = vmatpush1.bf16.msra.mxu0 %v1643
        %1667 = vmatprep.subr.bf16.mxu0 0
        %1668 = vmatpush1.bf16.msra.mxu0 %v1644
        %1669 = vmatprep.subr.bf16.mxu0 0
        %1670 = vmatpush1.bf16.msra.mxu0 0
        %1671 = vmatprep.subr.bf16.mxu0 0
        %1672 = vmatpush1.bf16.msra.mxu0 0
        %1673 = vmatprep.subr.bf16.mxu0 0
        %1674 = vmatpush1.bf16.msra.mxu0 0
        %1675 = vmatprep.subr.bf16.mxu0 0
        %1676 = vmatpush1.bf16.msra.mxu0 0
        %1677 = vmatprep.subr.bf16.mxu0 0
        %1678 = vmatpush1.bf16.msra.mxu0 0
        %1679 = vmatprep.subr.bf16.mxu0 0
        %1680 = vmatpush1.bf16.msra.mxu0 0
        %1681 = vmatprep.subr.bf16.mxu0 0
        %1682 = vmatpush1.bf16.msra.mxu0 0
        %1683 = vmatprep.subr.bf16.mxu0 0
        %1684 = vmatpush1.bf16.msra.mxu0 0
        %1685 = vmatprep.mubr.bf16.mxu0 0
        %1686 = vmatmul.mubr.bf16.gmra.mrb[0].mxu0 %v1581
        %v1687 = vpop.f32.mrb[0].mxu0
        %v1688 = vadd.f32 0.0, %v1687
        %v1689 = vpop.f32.mrb[0].mxu0
        %v1690 = vpop.f32.mrb[0].mxu0
        %v1691 = vadd.f32 0.0, %v1690
        %v1692 = vpop.f32.mrb[0].mxu0
        %1693 = vmatprep.mubr.bf16.mxu0 0
        %1694 = vmatmul.mubr.bf16.gmra.mrb[0].mxu0 %v1582
        %v1695 = vpop.f32.mrb[0].mxu0
        %v1696 = vadd.f32 0.0, %v1695
        %v1697 = vpop.f32.mrb[0].mxu0
        %v1698 = vpop.f32.mrb[0].mxu0
        %v1699 = vadd.f32 0.0, %v1698
        %v1700 = vpop.f32.mrb[0].mxu0
        %1701 = vmatprep.mubr.bf16.mxu0 0
        %1702 = vmatmul.mubr.bf16.gmra.mrb[0].mxu0 %v1583
        %v1703 = vpop.f32.mrb[0].mxu0
        %v1704 = vadd.f32 0.0, %v1703
        %v1705 = vpop.f32.mrb[0].mxu0
        %v1706 = vpop.f32.mrb[0].mxu0
        %v1707 = vadd.f32 0.0, %v1706
        %v1708 = vpop.f32.mrb[0].mxu0
        %1709 = vmatprep.mubr.bf16.mxu0 0
        %1710 = vmatmul.mubr.bf16.gmra.mrb[0].mxu0 %v1584
        %v1711 = vpop.f32.mrb[0].mxu0
        %v1712 = vadd.f32 0.0, %v1711
        %v1713 = vpop.f32.mrb[0].mxu0
        %v1714 = vpop.f32.mrb[0].mxu0
        %v1715 = vadd.f32 0.0, %v1714
        %v1716 = vpop.f32.mrb[0].mxu0
        %1717 = vmatprep.mubr.bf16.mxu0 0
        %1718 = vmatmul.mubr.bf16.gmra.mrb[0].mxu0 %v1585
        %v1719 = vpop.f32.mrb[0].mxu0
        %v1720 = vadd.f32 0.0, %v1719
        %v1721 = vpop.f32.mrb[0].mxu0
        %v1722 = vpop.f32.mrb[0].mxu0
        %v1723 = vadd.f32 0.0, %v1722
        %v1724 = vpop.f32.mrb[0].mxu0
        %1725 = vmatprep.mubr.bf16.mxu0 0
        %1726 = vmatmul.mubr.bf16.gmra.mrb[0].mxu0 %v1586
        %v1727 = vpop.f32.mrb[0].mxu0
        %v1728 = vadd.f32 0.0, %v1727
        %v1729 = vpop.f32.mrb[0].mxu0
        %v1730 = vpop.f32.mrb[0].mxu0
        %v1731 = vadd.f32 0.0, %v1730
        %v1732 = vpop.f32.mrb[0].mxu0
        %1733 = vmatprep.mubr.bf16.mxu0 0
        %1734 = vmatmul.mubr.bf16.gmra.mrb[0].mxu0 %v1587
        %v1735 = vpop.f32.mrb[0].mxu0
        %v1736 = vadd.f32 0.0, %v1735
        %v1737 = vpop.f32.mrb[0].mxu0
        %v1738 = vpop.f32.mrb[0].mxu0
        %v1739 = vadd.f32 0.0, %v1738
        %v1740 = vpop.f32.mrb[0].mxu0
        %1741 = vmatprep.mubr.bf16.mxu0 0
        %1742 = vmatmul.mubr.bf16.gmra.mrb[0].mxu0 %v1588
        %v1743 = vpop.f32.mrb[0].mxu0
        %v1744 = vadd.f32 0.0, %v1743
        %v1745 = vpop.f32.mrb[0].mxu0
        %v1746 = vpop.f32.mrb[0].mxu0
        %v1747 = vadd.f32 0.0, %v1746
        %v1748 = vpop.f32.mrb[0].mxu0
        %1749 = vdwg.mxu0
        %v1750 = vmul.f32 %v1688, 0.17677669
        %v1751 = vmul.f32 %v1691, 0.17677669
        %v1752 = vmul.f32 %v1696, 0.17677669
        %v1753 = vmul.f32 %v1699, 0.17677669
        %v1754 = vmul.f32 %v1704, 0.17677669
        %v1755 = vmul.f32 %v1707, 0.17677669
        %v1756 = vmul.f32 %v1712, 0.17677669
        %v1757 = vmul.f32 %v1715, 0.17677669
        %v1758 = vmul.f32 %v1720, 0.17677669
        %v1759 = vmul.f32 %v1723, 0.17677669
        %v1760 = vmul.f32 %v1728, 0.17677669
        %v1761 = vmul.f32 %v1731, 0.17677669
        %v1762 = vmul.f32 %v1736, 0.17677669
        %v1763 = vmul.f32 %v1739, 0.17677669
        %v1764 = vmul.f32 %v1744, 0.17677669
        %v1765 = vmul.f32 %v1747, 0.17677669
        %v1766 = vpack.c.bf16 %v1751, %v1750
        %v1767 = vpack.c.bf16 %v1753, %v1752
        %v1768 = vpack.c.bf16 %v1755, %v1754
        %v1769 = vpack.c.bf16 %v1757, %v1756
        %v1770 = vpack.c.bf16 %v1759, %v1758
        %v1771 = vpack.c.bf16 %v1761, %v1760
        %v1772 = vpack.c.bf16 %v1763, %v1762
        %v1773 = vpack.c.bf16 %v1765, %v1764
        %v1774 = vld [vmem:[#allocation2] sm:$0xff]
        %v1775 = vld [vmem:[#allocation2 + $0x8] sm:$0xff]
        %v1776 = vld [vmem:[#allocation2 + $0x10] sm:$0xff]
        %v1777 = vld [vmem:[#allocation2 + $0x18] sm:$0xff]
        %v1778 = vld [vmem:[#allocation2 + $0x20] sm:$0xff]
        %v1779 = vld [vmem:[#allocation2 + $0x28] sm:$0xff]
        %v1780 = vld [vmem:[#allocation2 + $0x30] sm:$0xff]
        %v1781 = vld [vmem:[#allocation2 + $0x38] sm:$0xff]
        %v1782 = vld [vmem:[#allocation2 + $0x40] sm:$0xff]
        %v1783 = vld [vmem:[#allocation2 + $0x48] sm:$0xff]
        %v1784 = vld [vmem:[#allocation2 + $0x50] sm:$0xff]
        %v1785 = vld [vmem:[#allocation2 + $0x58] sm:$0xff]
        %v1786 = vld [vmem:[#allocation2 + $0x60] sm:$0xff]
        %v1787 = vld [vmem:[#allocation2 + $0x68] sm:$0xff]
        %v1788 = vld [vmem:[#allocation2 + $0x70] sm:$0xff]
        %v1789 = vld [vmem:[#allocation2 + $0x78] sm:$0xff]
        %vm1790 = vcmask 261120
        %v1792 = vsel %vm1790, %v1766, 0
        %v1795 = vsel %vm1790, %v1767, 0
        %v1798 = vsel %vm1790, %v1768, 0
        %v1801 = vsel %vm1790, %v1769, 0
        %v1804 = vsel %vm1790, %v1770, 0
        %v1807 = vsel %vm1790, %v1771, 0
        %v1810 = vsel %vm1790, %v1772, 0
        %v1813 = vsel %vm1790, %v1773, 0
        %v1816 = vsel %vm1790, %v1774, 0
        %v1819 = vsel %vm1790, %v1775, 0
        %v1822 = vsel %vm1790, %v1776, 0
        %v1825 = vsel %vm1790, %v1777, 0
        %v1828 = vsel %vm1790, %v1778, 0
        %v1831 = vsel %vm1790, %v1779, 0
        %v1834 = vsel %vm1790, %v1780, 0
        %v1837 = vsel %vm1790, %v1781, 0
        %v1840 = vsel %vm1790, %v1782, 0
        %v1843 = vsel %vm1790, %v1783, 0
        %v1846 = vsel %vm1790, %v1784, 0
        %v1849 = vsel %vm1790, %v1785, 0
        %v1852 = vsel %vm1790, %v1786, 0
        %v1855 = vsel %vm1790, %v1787, 0
        %v1858 = vsel %vm1790, %v1788, 0
        %v1861 = vsel %vm1790, %v1789, 0
        %1863 = vmatprep.subr.bf16.mxu0 0
        %1864 = vmatpush1.bf16.xpose.msra.mxu0 %v1816
        %1865 = vmatprep.subr.bf16.mxu0 0
        %1866 = vmatpush1.bf16.xpose.msra.mxu0 %v1819
        %1867 = vmatprep.subr.bf16.mxu0 0
        %1868 = vmatpush1.bf16.xpose.msra.mxu0 %v1822
        %1869 = vmatprep.subr.bf16.mxu0 0
        %1870 = vmatpush1.bf16.xpose.msra.mxu0 %v1825
        %1871 = vmatprep.subr.bf16.mxu0 0
        %1872 = vmatpush1.bf16.xpose.msra.mxu0 %v1828
        %1873 = vmatprep.subr.bf16.mxu0 0
        %1874 = vmatpush1.bf16.xpose.msra.mxu0 %v1831
        %1875 = vmatprep.subr.bf16.mxu0 0
        %1876 = vmatpush1.bf16.xpose.msra.mxu0 %v1834
        %1877 = vmatprep.subr.bf16.mxu0 0
        %1878 = vmatpush1.bf16.xpose.msra.mxu0 %v1837
        %1879 = vmatprep.subr.bf16.mxu0 0
        %1880 = vmatpush1.bf16.xpose.msra.mxu0 %v1840
        %1881 = vmatprep.subr.bf16.mxu0 0
        %1882 = vmatpush1.bf16.xpose.msra.mxu0 %v1843
        %1883 = vmatprep.subr.bf16.mxu0 0
        %1884 = vmatpush1.bf16.xpose.msra.mxu0 %v1846
        %1885 = vmatprep.subr.bf16.mxu0 0
        %1886 = vmatpush1.bf16.xpose.msra.mxu0 %v1849
        %1887 = vmatprep.subr.bf16.mxu0 0
        %1888 = vmatpush1.bf16.xpose.msra.mxu0 %v1852
        %1889 = vmatprep.subr.bf16.mxu0 0
        %1890 = vmatpush1.bf16.xpose.msra.mxu0 %v1855
        %1891 = vmatprep.subr.bf16.mxu0 0
        %1892 = vmatpush1.bf16.xpose.msra.mxu0 %v1858
        %1893 = vmatprep.subr.bf16.mxu0 0
        %1894 = vmatpush1.bf16.xpose.msra.mxu0 %v1861
        %1895 = vmatprep.mubr.bf16.mxu0 0
        %1896 = vmatmul.mubr.bf16.gmra.mrb[0].mxu0 %v1792
        %v1897 = vpop.f32.mrb[0].mxu0
        %v1898 = vadd.f32 0.0, %v1897
        %v1899 = vpop.f32.mrb[0].mxu0
        %v1900 = vadd.f32 0.0, %v1899
        %v1901 = vpop.f32.mrb[0].mxu0
        %v1902 = vadd.f32 0.0, %v1901
        %v1903 = vpop.f32.mrb[0].mxu0
        %v1904 = vadd.f32 0.0, %v1903
        %1905 = vmatprep.mubr.bf16.mxu0 0
        %1906 = vmatmul.mubr.bf16.gmra.mrb[0].mxu0 %v1795
        %v1907 = vpop.f32.mrb[0].mxu0
        %v1908 = vadd.f32 0.0, %v1907
        %v1909 = vpop.f32.mrb[0].mxu0
        %v1910 = vadd.f32 0.0, %v1909
        %v1911 = vpop.f32.mrb[0].mxu0
        %v1912 = vadd.f32 0.0, %v1911
        %v1913 = vpop.f32.mrb[0].mxu0
        %v1914 = vadd.f32 0.0, %v1913
        %1915 = vmatprep.mubr.bf16.mxu0 0
        %1916 = vmatmul.mubr.bf16.gmra.mrb[0].mxu0 %v1798
        %v1917 = vpop.f32.mrb[0].mxu0
        %v1918 = vadd.f32 0.0, %v1917
        %v1919 = vpop.f32.mrb[0].mxu0
        %v1920 = vadd.f32 0.0, %v1919
        %v1921 = vpop.f32.mrb[0].mxu0
        %v1922 = vadd.f32 0.0, %v1921
        %v1923 = vpop.f32.mrb[0].mxu0
        %v1924 = vadd.f32 0.0, %v1923
        %1925 = vmatprep.mubr.bf16.mxu0 0
        %1926 = vmatmul.mubr.bf16.gmra.mrb[0].mxu0 %v1801
        %v1927 = vpop.f32.mrb[0].mxu0
        %v1928 = vadd.f32 0.0, %v1927
        %v1929 = vpop.f32.mrb[0].mxu0
        %v1930 = vadd.f32 0.0, %v1929
        %v1931 = vpop.f32.mrb[0].mxu0
        %v1932 = vadd.f32 0.0, %v1931
        %v1933 = vpop.f32.mrb[0].mxu0
        %v1934 = vadd.f32 0.0, %v1933
        %1935 = vmatprep.mubr.bf16.mxu0 0
        %1936 = vmatmul.mubr.bf16.gmra.mrb[0].mxu0 %v1804
        %v1937 = vpop.f32.mrb[0].mxu0
        %v1938 = vadd.f32 0.0, %v1937
        %v1939 = vpop.f32.mrb[0].mxu0
        %v1940 = vadd.f32 0.0, %v1939
        %v1941 = vpop.f32.mrb[0].mxu0
        %v1942 = vadd.f32 0.0, %v1941
        %v1943 = vpop.f32.mrb[0].mxu0
        %v1944 = vadd.f32 0.0, %v1943
        %1945 = vmatprep.mubr.bf16.mxu0 0
        %1946 = vmatmul.mubr.bf16.gmra.mrb[0].mxu0 %v1807
        %v1947 = vpop.f32.mrb[0].mxu0
        %v1948 = vadd.f32 0.0, %v1947
        %v1949 = vpop.f32.mrb[0].mxu0
        %v1950 = vadd.f32 0.0, %v1949
        %v1951 = vpop.f32.mrb[0].mxu0
        %v1952 = vadd.f32 0.0, %v1951
        %v1953 = vpop.f32.mrb[0].mxu0
        %v1954 = vadd.f32 0.0, %v1953
        %1955 = vmatprep.mubr.bf16.mxu0 0
        %1956 = vmatmul.mubr.bf16.gmra.mrb[0].mxu0 %v1810
        %v1957 = vpop.f32.mrb[0].mxu0
        %v1958 = vadd.f32 0.0, %v1957
        %v1959 = vpop.f32.mrb[0].mxu0
        %v1960 = vadd.f32 0.0, %v1959
        %v1961 = vpop.f32.mrb[0].mxu0
        %v1962 = vadd.f32 0.0, %v1961
        %v1963 = vpop.f32.mrb[0].mxu0
        %v1964 = vadd.f32 0.0, %v1963
        %1965 = vmatprep.mubr.bf16.mxu0 0
        %1966 = vmatmul.mubr.bf16.gmra.mrb[0].mxu0 %v1813
        %v1967 = vpop.f32.mrb[0].mxu0
        %v1968 = vadd.f32 0.0, %v1967
        %v1969 = vpop.f32.mrb[0].mxu0
        %v1970 = vadd.f32 0.0, %v1969
        %v1971 = vpop.f32.mrb[0].mxu0
        %v1972 = vadd.f32 0.0, %v1971
        %v1973 = vpop.f32.mrb[0].mxu0
        %v1974 = vadd.f32 0.0, %v1973
        %1975 = vdwg.mxu0
        %v1976 = vmax.f32 %v1898, %v1900
        %1977 = vmax.xlane.f32.xlu0 %v1976
        %v1978 = vpop.xlane.xlu0 %1977
        %v1979 = vmax.f32 %v1902, %v1904
        %1980 = vmax.xlane.f32.xlu0 %v1979
        %v1981 = vpop.xlane.xlu0 %1980
        %v1982 = vmax.f32 %v1908, %v1910
        %1983 = vmax.xlane.f32.xlu0 %v1982
        %v1984 = vpop.xlane.xlu0 %1983
        %v1985 = vmax.f32 %v1912, %v1914
        %1986 = vmax.xlane.f32.xlu0 %v1985
        %v1987 = vpop.xlane.xlu0 %1986
        %v1988 = vmax.f32 %v1918, %v1920
        %1989 = vmax.xlane.f32.xlu0 %v1988
        %v1990 = vpop.xlane.xlu0 %1989
        %v1991 = vmax.f32 %v1922, %v1924
        %1992 = vmax.xlane.f32.xlu0 %v1991
        %v1993 = vpop.xlane.xlu0 %1992
        %v1994 = vmax.f32 %v1928, %v1930
        %1995 = vmax.xlane.f32.xlu0 %v1994
        %v1996 = vpop.xlane.xlu0 %1995
        %v1997 = vmax.f32 %v1932, %v1934
        %1998 = vmax.xlane.f32.xlu0 %v1997
        %v1999 = vpop.xlane.xlu0 %1998
        %v2000 = vmax.f32 %v1938, %v1940
        %2001 = vmax.xlane.f32.xlu0 %v2000
        %v2002 = vpop.xlane.xlu0 %2001
        %v2003 = vmax.f32 %v1942, %v1944
        %2004 = vmax.xlane.f32.xlu0 %v2003
        %v2005 = vpop.xlane.xlu0 %2004
        %v2006 = vmax.f32 %v1948, %v1950
        %2007 = vmax.xlane.f32.xlu0 %v2006
        %v2008 = vpop.xlane.xlu0 %2007
        %v2009 = vmax.f32 %v1952, %v1954
        %2010 = vmax.xlane.f32.xlu0 %v2009
        %v2011 = vpop.xlane.xlu0 %2010
        %v2012 = vmax.f32 %v1958, %v1960
        %2013 = vmax.xlane.f32.xlu0 %v2012
        %v2014 = vpop.xlane.xlu0 %2013
        %v2015 = vmax.f32 %v1962, %v1964
        %2016 = vmax.xlane.f32.xlu0 %v2015
        %v2017 = vpop.xlane.xlu0 %2016
        %v2018 = vmax.f32 %v1968, %v1970
        %2019 = vmax.xlane.f32.xlu0 %v2018
        %v2020 = vpop.xlane.xlu0 %2019
        %v2021 = vmax.f32 %v1972, %v1974
        %2022 = vmax.xlane.f32.xlu0 %v2021
        %v2023 = vpop.xlane.xlu0 %2022
        %v2024 = vsub.f32 %v1898, %v1978
        %v2025 = vsub.f32 %v1900, %v1978
        %v2026 = vsub.f32 %v1902, %v1981
        %v2027 = vsub.f32 %v1904, %v1981
        %v2028 = vsub.f32 %v1908, %v1984
        %v2029 = vsub.f32 %v1910, %v1984
        %v2030 = vsub.f32 %v1912, %v1987
        %v2031 = vsub.f32 %v1914, %v1987
        %v2032 = vsub.f32 %v1918, %v1990
        %v2033 = vsub.f32 %v1920, %v1990
        %v2034 = vsub.f32 %v1922, %v1993
        %v2035 = vsub.f32 %v1924, %v1993
        %v2036 = vsub.f32 %v1928, %v1996
        %v2037 = vsub.f32 %v1930, %v1996
        %v2038 = vsub.f32 %v1932, %v1999
        %v2039 = vsub.f32 %v1934, %v1999
        %v2040 = vsub.f32 %v1938, %v2002
        %v2041 = vsub.f32 %v1940, %v2002
        %v2042 = vsub.f32 %v1942, %v2005
        %v2043 = vsub.f32 %v1944, %v2005
        %v2044 = vsub.f32 %v1948, %v2008
        %v2045 = vsub.f32 %v1950, %v2008
        %v2046 = vsub.f32 %v1952, %v2011
        %v2047 = vsub.f32 %v1954, %v2011
        %v2048 = vsub.f32 %v1958, %v2014
        %v2049 = vsub.f32 %v1960, %v2014
        %v2050 = vsub.f32 %v1962, %v2017
        %v2051 = vsub.f32 %v1964, %v2017
        %v2052 = vsub.f32 %v1968, %v2020
        %v2053 = vsub.f32 %v1970, %v2020
        %v2054 = vsub.f32 %v1972, %v2023
        %v2055 = vsub.f32 %v1974, %v2023
        %v2056 = vmul.f32 %v2024, 1.442695
        %v2057 = vpow.pop %v2056
        %v2058 = vmul.f32 %v2025, 1.442695
        %v2059 = vpow.pop %v2058
        %v2060 = vmul.f32 %v2026, 1.442695
        %v2061 = vpow.pop %v2060
        %v2062 = vmul.f32 %v2027, 1.442695
        %v2063 = vpow.pop %v2062
        %v2064 = vmul.f32 %v2028, 1.442695
        %v2065 = vpow.pop %v2064
        %v2066 = vmul.f32 %v2029, 1.442695
        %v2067 = vpow.pop %v2066
        %v2068 = vmul.f32 %v2030, 1.442695
        %v2069 = vpow.pop %v2068
        %v2070 = vmul.f32 %v2031, 1.442695
        %v2071 = vpow.pop %v2070
        %v2072 = vmul.f32 %v2032, 1.442695
        %v2073 = vpow.pop %v2072
        %v2074 = vmul.f32 %v2033, 1.442695
        %v2075 = vpow.pop %v2074
        %v2076 = vmul.f32 %v2034, 1.442695
        %v2077 = vpow.pop %v2076
        %v2078 = vmul.f32 %v2035, 1.442695
        %v2079 = vpow.pop %v2078
        %v2080 = vmul.f32 %v2036, 1.442695
        %v2081 = vpow.pop %v2080
        %v2082 = vmul.f32 %v2037, 1.442695
        %v2083 = vpow.pop %v2082
        %v2084 = vmul.f32 %v2038, 1.442695
        %v2085 = vpow.pop %v2084
        %v2086 = vmul.f32 %v2039, 1.442695
        %v2087 = vpow.pop %v2086
        %v2088 = vmul.f32 %v2040, 1.442695
        %v2089 = vpow.pop %v2088
        %v2090 = vmul.f32 %v2041, 1.442695
        %v2091 = vpow.pop %v2090
        %v2092 = vmul.f32 %v2042, 1.442695
        %v2093 = vpow.pop %v2092
        %v2094 = vmul.f32 %v2043, 1.442695
        %v2095 = vpow.pop %v2094
        %v2096 = vmul.f32 %v2044, 1.442695
        %v2097 = vpow.pop %v2096
        %v2098 = vmul.f32 %v2045, 1.442695
        %v2099 = vpow.pop %v2098
        %v2100 = vmul.f32 %v2046, 1.442695
        %v2101 = vpow.pop %v2100
        %v2102 = vmul.f32 %v2047, 1.442695
        %v2103 = vpow.pop %v2102
        %v2104 = vmul.f32 %v2048, 1.442695
        %v2105 = vpow.pop %v2104
        %v2106 = vmul.f32 %v2049, 1.442695
        %v2107 = vpow.pop %v2106
        %v2108 = vmul.f32 %v2050, 1.442695
        %v2109 = vpow.pop %v2108
        %v2110 = vmul.f32 %v2051, 1.442695
        %v2111 = vpow.pop %v2110
        %v2112 = vmul.f32 %v2052, 1.442695
        %v2113 = vpow.pop %v2112
        %v2114 = vmul.f32 %v2053, 1.442695
        %v2115 = vpow.pop %v2114
        %v2116 = vmul.f32 %v2054, 1.442695
        %v2117 = vpow.pop %v2116
        %v2118 = vmul.f32 %v2055, 1.442695
        %v2119 = vpow.pop %v2118
        %v2120 = vadd.f32 %v2057, %v2059
        %2121 = vadd.xlane.f32.xlu0 %v2120
        %v2122 = vpop.xlane.xlu0 %2121
        %v2123 = vadd.f32 %v2061, %v2063
        %2124 = vadd.xlane.f32.xlu0 %v2123
        %v2125 = vpop.xlane.xlu0 %2124
        %v2126 = vadd.f32 %v2065, %v2067
        %2127 = vadd.xlane.f32.xlu0 %v2126
        %v2128 = vpop.xlane.xlu0 %2127
        %v2129 = vadd.f32 %v2069, %v2071
        %2130 = vadd.xlane.f32.xlu0 %v2129
        %v2131 = vpop.xlane.xlu0 %2130
        %v2132 = vadd.f32 %v2073, %v2075
        %2133 = vadd.xlane.f32.xlu0 %v2132
        %v2134 = vpop.xlane.xlu0 %2133
        %v2135 = vadd.f32 %v2077, %v2079
        %2136 = vadd.xlane.f32.xlu0 %v2135
        %v2137 = vpop.xlane.xlu0 %2136
        %v2138 = vadd.f32 %v2081, %v2083
        %2139 = vadd.xlane.f32.xlu0 %v2138
        %v2140 = vpop.xlane.xlu0 %2139
        %v2141 = vadd.f32 %v2085, %v2087
        %2142 = vadd.xlane.f32.xlu0 %v2141
        %v2143 = vpop.xlane.xlu0 %2142
        %v2144 = vadd.f32 %v2089, %v2091
        %2145 = vadd.xlane.f32.xlu0 %v2144
        %v2146 = vpop.xlane.xlu0 %2145
        %v2147 = vadd.f32 %v2093, %v2095
        %2148 = vadd.xlane.f32.xlu0 %v2147
        %v2149 = vpop.xlane.xlu0 %2148
        %v2150 = vadd.f32 %v2097, %v2099
        %2151 = vadd.xlane.f32.xlu0 %v2150
        %v2152 = vpop.xlane.xlu0 %2151
        %v2153 = vadd.f32 %v2101, %v2103
        %2154 = vadd.xlane.f32.xlu0 %v2153
        %v2155 = vpop.xlane.xlu0 %2154
        %v2156 = vadd.f32 %v2105, %v2107
        %2157 = vadd.xlane.f32.xlu0 %v2156
        %v2158 = vpop.xlane.xlu0 %2157
        %v2159 = vadd.f32 %v2109, %v2111
        %2160 = vadd.xlane.f32.xlu0 %v2159
        %v2161 = vpop.xlane.xlu0 %2160
        %v2162 = vadd.f32 %v2113, %v2115
        %2163 = vadd.xlane.f32.xlu0 %v2162
        %v2164 = vpop.xlane.xlu0 %2163
        %v2165 = vadd.f32 %v2117, %v2119
        %2166 = vadd.xlane.f32.xlu0 %v2165
        %v2167 = vpop.xlane.xlu0 %2166
        %v2168 = vrcp.pop %v2122
        %v2169 = vrcp.pop %v2125
        %v2170 = vrcp.pop %v2128
        %v2171 = vrcp.pop %v2131
        %v2172 = vrcp.pop %v2134
        %v2173 = vrcp.pop %v2137
        %v2174 = vrcp.pop %v2140
        %v2175 = vrcp.pop %v2143
        %v2176 = vrcp.pop %v2146
        %v2177 = vrcp.pop %v2149
        %v2178 = vrcp.pop %v2152
        %v2179 = vrcp.pop %v2155
        %v2180 = vrcp.pop %v2158
        %v2181 = vrcp.pop %v2161
        %v2182 = vrcp.pop %v2164
        %v2183 = vrcp.pop %v2167
        %v2184 = vmul.f32 %v2057, %v2168
        %v2185 = vmul.f32 %v2059, %v2168
        %v2186 = vmul.f32 %v2061, %v2169
        %v2187 = vmul.f32 %v2063, %v2169
        %v2188 = vmul.f32 %v2065, %v2170
        %v2189 = vmul.f32 %v2067, %v2170
        %v2190 = vmul.f32 %v2069, %v2171
        %v2191 = vmul.f32 %v2071, %v2171
        %v2192 = vmul.f32 %v2073, %v2172
        %v2193 = vmul.f32 %v2075, %v2172
        %v2194 = vmul.f32 %v2077, %v2173
        %v2195 = vmul.f32 %v2079, %v2173
        %v2196 = vmul.f32 %v2081, %v2174
        %v2197 = vmul.f32 %v2083, %v2174
        %v2198 = vmul.f32 %v2085, %v2175
        %v2199 = vmul.f32 %v2087, %v2175
        %v2200 = vmul.f32 %v2089, %v2176
        %v2201 = vmul.f32 %v2091, %v2176
        %v2202 = vmul.f32 %v2093, %v2177
        %v2203 = vmul.f32 %v2095, %v2177
        %v2204 = vmul.f32 %v2097, %v2178
        %v2205 = vmul.f32 %v2099, %v2178
        %v2206 = vmul.f32 %v2101, %v2179
        %v2207 = vmul.f32 %v2103, %v2179
        %v2208 = vmul.f32 %v2105, %v2180
        %v2209 = vmul.f32 %v2107, %v2180
        %v2210 = vmul.f32 %v2109, %v2181
        %v2211 = vmul.f32 %v2111, %v2181
        %v2212 = vmul.f32 %v2113, %v2182
        %v2213 = vmul.f32 %v2115, %v2182
        %v2214 = vmul.f32 %v2117, %v2183
        %v2215 = vmul.f32 %v2119, %v2183
        %v2216 = vpack.c.bf16 %v2186, %v2184
        %v2217 = vpack.c.bf16 %v2187, %v2185
        %v2218 = vpack.c.bf16 %v2190, %v2188
        %v2219 = vpack.c.bf16 %v2191, %v2189
        %v2220 = vpack.c.bf16 %v2194, %v2192
        %v2221 = vpack.c.bf16 %v2195, %v2193
        %v2222 = vpack.c.bf16 %v2198, %v2196
        %v2223 = vpack.c.bf16 %v2199, %v2197
        %v2224 = vpack.c.bf16 %v2202, %v2200
        %v2225 = vpack.c.bf16 %v2203, %v2201
        %v2226 = vpack.c.bf16 %v2206, %v2204
        %v2227 = vpack.c.bf16 %v2207, %v2205
        %v2228 = vpack.c.bf16 %v2210, %v2208
        %v2229 = vpack.c.bf16 %v2211, %v2209
        %v2230 = vpack.c.bf16 %v2214, %v2212
        %v2231 = vpack.c.bf16 %v2215, %v2213
        %v2232 = vld [vmem:[#allocation3] sm:$0xff]
        %v2233 = vld [vmem:[#allocation3 + $0x8] sm:$0xff]
        %v2234 = vld [vmem:[#allocation3 + $0x10] sm:$0xff]
        %v2235 = vld [vmem:[#allocation3 + $0x18] sm:$0xff]
        %v2236 = vld [vmem:[#allocation3 + $0x20] sm:$0xff]
        %v2237 = vld [vmem:[#allocation3 + $0x28] sm:$0xff]
        %v2238 = vld [vmem:[#allocation3 + $0x30] sm:$0xff]
        %v2239 = vld [vmem:[#allocation3 + $0x38] sm:$0xff]
        %v2240 = vld [vmem:[#allocation3 + $0x40] sm:$0xff]
        %v2241 = vld [vmem:[#allocation3 + $0x48] sm:$0xff]
        %v2242 = vld [vmem:[#allocation3 + $0x50] sm:$0xff]
        %v2243 = vld [vmem:[#allocation3 + $0x58] sm:$0xff]
        %v2244 = vld [vmem:[#allocation3 + $0x60] sm:$0xff]
        %v2245 = vld [vmem:[#allocation3 + $0x68] sm:$0xff]
        %v2246 = vld [vmem:[#allocation3 + $0x70] sm:$0xff]
        %v2247 = vld [vmem:[#allocation3 + $0x78] sm:$0xff]
        %2248 = vmatprep.subr.bf16.mxu0 0
        %2249 = vmatpush1.bf16.msra.mxu0 %v2232
        %2250 = vmatprep.subr.bf16.mxu0 0
        %2251 = vmatpush1.bf16.msra.mxu0 %v2233
        %2252 = vmatprep.subr.bf16.mxu0 0
        %2253 = vmatpush1.bf16.msra.mxu0 %v2234
        %2254 = vmatprep.subr.bf16.mxu0 0
        %2255 = vmatpush1.bf16.msra.mxu0 %v2235
        %2256 = vmatprep.subr.bf16.mxu0 0
        %2257 = vmatpush1.bf16.msra.mxu0 %v2236
        %2258 = vmatprep.subr.bf16.mxu0 0
        %2259 = vmatpush1.bf16.msra.mxu0 %v2237
        %2260 = vmatprep.subr.bf16.mxu0 0
        %2261 = vmatpush1.bf16.msra.mxu0 %v2238
        %2262 = vmatprep.subr.bf16.mxu0 0
        %2263 = vmatpush1.bf16.msra.mxu0 %v2239
        %2264 = vmatprep.subr.bf16.mxu0 0
        %2265 = vmatpush1.bf16.msra.mxu0 %v2240
        %2266 = vmatprep.subr.bf16.mxu0 0
        %2267 = vmatpush1.bf16.msra.mxu0 %v2241
        %2268 = vmatprep.subr.bf16.mxu0 0
        %2269 = vmatpush1.bf16.msra.mxu0 %v2242
        %2270 = vmatprep.subr.bf16.mxu0 0
        %2271 = vmatpush1.bf16.msra.mxu0 %v2243
        %2272 = vmatprep.subr.bf16.mxu0 0
        %2273 = vmatpush1.bf16.msra.mxu0 %v2244
        %2274 = vmatprep.subr.bf16.mxu0 0
        %2275 = vmatpush1.bf16.msra.mxu0 %v2245
        %2276 = vmatprep.subr.bf16.mxu0 0
        %2277 = vmatpush1.bf16.msra.mxu0 %v2246
        %2278 = vmatprep.subr.bf16.mxu0 0
        %2279 = vmatpush1.bf16.msra.mxu0 %v2247
        %2280 = vmatprep.mubr.bf16.mxu0 %v2217
        %2281 = vmatmul.mubr.bf16.gmra.mrb[0].mxu0 %v2216
        %v2282 = vpop.f32.mrb[0].mxu0
        %v2283 = vadd.f32 0.0, %v2282
        %v2284 = vpop.f32.mrb[0].mxu0
        %v2285 = vpop.f32.mrb[0].mxu0
        %v2286 = vadd.f32 0.0, %v2285
        %v2287 = vpop.f32.mrb[0].mxu0
        %2288 = vmatprep.mubr.bf16.mxu0 %v2219
        %2289 = vmatmul.mubr.bf16.gmra.mrb[0].mxu0 %v2218
        %v2290 = vpop.f32.mrb[0].mxu0
        %v2291 = vadd.f32 0.0, %v2290
        %v2292 = vpop.f32.mrb[0].mxu0
        %v2293 = vpop.f32.mrb[0].mxu0
        %v2294 = vadd.f32 0.0, %v2293
        %v2295 = vpop.f32.mrb[0].mxu0
        %2296 = vmatprep.mubr.bf16.mxu0 %v2221
        %2297 = vmatmul.mubr.bf16.gmra.mrb[0].mxu0 %v2220
        %v2298 = vpop.f32.mrb[0].mxu0
        %v2299 = vadd.f32 0.0, %v2298
        %v2300 = vpop.f32.mrb[0].mxu0
        %v2301 = vpop.f32.mrb[0].mxu0
        %v2302 = vadd.f32 0.0, %v2301
        %v2303 = vpop.f32.mrb[0].mxu0
        %2304 = vmatprep.mubr.bf16.mxu0 %v2223
        %2305 = vmatmul.mubr.bf16.gmra.mrb[0].mxu0 %v2222
        %v2306 = vpop.f32.mrb[0].mxu0
        %v2307 = vadd.f32 0.0, %v2306
        %v2308 = vpop.f32.mrb[0].mxu0
        %v2309 = vpop.f32.mrb[0].mxu0
        %v2310 = vadd.f32 0.0, %v2309
        %v2311 = vpop.f32.mrb[0].mxu0
        %2312 = vmatprep.mubr.bf16.mxu0 %v2225
        %2313 = vmatmul.mubr.bf16.gmra.mrb[0].mxu0 %v2224
        %v2314 = vpop.f32.mrb[0].mxu0
        %v2315 = vadd.f32 0.0, %v2314
        %v2316 = vpop.f32.mrb[0].mxu0
        %v2317 = vpop.f32.mrb[0].mxu0
        %v2318 = vadd.f32 0.0, %v2317
        %v2319 = vpop.f32.mrb[0].mxu0
        %2320 = vmatprep.mubr.bf16.mxu0 %v2227
        %2321 = vmatmul.mubr.bf16.gmra.mrb[0].mxu0 %v2226
        %v2322 = vpop.f32.mrb[0].mxu0
        %v2323 = vadd.f32 0.0, %v2322
        %v2324 = vpop.f32.mrb[0].mxu0
        %v2325 = vpop.f32.mrb[0].mxu0
        %v2326 = vadd.f32 0.0, %v2325
        %v2327 = vpop.f32.mrb[0].mxu0
        %2328 = vmatprep.mubr.bf16.mxu0 %v2229
        %2329 = vmatmul.mubr.bf16.gmra.mrb[0].mxu0 %v2228
        %v2330 = vpop.f32.mrb[0].mxu0
        %v2331 = vadd.f32 0.0, %v2330
        %v2332 = vpop.f32.mrb[0].mxu0
        %v2333 = vpop.f32.mrb[0].mxu0
        %v2334 = vadd.f32 0.0, %v2333
        %v2335 = vpop.f32.mrb[0].mxu0
        %2336 = vmatprep.mubr.bf16.mxu0 %v2231
        %2337 = vmatmul.mubr.bf16.gmra.mrb[0].mxu0 %v2230
        %v2338 = vpop.f32.mrb[0].mxu0
        %v2339 = vadd.f32 0.0, %v2338
        %v2340 = vpop.f32.mrb[0].mxu0
        %v2341 = vpop.f32.mrb[0].mxu0
        %v2342 = vadd.f32 0.0, %v2341
        %v2343 = vpop.f32.mrb[0].mxu0
        %2344 = vdwg.mxu0
        %2353 = vrot.lane.b32.xlu0 %v1766, 96
        %v2354 = vpop.permute.xlu0 %2353
        %2355 = vrot.lane.b32.xlu0 %v1767, 96
        %v2356 = vpop.permute.xlu0 %2355
        %2357 = vrot.lane.b32.xlu0 %v1768, 96
        %v2358 = vpop.permute.xlu0 %2357
        %2359 = vrot.lane.b32.xlu0 %v1769, 96
        %v2360 = vpop.permute.xlu0 %2359
        %2361 = vrot.lane.b32.xlu0 %v1770, 96
        %v2362 = vpop.permute.xlu0 %2361
        %2363 = vrot.lane.b32.xlu0 %v1771, 96
        %v2364 = vpop.permute.xlu0 %2363
        %2365 = vrot.lane.b32.xlu0 %v1772, 96
        %v2366 = vpop.permute.xlu0 %2365
        %2367 = vrot.lane.b32.xlu0 %v1773, 96
        %v2368 = vpop.permute.xlu0 %2367
        %2385 = vrot.lane.b32.xlu0 %v1774, 96
        %v2386 = vpop.permute.xlu0 %2385
        %2387 = vrot.lane.b32.xlu0 %v1775, 96
        %v2388 = vpop.permute.xlu0 %2387
        %2389 = vrot.lane.b32.xlu0 %v1776, 96
        %v2390 = vpop.permute.xlu0 %2389
        %2391 = vrot.lane.b32.xlu0 %v1777, 96
        %v2392 = vpop.permute.xlu0 %2391
        %2393 = vrot.lane.b32.xlu0 %v1778, 96
        %v2394 = vpop.permute.xlu0 %2393
        %2395 = vrot.lane.b32.xlu0 %v1779, 96
        %v2396 = vpop.permute.xlu0 %2395
        %2397 = vrot.lane.b32.xlu0 %v1780, 96
        %v2398 = vpop.permute.xlu0 %2397
        %2399 = vrot.lane.b32.xlu0 %v1781, 96
        %v2400 = vpop.permute.xlu0 %2399
        %2401 = vrot.lane.b32.xlu0 %v1782, 96
        %v2402 = vpop.permute.xlu0 %2401
        %2403 = vrot.lane.b32.xlu0 %v1783, 96
        %v2404 = vpop.permute.xlu0 %2403
        %2405 = vrot.lane.b32.xlu0 %v1784, 96
        %v2406 = vpop.permute.xlu0 %2405
        %2407 = vrot.lane.b32.xlu0 %v1785, 96
        %v2408 = vpop.permute.xlu0 %2407
        %2409 = vrot.lane.b32.xlu0 %v1786, 96
        %v2410 = vpop.permute.xlu0 %2409
        %2411 = vrot.lane.b32.xlu0 %v1787, 96
        %v2412 = vpop.permute.xlu0 %2411
        %2413 = vrot.lane.b32.xlu0 %v1788, 96
        %v2414 = vpop.permute.xlu0 %2413
        %2415 = vrot.lane.b32.xlu0 %v1789, 96
        %v2416 = vpop.permute.xlu0 %2415
        %v2418 = vsel %vm1790, %v2354, 0
        %v2421 = vsel %vm1790, %v2356, 0
        %v2424 = vsel %vm1790, %v2358, 0
        %v2427 = vsel %vm1790, %v2360, 0
        %v2430 = vsel %vm1790, %v2362, 0
        %v2433 = vsel %vm1790, %v2364, 0
        %v2436 = vsel %vm1790, %v2366, 0
        %v2439 = vsel %vm1790, %v2368, 0
        %v2442 = vsel %vm1790, %v2386, 0
        %v2445 = vsel %vm1790, %v2388, 0
        %v2448 = vsel %vm1790, %v2390, 0
        %v2451 = vsel %vm1790, %v2392, 0
        %v2454 = vsel %vm1790, %v2394, 0
        %v2457 = vsel %vm1790, %v2396, 0
        %v2460 = vsel %vm1790, %v2398, 0
        %v2463 = vsel %vm1790, %v2400, 0
        %v2466 = vsel %vm1790, %v2402, 0
        %v2469 = vsel %vm1790, %v2404, 0
        %v2472 = vsel %vm1790, %v2406, 0
        %v2475 = vsel %vm1790, %v2408, 0
        %v2478 = vsel %vm1790, %v2410, 0
        %v2481 = vsel %vm1790, %v2412, 0
        %v2484 = vsel %vm1790, %v2414, 0
        %v2487 = vsel %vm1790, %v2416, 0
        %2489 = vmatprep.subr.bf16.mxu0 0
        %2490 = vmatpush1.bf16.xpose.msra.mxu0 %v2442
        %2491 = vmatprep.subr.bf16.mxu0 0
        %2492 = vmatpush1.bf16.xpose.msra.mxu0 %v2445
        %2493 = vmatprep.subr.bf16.mxu0 0
        %2494 = vmatpush1.bf16.xpose.msra.mxu0 %v2448
        %2495 = vmatprep.subr.bf16.mxu0 0
        %2496 = vmatpush1.bf16.xpose.msra.mxu0 %v2451
        %2497 = vmatprep.subr.bf16.mxu0 0
        %2498 = vmatpush1.bf16.xpose.msra.mxu0 %v2454
        %2499 = vmatprep.subr.bf16.mxu0 0
        %2500 = vmatpush1.bf16.xpose.msra.mxu0 %v2457
        %2501 = vmatprep.subr.bf16.mxu0 0
        %2502 = vmatpush1.bf16.xpose.msra.mxu0 %v2460
        %2503 = vmatprep.subr.bf16.mxu0 0
        %2504 = vmatpush1.bf16.xpose.msra.mxu0 %v2463
        %2505 = vmatprep.subr.bf16.mxu0 0
        %2506 = vmatpush1.bf16.xpose.msra.mxu0 %v2466
        %2507 = vmatprep.subr.bf16.mxu0 0
        %2508 = vmatpush1.bf16.xpose.msra.mxu0 %v2469
        %2509 = vmatprep.subr.bf16.mxu0 0
        %2510 = vmatpush1.bf16.xpose.msra.mxu0 %v2472
        %2511 = vmatprep.subr.bf16.mxu0 0
        %2512 = vmatpush1.bf16.xpose.msra.mxu0 %v2475
        %2513 = vmatprep.subr.bf16.mxu0 0
        %2514 = vmatpush1.bf16.xpose.msra.mxu0 %v2478
        %2515 = vmatprep.subr.bf16.mxu0 0
        %2516 = vmatpush1.bf16.xpose.msra.mxu0 %v2481
        %2517 = vmatprep.subr.bf16.mxu0 0
        %2518 = vmatpush1.bf16.xpose.msra.mxu0 %v2484
        %2519 = vmatprep.subr.bf16.mxu0 0
        %2520 = vmatpush1.bf16.xpose.msra.mxu0 %v2487
        %2521 = vmatprep.mubr.bf16.mxu0 0
        %2522 = vmatmul.mubr.bf16.gmra.mrb[0].mxu0 %v2418
        %v2523 = vpop.f32.mrb[0].mxu0
        %v2524 = vadd.f32 0.0, %v2523
        %v2525 = vpop.f32.mrb[0].mxu0
        %v2526 = vadd.f32 0.0, %v2525
        %v2527 = vpop.f32.mrb[0].mxu0
        %v2528 = vadd.f32 0.0, %v2527
        %v2529 = vpop.f32.mrb[0].mxu0
        %v2530 = vadd.f32 0.0, %v2529
        %2531 = vmatprep.mubr.bf16.mxu0 0
        %2532 = vmatmul.mubr.bf16.gmra.mrb[0].mxu0 %v2421
        %v2533 = vpop.f32.mrb[0].mxu0
        %v2534 = vadd.f32 0.0, %v2533
        %v2535 = vpop.f32.mrb[0].mxu0
        %v2536 = vadd.f32 0.0, %v2535
        %v2537 = vpop.f32.mrb[0].mxu0
        %v2538 = vadd.f32 0.0, %v2537
        %v2539 = vpop.f32.mrb[0].mxu0
        %v2540 = vadd.f32 0.0, %v2539
        %2541 = vmatprep.mubr.bf16.mxu0 0
        %2542 = vmatmul.mubr.bf16.gmra.mrb[0].mxu0 %v2424
        %v2543 = vpop.f32.mrb[0].mxu0
        %v2544 = vadd.f32 0.0, %v2543
        %v2545 = vpop.f32.mrb[0].mxu0
        %v2546 = vadd.f32 0.0, %v2545
        %v2547 = vpop.f32.mrb[0].mxu0
        %v2548 = vadd.f32 0.0, %v2547
        %v2549 = vpop.f32.mrb[0].mxu0
        %v2550 = vadd.f32 0.0, %v2549
        %2551 = vmatprep.mubr.bf16.mxu0 0
        %2552 = vmatmul.mubr.bf16.gmra.mrb[0].mxu0 %v2427
        %v2553 = vpop.f32.mrb[0].mxu0
        %v2554 = vadd.f32 0.0, %v2553
        %v2555 = vpop.f32.mrb[0].mxu0
        %v2556 = vadd.f32 0.0, %v2555
        %v2557 = vpop.f32.mrb[0].mxu0
        %v2558 = vadd.f32 0.0, %v2557
        %v2559 = vpop.f32.mrb[0].mxu0
        %v2560 = vadd.f32 0.0, %v2559
        %2561 = vmatprep.mubr.bf16.mxu0 0
        %2562 = vmatmul.mubr.bf16.gmra.mrb[0].mxu0 %v2430
        %v2563 = vpop.f32.mrb[0].mxu0
        %v2564 = vadd.f32 0.0, %v2563
        %v2565 = vpop.f32.mrb[0].mxu0
        %v2566 = vadd.f32 0.0, %v2565
        %v2567 = vpop.f32.mrb[0].mxu0
        %v2568 = vadd.f32 0.0, %v2567
        %v2569 = vpop.f32.mrb[0].mxu0
        %v2570 = vadd.f32 0.0, %v2569
        %2571 = vmatprep.mubr.bf16.mxu0 0
        %2572 = vmatmul.mubr.bf16.gmra.mrb[0].mxu0 %v2433
        %v2573 = vpop.f32.mrb[0].mxu0
        %v2574 = vadd.f32 0.0, %v2573
        %v2575 = vpop.f32.mrb[0].mxu0
        %v2576 = vadd.f32 0.0, %v2575
        %v2577 = vpop.f32.mrb[0].mxu0
        %v2578 = vadd.f32 0.0, %v2577
        %v2579 = vpop.f32.mrb[0].mxu0
        %v2580 = vadd.f32 0.0, %v2579
        %2581 = vmatprep.mubr.bf16.mxu0 0
        %2582 = vmatmul.mubr.bf16.gmra.mrb[0].mxu0 %v2436
        %v2583 = vpop.f32.mrb[0].mxu0
        %v2584 = vadd.f32 0.0, %v2583
        %v2585 = vpop.f32.mrb[0].mxu0
        %v2586 = vadd.f32 0.0, %v2585
        %v2587 = vpop.f32.mrb[0].mxu0
        %v2588 = vadd.f32 0.0, %v2587
        %v2589 = vpop.f32.mrb[0].mxu0
        %v2590 = vadd.f32 0.0, %v2589
        %2591 = vmatprep.mubr.bf16.mxu0 0
        %2592 = vmatmul.mubr.bf16.gmra.mrb[0].mxu0 %v2439
        %v2593 = vpop.f32.mrb[0].mxu0
        %v2594 = vadd.f32 0.0, %v2593
        %v2595 = vpop.f32.mrb[0].mxu0
        %v2596 = vadd.f32 0.0, %v2595
        %v2597 = vpop.f32.mrb[0].mxu0
        %v2598 = vadd.f32 0.0, %v2597
        %v2599 = vpop.f32.mrb[0].mxu0
        %v2600 = vadd.f32 0.0, %v2599
        %2601 = vdwg.mxu0
        %v2602 = vmax.f32 %v2524, %v2526
        %2603 = vmax.xlane.f32.xlu0 %v2602
        %v2604 = vpop.xlane.xlu0 %2603
        %v2605 = vmax.f32 %v2528, %v2530
        %2606 = vmax.xlane.f32.xlu0 %v2605
        %v2607 = vpop.xlane.xlu0 %2606
        %v2608 = vmax.f32 %v2534, %v2536
        %2609 = vmax.xlane.f32.xlu0 %v2608
        %v2610 = vpop.xlane.xlu0 %2609
        %v2611 = vmax.f32 %v2538, %v2540
        %2612 = vmax.xlane.f32.xlu0 %v2611
        %v2613 = vpop.xlane.xlu0 %2612
        %v2614 = vmax.f32 %v2544, %v2546
        %2615 = vmax.xlane.f32.xlu0 %v2614
        %v2616 = vpop.xlane.xlu0 %2615
        %v2617 = vmax.f32 %v2548, %v2550
        %2618 = vmax.xlane.f32.xlu0 %v2617
        %v2619 = vpop.xlane.xlu0 %2618
        %v2620 = vmax.f32 %v2554, %v2556
        %2621 = vmax.xlane.f32.xlu0 %v2620
        %v2622 = vpop.xlane.xlu0 %2621
        %v2623 = vmax.f32 %v2558, %v2560
        %2624 = vmax.xlane.f32.xlu0 %v2623
        %v2625 = vpop.xlane.xlu0 %2624
        %v2626 = vmax.f32 %v2564, %v2566
        %2627 = vmax.xlane.f32.xlu0 %v2626
        %v2628 = vpop.xlane.xlu0 %2627
        %v2629 = vmax.f32 %v2568, %v2570
        %2630 = vmax.xlane.f32.xlu0 %v2629
        %v2631 = vpop.xlane.xlu0 %2630
        %v2632 = vmax.f32 %v2574, %v2576
        %2633 = vmax.xlane.f32.xlu0 %v2632
        %v2634 = vpop.xlane.xlu0 %2633
        %v2635 = vmax.f32 %v2578, %v2580
        %2636 = vmax.xlane.f32.xlu0 %v2635
        %v2637 = vpop.xlane.xlu0 %2636
        %v2638 = vmax.f32 %v2584, %v2586
        %2639 = vmax.xlane.f32.xlu0 %v2638
        %v2640 = vpop.xlane.xlu0 %2639
        %v2641 = vmax.f32 %v2588, %v2590
        %2642 = vmax.xlane.f32.xlu0 %v2641
        %v2643 = vpop.xlane.xlu0 %2642
        %v2644 = vmax.f32 %v2594, %v2596
        %2645 = vmax.xlane.f32.xlu0 %v2644
        %v2646 = vpop.xlane.xlu0 %2645
        %v2647 = vmax.f32 %v2598, %v2600
        %2648 = vmax.xlane.f32.xlu0 %v2647
        %v2649 = vpop.xlane.xlu0 %2648
        %v2650 = vsub.f32 %v2524, %v2604
        %v2651 = vsub.f32 %v2526, %v2604
        %v2652 = vsub.f32 %v2528, %v2607
        %v2653 = vsub.f32 %v2530, %v2607
        %v2654 = vsub.f32 %v2534, %v2610
        %v2655 = vsub.f32 %v2536, %v2610
        %v2656 = vsub.f32 %v2538, %v2613
        %v2657 = vsub.f32 %v2540, %v2613
        %v2658 = vsub.f32 %v2544, %v2616
        %v2659 = vsub.f32 %v2546, %v2616
        %v2660 = vsub.f32 %v2548, %v2619
        %v2661 = vsub.f32 %v2550, %v2619
        %v2662 = vsub.f32 %v2554, %v2622
        %v2663 = vsub.f32 %v2556, %v2622
        %v2664 = vsub.f32 %v2558, %v2625
        %v2665 = vsub.f32 %v2560, %v2625
        %v2666 = vsub.f32 %v2564, %v2628
        %v2667 = vsub.f32 %v2566, %v2628
        %v2668 = vsub.f32 %v2568, %v2631
        %v2669 = vsub.f32 %v2570, %v2631
        %v2670 = vsub.f32 %v2574, %v2634
        %v2671 = vsub.f32 %v2576, %v2634
        %v2672 = vsub.f32 %v2578, %v2637
        %v2673 = vsub.f32 %v2580, %v2637
        %v2674 = vsub.f32 %v2584, %v2640
        %v2675 = vsub.f32 %v2586, %v2640
        %v2676 = vsub.f32 %v2588, %v2643
        %v2677 = vsub.f32 %v2590, %v2643
        %v2678 = vsub.f32 %v2594, %v2646
        %v2679 = vsub.f32 %v2596, %v2646
        %v2680 = vsub.f32 %v2598, %v2649
        %v2681 = vsub.f32 %v2600, %v2649
        %v2682 = vmul.f32 %v2650, 1.442695
        %v2683 = vpow.pop %v2682
        %v2684 = vmul.f32 %v2651, 1.442695
        %v2685 = vpow.pop %v2684
        %v2686 = vmul.f32 %v2652, 1.442695
        %v2687 = vpow.pop %v2686
        %v2688 = vmul.f32 %v2653, 1.442695
        %v2689 = vpow.pop %v2688
        %v2690 = vmul.f32 %v2654, 1.442695
        %v2691 = vpow.pop %v2690
        %v2692 = vmul.f32 %v2655, 1.442695
        %v2693 = vpow.pop %v2692
        %v2694 = vmul.f32 %v2656, 1.442695
        %v2695 = vpow.pop %v2694
        %v2696 = vmul.f32 %v2657, 1.442695
        %v2697 = vpow.pop %v2696
        %v2698 = vmul.f32 %v2658, 1.442695
        %v2699 = vpow.pop %v2698
        %v2700 = vmul.f32 %v2659, 1.442695
        %v2701 = vpow.pop %v2700
        %v2702 = vmul.f32 %v2660, 1.442695
        %v2703 = vpow.pop %v2702
        %v2704 = vmul.f32 %v2661, 1.442695
        %v2705 = vpow.pop %v2704
        %v2706 = vmul.f32 %v2662, 1.442695
        %v2707 = vpow.pop %v2706
        %v2708 = vmul.f32 %v2663, 1.442695
        %v2709 = vpow.pop %v2708
        %v2710 = vmul.f32 %v2664, 1.442695
        %v2711 = vpow.pop %v2710
        %v2712 = vmul.f32 %v2665, 1.442695
        %v2713 = vpow.pop %v2712
        %v2714 = vmul.f32 %v2666, 1.442695
        %v2715 = vpow.pop %v2714
        %v2716 = vmul.f32 %v2667, 1.442695
        %v2717 = vpow.pop %v2716
        %v2718 = vmul.f32 %v2668, 1.442695
        %v2719 = vpow.pop %v2718
        %v2720 = vmul.f32 %v2669, 1.442695
        %v2721 = vpow.pop %v2720
        %v2722 = vmul.f32 %v2670, 1.442695
        %v2723 = vpow.pop %v2722
        %v2724 = vmul.f32 %v2671, 1.442695
        %v2725 = vpow.pop %v2724
        %v2726 = vmul.f32 %v2672, 1.442695
        %v2727 = vpow.pop %v2726
        %v2728 = vmul.f32 %v2673, 1.442695
        %v2729 = vpow.pop %v2728
        %v2730 = vmul.f32 %v2674, 1.442695
        %v2731 = vpow.pop %v2730
        %v2732 = vmul.f32 %v2675, 1.442695
        %v2733 = vpow.pop %v2732
        %v2734 = vmul.f32 %v2676, 1.442695
        %v2735 = vpow.pop %v2734
        %v2736 = vmul.f32 %v2677, 1.442695
        %v2737 = vpow.pop %v2736
        %v2738 = vmul.f32 %v2678, 1.442695
        %v2739 = vpow.pop %v2738
        %v2740 = vmul.f32 %v2679, 1.442695
        %v2741 = vpow.pop %v2740
        %v2742 = vmul.f32 %v2680, 1.442695
        %v2743 = vpow.pop %v2742
        %v2744 = vmul.f32 %v2681, 1.442695
        %v2745 = vpow.pop %v2744
        %v2746 = vadd.f32 %v2683, %v2685
        %2747 = vadd.xlane.f32.xlu0 %v2746
        %v2748 = vpop.xlane.xlu0 %2747
        %v2749 = vadd.f32 %v2687, %v2689
        %2750 = vadd.xlane.f32.xlu0 %v2749
        %v2751 = vpop.xlane.xlu0 %2750
        %v2752 = vadd.f32 %v2691, %v2693
        %2753 = vadd.xlane.f32.xlu0 %v2752
        %v2754 = vpop.xlane.xlu0 %2753
        %v2755 = vadd.f32 %v2695, %v2697
        %2756 = vadd.xlane.f32.xlu0 %v2755
        %v2757 = vpop.xlane.xlu0 %2756
        %v2758 = vadd.f32 %v2699, %v2701
        %2759 = vadd.xlane.f32.xlu0 %v2758
        %v2760 = vpop.xlane.xlu0 %2759
        %v2761 = vadd.f32 %v2703, %v2705
        %2762 = vadd.xlane.f32.xlu0 %v2761
        %v2763 = vpop.xlane.xlu0 %2762
        %v2764 = vadd.f32 %v2707, %v2709
        %2765 = vadd.xlane.f32.xlu0 %v2764
        %v2766 = vpop.xlane.xlu0 %2765
        %v2767 = vadd.f32 %v2711, %v2713
        %2768 = vadd.xlane.f32.xlu0 %v2767
        %v2769 = vpop.xlane.xlu0 %2768
        %v2770 = vadd.f32 %v2715, %v2717
        %2771 = vadd.xlane.f32.xlu0 %v2770
        %v2772 = vpop.xlane.xlu0 %2771
        %v2773 = vadd.f32 %v2719, %v2721
        %2774 = vadd.xlane.f32.xlu0 %v2773
        %v2775 = vpop.xlane.xlu0 %2774
        %v2776 = vadd.f32 %v2723, %v2725
        %2777 = vadd.xlane.f32.xlu0 %v2776
        %v2778 = vpop.xlane.xlu0 %2777
        %v2779 = vadd.f32 %v2727, %v2729
        %2780 = vadd.xlane.f32.xlu0 %v2779
        %v2781 = vpop.xlane.xlu0 %2780
        %v2782 = vadd.f32 %v2731, %v2733
        %2783 = vadd.xlane.f32.xlu0 %v2782
        %v2784 = vpop.xlane.xlu0 %2783
        %v2785 = vadd.f32 %v2735, %v2737
        %2786 = vadd.xlane.f32.xlu0 %v2785
        %v2787 = vpop.xlane.xlu0 %2786
        %v2788 = vadd.f32 %v2739, %v2741
        %2789 = vadd.xlane.f32.xlu0 %v2788
        %v2790 = vpop.xlane.xlu0 %2789
        %v2791 = vadd.f32 %v2743, %v2745
        %2792 = vadd.xlane.f32.xlu0 %v2791
        %v2793 = vpop.xlane.xlu0 %2792
        %v2794 = vrcp.pop %v2748
        %v2795 = vrcp.pop %v2751
        %v2796 = vrcp.pop %v2754
        %v2797 = vrcp.pop %v2757
        %v2798 = vrcp.pop %v2760
        %v2799 = vrcp.pop %v2763
        %v2800 = vrcp.pop %v2766
        %v2801 = vrcp.pop %v2769
        %v2802 = vrcp.pop %v2772
        %v2803 = vrcp.pop %v2775
        %v2804 = vrcp.pop %v2778
        %v2805 = vrcp.pop %v2781
        %v2806 = vrcp.pop %v2784
        %v2807 = vrcp.pop %v2787
        %v2808 = vrcp.pop %v2790
        %v2809 = vrcp.pop %v2793
        %v2810 = vmul.f32 %v2683, %v2794
        %v2811 = vmul.f32 %v2685, %v2794
        %v2812 = vmul.f32 %v2687, %v2795
        %v2813 = vmul.f32 %v2689, %v2795
        %v2814 = vmul.f32 %v2691, %v2796
        %v2815 = vmul.f32 %v2693, %v2796
        %v2816 = vmul.f32 %v2695, %v2797
        %v2817 = vmul.f32 %v2697, %v2797
        %v2818 = vmul.f32 %v2699, %v2798
        %v2819 = vmul.f32 %v2701, %v2798
        %v2820 = vmul.f32 %v2703, %v2799
        %v2821 = vmul.f32 %v2705, %v2799
        %v2822 = vmul.f32 %v2707, %v2800
        %v2823 = vmul.f32 %v2709, %v2800
        %v2824 = vmul.f32 %v2711, %v2801
        %v2825 = vmul.f32 %v2713, %v2801
        %v2826 = vmul.f32 %v2715, %v2802
        %v2827 = vmul.f32 %v2717, %v2802
        %v2828 = vmul.f32 %v2719, %v2803
        %v2829 = vmul.f32 %v2721, %v2803
        %v2830 = vmul.f32 %v2723, %v2804
        %v2831 = vmul.f32 %v2725, %v2804
        %v2832 = vmul.f32 %v2727, %v2805
        %v2833 = vmul.f32 %v2729, %v2805
        %v2834 = vmul.f32 %v2731, %v2806
        %v2835 = vmul.f32 %v2733, %v2806
        %v2836 = vmul.f32 %v2735, %v2807
        %v2837 = vmul.f32 %v2737, %v2807
        %v2838 = vmul.f32 %v2739, %v2808
        %v2839 = vmul.f32 %v2741, %v2808
        %v2840 = vmul.f32 %v2743, %v2809
        %v2841 = vmul.f32 %v2745, %v2809
        %v2842 = vpack.c.bf16 %v2812, %v2810
        %v2843 = vpack.c.bf16 %v2813, %v2811
        %v2844 = vpack.c.bf16 %v2816, %v2814
        %v2845 = vpack.c.bf16 %v2817, %v2815
        %v2846 = vpack.c.bf16 %v2820, %v2818
        %v2847 = vpack.c.bf16 %v2821, %v2819
        %v2848 = vpack.c.bf16 %v2824, %v2822
        %v2849 = vpack.c.bf16 %v2825, %v2823
        %v2850 = vpack.c.bf16 %v2828, %v2826
        %v2851 = vpack.c.bf16 %v2829, %v2827
        %v2852 = vpack.c.bf16 %v2832, %v2830
        %v2853 = vpack.c.bf16 %v2833, %v2831
        %v2854 = vpack.c.bf16 %v2836, %v2834
        %v2855 = vpack.c.bf16 %v2837, %v2835
        %v2856 = vpack.c.bf16 %v2840, %v2838
        %v2857 = vpack.c.bf16 %v2841, %v2839
        %2874 = vrot.lane.b32.xlu0 %v2232, 96
        %v2875 = vpop.permute.xlu0 %2874
        %2876 = vrot.lane.b32.xlu0 %v2233, 96
        %v2877 = vpop.permute.xlu0 %2876
        %2878 = vrot.lane.b32.xlu0 %v2234, 96
        %v2879 = vpop.permute.xlu0 %2878
        %2880 = vrot.lane.b32.xlu0 %v2235, 96
        %v2881 = vpop.permute.xlu0 %2880
        %2882 = vrot.lane.b32.xlu0 %v2236, 96
        %v2883 = vpop.permute.xlu0 %2882
        %2884 = vrot.lane.b32.xlu0 %v2237, 96
        %v2885 = vpop.permute.xlu0 %2884
        %2886 = vrot.lane.b32.xlu0 %v2238, 96
        %v2887 = vpop.permute.xlu0 %2886
        %2888 = vrot.lane.b32.xlu0 %v2239, 96
        %v2889 = vpop.permute.xlu0 %2888
        %2890 = vrot.lane.b32.xlu0 %v2240, 96
        %v2891 = vpop.permute.xlu0 %2890
        %2892 = vrot.lane.b32.xlu0 %v2241, 96
        %v2893 = vpop.permute.xlu0 %2892
        %2894 = vrot.lane.b32.xlu0 %v2242, 96
        %v2895 = vpop.permute.xlu0 %2894
        %2896 = vrot.lane.b32.xlu0 %v2243, 96
        %v2897 = vpop.permute.xlu0 %2896
        %2898 = vrot.lane.b32.xlu0 %v2244, 96
        %v2899 = vpop.permute.xlu0 %2898
        %2900 = vrot.lane.b32.xlu0 %v2245, 96
        %v2901 = vpop.permute.xlu0 %2900
        %2902 = vrot.lane.b32.xlu0 %v2246, 96
        %v2903 = vpop.permute.xlu0 %2902
        %2904 = vrot.lane.b32.xlu0 %v2247, 96
        %v2905 = vpop.permute.xlu0 %2904
        %2922 = vmatprep.subr.bf16.mxu0 0
        %2923 = vmatpush1.bf16.msra.mxu0 %v2875
        %2924 = vmatprep.subr.bf16.mxu0 0
        %2925 = vmatpush1.bf16.msra.mxu0 %v2877
        %2926 = vmatprep.subr.bf16.mxu0 0
        %2927 = vmatpush1.bf16.msra.mxu0 %v2879
        %2928 = vmatprep.subr.bf16.mxu0 0
        %2929 = vmatpush1.bf16.msra.mxu0 %v2881
        %2930 = vmatprep.subr.bf16.mxu0 0
        %2931 = vmatpush1.bf16.msra.mxu0 %v2883
        %2932 = vmatprep.subr.bf16.mxu0 0
        %2933 = vmatpush1.bf16.msra.mxu0 %v2885
        %2934 = vmatprep.subr.bf16.mxu0 0
        %2935 = vmatpush1.bf16.msra.mxu0 %v2887
        %2936 = vmatprep.subr.bf16.mxu0 0
        %2937 = vmatpush1.bf16.msra.mxu0 %v2889
        %2938 = vmatprep.subr.bf16.mxu0 0
        %2939 = vmatpush1.bf16.msra.mxu0 %v2891
        %2940 = vmatprep.subr.bf16.mxu0 0
        %2941 = vmatpush1.bf16.msra.mxu0 %v2893
        %2942 = vmatprep.subr.bf16.mxu0 0
        %2943 = vmatpush1.bf16.msra.mxu0 %v2895
        %2944 = vmatprep.subr.bf16.mxu0 0
        %2945 = vmatpush1.bf16.msra.mxu0 %v2897
        %2946 = vmatprep.subr.bf16.mxu0 0
        %2947 = vmatpush1.bf16.msra.mxu0 %v2899
        %2948 = vmatprep.subr.bf16.mxu0 0
        %2949 = vmatpush1.bf16.msra.mxu0 %v2901
        %2950 = vmatprep.subr.bf16.mxu0 0
        %2951 = vmatpush1.bf16.msra.mxu0 %v2903
        %2952 = vmatprep.subr.bf16.mxu0 0
        %2953 = vmatpush1.bf16.msra.mxu0 %v2905
        %2954 = vmatprep.mubr.bf16.mxu0 %v2843
        %2955 = vmatmul.mubr.bf16.gmra.mrb[0].mxu0 %v2842
        %v2956 = vpop.f32.mrb[0].mxu0
        %v2957 = vadd.f32 0.0, %v2956
        %v2958 = vpop.f32.mrb[0].mxu0
        %v2959 = vpop.f32.mrb[0].mxu0
        %v2960 = vadd.f32 0.0, %v2959
        %v2961 = vpop.f32.mrb[0].mxu0
        %2962 = vmatprep.mubr.bf16.mxu0 %v2845
        %2963 = vmatmul.mubr.bf16.gmra.mrb[0].mxu0 %v2844
        %v2964 = vpop.f32.mrb[0].mxu0
        %v2965 = vadd.f32 0.0, %v2964
        %v2966 = vpop.f32.mrb[0].mxu0
        %v2967 = vpop.f32.mrb[0].mxu0
        %v2968 = vadd.f32 0.0, %v2967
        %v2969 = vpop.f32.mrb[0].mxu0
        %2970 = vmatprep.mubr.bf16.mxu0 %v2847
        %2971 = vmatmul.mubr.bf16.gmra.mrb[0].mxu0 %v2846
        %v2972 = vpop.f32.mrb[0].mxu0
        %v2973 = vadd.f32 0.0, %v2972
        %v2974 = vpop.f32.mrb[0].mxu0
        %v2975 = vpop.f32.mrb[0].mxu0
        %v2976 = vadd.f32 0.0, %v2975
        %v2977 = vpop.f32.mrb[0].mxu0
        %2978 = vmatprep.mubr.bf16.mxu0 %v2849
        %2979 = vmatmul.mubr.bf16.gmra.mrb[0].mxu0 %v2848
        %v2980 = vpop.f32.mrb[0].mxu0
        %v2981 = vadd.f32 0.0, %v2980
        %v2982 = vpop.f32.mrb[0].mxu0
        %v2983 = vpop.f32.mrb[0].mxu0
        %v2984 = vadd.f32 0.0, %v2983
        %v2985 = vpop.f32.mrb[0].mxu0
        %2986 = vmatprep.mubr.bf16.mxu0 %v2851
        %2987 = vmatmul.mubr.bf16.gmra.mrb[0].mxu0 %v2850
        %v2988 = vpop.f32.mrb[0].mxu0
        %v2989 = vadd.f32 0.0, %v2988
        %v2990 = vpop.f32.mrb[0].mxu0
        %v2991 = vpop.f32.mrb[0].mxu0
        %v2992 = vadd.f32 0.0, %v2991
        %v2993 = vpop.f32.mrb[0].mxu0
        %2994 = vmatprep.mubr.bf16.mxu0 %v2853
        %2995 = vmatmul.mubr.bf16.gmra.mrb[0].mxu0 %v2852
        %v2996 = vpop.f32.mrb[0].mxu0
        %v2997 = vadd.f32 0.0, %v2996
        %v2998 = vpop.f32.mrb[0].mxu0
        %v2999 = vpop.f32.mrb[0].mxu0
        %v3000 = vadd.f32 0.0, %v2999
        %v3001 = vpop.f32.mrb[0].mxu0
        %3002 = vmatprep.mubr.bf16.mxu0 %v2855
        %3003 = vmatmul.mubr.bf16.gmra.mrb[0].mxu0 %v2854
        %v3004 = vpop.f32.mrb[0].mxu0
        %v3005 = vadd.f32 0.0, %v3004
        %v3006 = vpop.f32.mrb[0].mxu0
        %v3007 = vpop.f32.mrb[0].mxu0
        %v3008 = vadd.f32 0.0, %v3007
        %v3009 = vpop.f32.mrb[0].mxu0
        %3010 = vmatprep.mubr.bf16.mxu0 %v2857
        %3011 = vmatmul.mubr.bf16.gmra.mrb[0].mxu0 %v2856
        %v3012 = vpop.f32.mrb[0].mxu0
        %v3013 = vadd.f32 0.0, %v3012
        %v3014 = vpop.f32.mrb[0].mxu0
        %v3015 = vpop.f32.mrb[0].mxu0
        %v3016 = vadd.f32 0.0, %v3015
        %v3017 = vpop.f32.mrb[0].mxu0
        %3018 = vdwg.mxu0
        %3019 = vrot.lane.b32.xlu0 %v1766, 64
        %v3020 = vpop.permute.xlu0 %3019
        %3021 = vrot.lane.b32.xlu0 %v1767, 64
        %v3022 = vpop.permute.xlu0 %3021
        %3023 = vrot.lane.b32.xlu0 %v1768, 64
        %v3024 = vpop.permute.xlu0 %3023
        %3025 = vrot.lane.b32.xlu0 %v1769, 64
        %v3026 = vpop.permute.xlu0 %3025
        %3027 = vrot.lane.b32.xlu0 %v1770, 64
        %v3028 = vpop.permute.xlu0 %3027
        %3029 = vrot.lane.b32.xlu0 %v1771, 64
        %v3030 = vpop.permute.xlu0 %3029
        %3031 = vrot.lane.b32.xlu0 %v1772, 64
        %v3032 = vpop.permute.xlu0 %3031
        %3033 = vrot.lane.b32.xlu0 %v1773, 64
        %v3034 = vpop.permute.xlu0 %3033
        %3035 = vrot.lane.b32.xlu0 %v1774, 64
        %v3036 = vpop.permute.xlu0 %3035
        %3037 = vrot.lane.b32.xlu0 %v1775, 64
        %v3038 = vpop.permute.xlu0 %3037
        %3039 = vrot.lane.b32.xlu0 %v1776, 64
        %v3040 = vpop.permute.xlu0 %3039
        %3041 = vrot.lane.b32.xlu0 %v1777, 64
        %v3042 = vpop.permute.xlu0 %3041
        %3043 = vrot.lane.b32.xlu0 %v1778, 64
        %v3044 = vpop.permute.xlu0 %3043
        %3045 = vrot.lane.b32.xlu0 %v1779, 64
        %v3046 = vpop.permute.xlu0 %3045
        %3047 = vrot.lane.b32.xlu0 %v1780, 64
        %v3048 = vpop.permute.xlu0 %3047
        %3049 = vrot.lane.b32.xlu0 %v1781, 64
        %v3050 = vpop.permute.xlu0 %3049
        %3051 = vrot.lane.b32.xlu0 %v1782, 64
        %v3052 = vpop.permute.xlu0 %3051
        %3053 = vrot.lane.b32.xlu0 %v1783, 64
        %v3054 = vpop.permute.xlu0 %3053
        %3055 = vrot.lane.b32.xlu0 %v1784, 64
        %v3056 = vpop.permute.xlu0 %3055
        %3057 = vrot.lane.b32.xlu0 %v1785, 64
        %v3058 = vpop.permute.xlu0 %3057
        %3059 = vrot.lane.b32.xlu0 %v1786, 64
        %v3060 = vpop.permute.xlu0 %3059
        %3061 = vrot.lane.b32.xlu0 %v1787, 64
        %v3062 = vpop.permute.xlu0 %3061
        %3063 = vrot.lane.b32.xlu0 %v1788, 64
        %v3064 = vpop.permute.xlu0 %3063
        %3065 = vrot.lane.b32.xlu0 %v1789, 64
        %v3066 = vpop.permute.xlu0 %3065
        %v3068 = vsel %vm1790, %v3020, 0
        %v3071 = vsel %vm1790, %v3022, 0
        %v3074 = vsel %vm1790, %v3024, 0
        %v3077 = vsel %vm1790, %v3026, 0
        %v3080 = vsel %vm1790, %v3028, 0
        %v3083 = vsel %vm1790, %v3030, 0
        %v3086 = vsel %vm1790, %v3032, 0
        %v3089 = vsel %vm1790, %v3034, 0
        %v3092 = vsel %vm1790, %v3036, 0
        %v3095 = vsel %vm1790, %v3038, 0
        %v3098 = vsel %vm1790, %v3040, 0
        %v3101 = vsel %vm1790, %v3042, 0
        %v3104 = vsel %vm1790, %v3044, 0
        %v3107 = vsel %vm1790, %v3046, 0
        %v3110 = vsel %vm1790, %v3048, 0
        %v3113 = vsel %vm1790, %v3050, 0
        %v3116 = vsel %vm1790, %v3052, 0
        %v3119 = vsel %vm1790, %v3054, 0
        %v3122 = vsel %vm1790, %v3056, 0
        %v3125 = vsel %vm1790, %v3058, 0
        %v3128 = vsel %vm1790, %v3060, 0
        %v3131 = vsel %vm1790, %v3062, 0
        %v3134 = vsel %vm1790, %v3064, 0
        %v3137 = vsel %vm1790, %v3066, 0
        %3139 = vmatprep.subr.bf16.mxu0 0
        %3140 = vmatpush1.bf16.xpose.msra.mxu0 %v3092
        %3141 = vmatprep.subr.bf16.mxu0 0
        %3142 = vmatpush1.bf16.xpose.msra.mxu0 %v3095
        %3143 = vmatprep.subr.bf16.mxu0 0
        %3144 = vmatpush1.bf16.xpose.msra.mxu0 %v3098
        %3145 = vmatprep.subr.bf16.mxu0 0
        %3146 = vmatpush1.bf16.xpose.msra.mxu0 %v3101
        %3147 = vmatprep.subr.bf16.mxu0 0
        %3148 = vmatpush1.bf16.xpose.msra.mxu0 %v3104
        %3149 = vmatprep.subr.bf16.mxu0 0
        %3150 = vmatpush1.bf16.xpose.msra.mxu0 %v3107
        %3151 = vmatprep.subr.bf16.mxu0 0
        %3152 = vmatpush1.bf16.xpose.msra.mxu0 %v3110
        %3153 = vmatprep.subr.bf16.mxu0 0
        %3154 = vmatpush1.bf16.xpose.msra.mxu0 %v3113
        %3155 = vmatprep.subr.bf16.mxu0 0
        %3156 = vmatpush1.bf16.xpose.msra.mxu0 %v3116
        %3157 = vmatprep.subr.bf16.mxu0 0
        %3158 = vmatpush1.bf16.xpose.msra.mxu0 %v3119
        %3159 = vmatprep.subr.bf16.mxu0 0
        %3160 = vmatpush1.bf16.xpose.msra.mxu0 %v3122
        %3161 = vmatprep.subr.bf16.mxu0 0
        %3162 = vmatpush1.bf16.xpose.msra.mxu0 %v3125
        %3163 = vmatprep.subr.bf16.mxu0 0
        %3164 = vmatpush1.bf16.xpose.msra.mxu0 %v3128
        %3165 = vmatprep.subr.bf16.mxu0 0
        %3166 = vmatpush1.bf16.xpose.msra.mxu0 %v3131
        %3167 = vmatprep.subr.bf16.mxu0 0
        %3168 = vmatpush1.bf16.xpose.msra.mxu0 %v3134
        %3169 = vmatprep.subr.bf16.mxu0 0
        %3170 = vmatpush1.bf16.xpose.msra.mxu0 %v3137
        %3171 = vmatprep.mubr.bf16.mxu0 0
        %3172 = vmatmul.mubr.bf16.gmra.mrb[0].mxu0 %v3068
        %v3173 = vpop.f32.mrb[0].mxu0
        %v3174 = vadd.f32 0.0, %v3173
        %v3175 = vpop.f32.mrb[0].mxu0
        %v3176 = vadd.f32 0.0, %v3175
        %v3177 = vpop.f32.mrb[0].mxu0
        %v3178 = vadd.f32 0.0, %v3177
        %v3179 = vpop.f32.mrb[0].mxu0
        %v3180 = vadd.f32 0.0, %v3179
        %3181 = vmatprep.mubr.bf16.mxu0 0
        %3182 = vmatmul.mubr.bf16.gmra.mrb[0].mxu0 %v3071
        %v3183 = vpop.f32.mrb[0].mxu0
        %v3184 = vadd.f32 0.0, %v3183
        %v3185 = vpop.f32.mrb[0].mxu0
        %v3186 = vadd.f32 0.0, %v3185
        %v3187 = vpop.f32.mrb[0].mxu0
        %v3188 = vadd.f32 0.0, %v3187
        %v3189 = vpop.f32.mrb[0].mxu0
        %v3190 = vadd.f32 0.0, %v3189
        %3191 = vmatprep.mubr.bf16.mxu0 0
        %3192 = vmatmul.mubr.bf16.gmra.mrb[0].mxu0 %v3074
        %v3193 = vpop.f32.mrb[0].mxu0
        %v3194 = vadd.f32 0.0, %v3193
        %v3195 = vpop.f32.mrb[0].mxu0
        %v3196 = vadd.f32 0.0, %v3195
        %v3197 = vpop.f32.mrb[0].mxu0
        %v3198 = vadd.f32 0.0, %v3197
        %v3199 = vpop.f32.mrb[0].mxu0
        %v3200 = vadd.f32 0.0, %v3199
        %3201 = vmatprep.mubr.bf16.mxu0 0
        %3202 = vmatmul.mubr.bf16.gmra.mrb[0].mxu0 %v3077
        %v3203 = vpop.f32.mrb[0].mxu0
        %v3204 = vadd.f32 0.0, %v3203
        %v3205 = vpop.f32.mrb[0].mxu0
        %v3206 = vadd.f32 0.0, %v3205
        %v3207 = vpop.f32.mrb[0].mxu0
        %v3208 = vadd.f32 0.0, %v3207
        %v3209 = vpop.f32.mrb[0].mxu0
        %v3210 = vadd.f32 0.0, %v3209
        %3211 = vmatprep.mubr.bf16.mxu0 0
        %3212 = vmatmul.mubr.bf16.gmra.mrb[0].mxu0 %v3080
        %v3213 = vpop.f32.mrb[0].mxu0
        %v3214 = vadd.f32 0.0, %v3213
        %v3215 = vpop.f32.mrb[0].mxu0
        %v3216 = vadd.f32 0.0, %v3215
        %v3217 = vpop.f32.mrb[0].mxu0
        %v3218 = vadd.f32 0.0, %v3217
        %v3219 = vpop.f32.mrb[0].mxu0
        %v3220 = vadd.f32 0.0, %v3219
        %3221 = vmatprep.mubr.bf16.mxu0 0
        %3222 = vmatmul.mubr.bf16.gmra.mrb[0].mxu0 %v3083
        %v3223 = vpop.f32.mrb[0].mxu0
        %v3224 = vadd.f32 0.0, %v3223
        %v3225 = vpop.f32.mrb[0].mxu0
        %v3226 = vadd.f32 0.0, %v3225
        %v3227 = vpop.f32.mrb[0].mxu0
        %v3228 = vadd.f32 0.0, %v3227
        %v3229 = vpop.f32.mrb[0].mxu0
        %v3230 = vadd.f32 0.0, %v3229
        %3231 = vmatprep.mubr.bf16.mxu0 0
        %3232 = vmatmul.mubr.bf16.gmra.mrb[0].mxu0 %v3086
        %v3233 = vpop.f32.mrb[0].mxu0
        %v3234 = vadd.f32 0.0, %v3233
        %v3235 = vpop.f32.mrb[0].mxu0
        %v3236 = vadd.f32 0.0, %v3235
        %v3237 = vpop.f32.mrb[0].mxu0
        %v3238 = vadd.f32 0.0, %v3237
        %v3239 = vpop.f32.mrb[0].mxu0
        %v3240 = vadd.f32 0.0, %v3239
        %3241 = vmatprep.mubr.bf16.mxu0 0
        %3242 = vmatmul.mubr.bf16.gmra.mrb[0].mxu0 %v3089
        %v3243 = vpop.f32.mrb[0].mxu0
        %v3244 = vadd.f32 0.0, %v3243
        %v3245 = vpop.f32.mrb[0].mxu0
        %v3246 = vadd.f32 0.0, %v3245
        %v3247 = vpop.f32.mrb[0].mxu0
        %v3248 = vadd.f32 0.0, %v3247
        %v3249 = vpop.f32.mrb[0].mxu0
        %v3250 = vadd.f32 0.0, %v3249
        %3251 = vdwg.mxu0
        %v3252 = vmax.f32 %v3174, %v3176
        %3253 = vmax.xlane.f32.xlu0 %v3252
        %v3254 = vpop.xlane.xlu0 %3253
        %v3255 = vmax.f32 %v3178, %v3180
        %3256 = vmax.xlane.f32.xlu0 %v3255
        %v3257 = vpop.xlane.xlu0 %3256
        %v3258 = vmax.f32 %v3184, %v3186
        %3259 = vmax.xlane.f32.xlu0 %v3258
        %v3260 = vpop.xlane.xlu0 %3259
        %v3261 = vmax.f32 %v3188, %v3190
        %3262 = vmax.xlane.f32.xlu0 %v3261
        %v3263 = vpop.xlane.xlu0 %3262
        %v3264 = vmax.f32 %v3194, %v3196
        %3265 = vmax.xlane.f32.xlu0 %v3264
        %v3266 = vpop.xlane.xlu0 %3265
        %v3267 = vmax.f32 %v3198, %v3200
        %3268 = vmax.xlane.f32.xlu0 %v3267
        %v3269 = vpop.xlane.xlu0 %3268
        %v3270 = vmax.f32 %v3204, %v3206
        %3271 = vmax.xlane.f32.xlu0 %v3270
        %v3272 = vpop.xlane.xlu0 %3271
        %v3273 = vmax.f32 %v3208, %v3210
        %3274 = vmax.xlane.f32.xlu0 %v3273
        %v3275 = vpop.xlane.xlu0 %3274
        %v3276 = vmax.f32 %v3214, %v3216
        %3277 = vmax.xlane.f32.xlu0 %v3276
        %v3278 = vpop.xlane.xlu0 %3277
        %v3279 = vmax.f32 %v3218, %v3220
        %3280 = vmax.xlane.f32.xlu0 %v3279
        %v3281 = vpop.xlane.xlu0 %3280
        %v3282 = vmax.f32 %v3224, %v3226
        %3283 = vmax.xlane.f32.xlu0 %v3282
        %v3284 = vpop.xlane.xlu0 %3283
        %v3285 = vmax.f32 %v3228, %v3230
        %3286 = vmax.xlane.f32.xlu0 %v3285
        %v3287 = vpop.xlane.xlu0 %3286
        %v3288 = vmax.f32 %v3234, %v3236
        %3289 = vmax.xlane.f32.xlu0 %v3288
        %v3290 = vpop.xlane.xlu0 %3289
        %v3291 = vmax.f32 %v3238, %v3240
        %3292 = vmax.xlane.f32.xlu0 %v3291
        %v3293 = vpop.xlane.xlu0 %3292
        %v3294 = vmax.f32 %v3244, %v3246
        %3295 = vmax.xlane.f32.xlu0 %v3294
        %v3296 = vpop.xlane.xlu0 %3295
        %v3297 = vmax.f32 %v3248, %v3250
        %3298 = vmax.xlane.f32.xlu0 %v3297
        %v3299 = vpop.xlane.xlu0 %3298
        %v3300 = vsub.f32 %v3174, %v3254
        %v3301 = vsub.f32 %v3176, %v3254
        %v3302 = vsub.f32 %v3178, %v3257
        %v3303 = vsub.f32 %v3180, %v3257
        %v3304 = vsub.f32 %v3184, %v3260
        %v3305 = vsub.f32 %v3186, %v3260
        %v3306 = vsub.f32 %v3188, %v3263
        %v3307 = vsub.f32 %v3190, %v3263
        %v3308 = vsub.f32 %v3194, %v3266
        %v3309 = vsub.f32 %v3196, %v3266
        %v3310 = vsub.f32 %v3198, %v3269
        %v3311 = vsub.f32 %v3200, %v3269
        %v3312 = vsub.f32 %v3204, %v3272
        %v3313 = vsub.f32 %v3206, %v3272
        %v3314 = vsub.f32 %v3208, %v3275
        %v3315 = vsub.f32 %v3210, %v3275
        %v3316 = vsub.f32 %v3214, %v3278
        %v3317 = vsub.f32 %v3216, %v3278
        %v3318 = vsub.f32 %v3218, %v3281
        %v3319 = vsub.f32 %v3220, %v3281
        %v3320 = vsub.f32 %v3224, %v3284
        %v3321 = vsub.f32 %v3226, %v3284
        %v3322 = vsub.f32 %v3228, %v3287
        %v3323 = vsub.f32 %v3230, %v3287
        %v3324 = vsub.f32 %v3234, %v3290
        %v3325 = vsub.f32 %v3236, %v3290
        %v3326 = vsub.f32 %v3238, %v3293
        %v3327 = vsub.f32 %v3240, %v3293
        %v3328 = vsub.f32 %v3244, %v3296
        %v3329 = vsub.f32 %v3246, %v3296
        %v3330 = vsub.f32 %v3248, %v3299
        %v3331 = vsub.f32 %v3250, %v3299
        %v3332 = vmul.f32 %v3300, 1.442695
        %v3333 = vpow.pop %v3332
        %v3334 = vmul.f32 %v3301, 1.442695
        %v3335 = vpow.pop %v3334
        %v3336 = vmul.f32 %v3302, 1.442695
        %v3337 = vpow.pop %v3336
        %v3338 = vmul.f32 %v3303, 1.442695
        %v3339 = vpow.pop %v3338
        %v3340 = vmul.f32 %v3304, 1.442695
        %v3341 = vpow.pop %v3340
        %v3342 = vmul.f32 %v3305, 1.442695
        %v3343 = vpow.pop %v3342
        %v3344 = vmul.f32 %v3306, 1.442695
        %v3345 = vpow.pop %v3344
        %v3346 = vmul.f32 %v3307, 1.442695
        %v3347 = vpow.pop %v3346
        %v3348 = vmul.f32 %v3308, 1.442695
        %v3349 = vpow.pop %v3348
        %v3350 = vmul.f32 %v3309, 1.442695
        %v3351 = vpow.pop %v3350
        %v3352 = vmul.f32 %v3310, 1.442695
        %v3353 = vpow.pop %v3352
        %v3354 = vmul.f32 %v3311, 1.442695
        %v3355 = vpow.pop %v3354
        %v3356 = vmul.f32 %v3312, 1.442695
        %v3357 = vpow.pop %v3356
        %v3358 = vmul.f32 %v3313, 1.442695
        %v3359 = vpow.pop %v3358
        %v3360 = vmul.f32 %v3314, 1.442695
        %v3361 = vpow.pop %v3360
        %v3362 = vmul.f32 %v3315, 1.442695
        %v3363 = vpow.pop %v3362
        %v3364 = vmul.f32 %v3316, 1.442695
        %v3365 = vpow.pop %v3364
        %v3366 = vmul.f32 %v3317, 1.442695
        %v3367 = vpow.pop %v3366
        %v3368 = vmul.f32 %v3318, 1.442695
        %v3369 = vpow.pop %v3368
        %v3370 = vmul.f32 %v3319, 1.442695
        %v3371 = vpow.pop %v3370
        %v3372 = vmul.f32 %v3320, 1.442695
        %v3373 = vpow.pop %v3372
        %v3374 = vmul.f32 %v3321, 1.442695
        %v3375 = vpow.pop %v3374
        %v3376 = vmul.f32 %v3322, 1.442695
        %v3377 = vpow.pop %v3376
        %v3378 = vmul.f32 %v3323, 1.442695
        %v3379 = vpow.pop %v3378
        %v3380 = vmul.f32 %v3324, 1.442695
        %v3381 = vpow.pop %v3380
        %v3382 = vmul.f32 %v3325, 1.442695
        %v3383 = vpow.pop %v3382
        %v3384 = vmul.f32 %v3326, 1.442695
        %v3385 = vpow.pop %v3384
        %v3386 = vmul.f32 %v3327, 1.442695
        %v3387 = vpow.pop %v3386
        %v3388 = vmul.f32 %v3328, 1.442695
        %v3389 = vpow.pop %v3388
        %v3390 = vmul.f32 %v3329, 1.442695
        %v3391 = vpow.pop %v3390
        %v3392 = vmul.f32 %v3330, 1.442695
        %v3393 = vpow.pop %v3392
        %v3394 = vmul.f32 %v3331, 1.442695
        %v3395 = vpow.pop %v3394
        %v3396 = vadd.f32 %v3333, %v3335
        %3397 = vadd.xlane.f32.xlu0 %v3396
        %v3398 = vpop.xlane.xlu0 %3397
        %v3399 = vadd.f32 %v3337, %v3339
        %3400 = vadd.xlane.f32.xlu0 %v3399
        %v3401 = vpop.xlane.xlu0 %3400
        %v3402 = vadd.f32 %v3341, %v3343
        %3403 = vadd.xlane.f32.xlu0 %v3402
        %v3404 = vpop.xlane.xlu0 %3403
        %v3405 = vadd.f32 %v3345, %v3347
        %3406 = vadd.xlane.f32.xlu0 %v3405
        %v3407 = vpop.xlane.xlu0 %3406
        %v3408 = vadd.f32 %v3349, %v3351
        %3409 = vadd.xlane.f32.xlu0 %v3408
        %v3410 = vpop.xlane.xlu0 %3409
        %v3411 = vadd.f32 %v3353, %v3355
        %3412 = vadd.xlane.f32.xlu0 %v3411
        %v3413 = vpop.xlane.xlu0 %3412
        %v3414 = vadd.f32 %v3357, %v3359
        %3415 = vadd.xlane.f32.xlu0 %v3414
        %v3416 = vpop.xlane.xlu0 %3415
        %v3417 = vadd.f32 %v3361, %v3363
        %3418 = vadd.xlane.f32.xlu0 %v3417
        %v3419 = vpop.xlane.xlu0 %3418
        %v3420 = vadd.f32 %v3365, %v3367
        %3421 = vadd.xlane.f32.xlu0 %v3420
        %v3422 = vpop.xlane.xlu0 %3421
        %v3423 = vadd.f32 %v3369, %v3371
        %3424 = vadd.xlane.f32.xlu0 %v3423
        %v3425 = vpop.xlane.xlu0 %3424
        %v3426 = vadd.f32 %v3373, %v3375
        %3427 = vadd.xlane.f32.xlu0 %v3426
        %v3428 = vpop.xlane.xlu0 %3427
        %v3429 = vadd.f32 %v3377, %v3379
        %3430 = vadd.xlane.f32.xlu0 %v3429
        %v3431 = vpop.xlane.xlu0 %3430
        %v3432 = vadd.f32 %v3381, %v3383
        %3433 = vadd.xlane.f32.xlu0 %v3432
        %v3434 = vpop.xlane.xlu0 %3433
        %v3435 = vadd.f32 %v3385, %v3387
        %3436 = vadd.xlane.f32.xlu0 %v3435
        %v3437 = vpop.xlane.xlu0 %3436
        %v3438 = vadd.f32 %v3389, %v3391
        %3439 = vadd.xlane.f32.xlu0 %v3438
        %v3440 = vpop.xlane.xlu0 %3439
        %v3441 = vadd.f32 %v3393, %v3395
        %3442 = vadd.xlane.f32.xlu0 %v3441
        %v3443 = vpop.xlane.xlu0 %3442
        %v3444 = vrcp.pop %v3398
        %v3445 = vrcp.pop %v3401
        %v3446 = vrcp.pop %v3404
        %v3447 = vrcp.pop %v3407
        %v3448 = vrcp.pop %v3410
        %v3449 = vrcp.pop %v3413
        %v3450 = vrcp.pop %v3416
        %v3451 = vrcp.pop %v3419
        %v3452 = vrcp.pop %v3422
        %v3453 = vrcp.pop %v3425
        %v3454 = vrcp.pop %v3428
        %v3455 = vrcp.pop %v3431
        %v3456 = vrcp.pop %v3434
        %v3457 = vrcp.pop %v3437
        %v3458 = vrcp.pop %v3440
        %v3459 = vrcp.pop %v3443
        %v3460 = vmul.f32 %v3333, %v3444
        %v3461 = vmul.f32 %v3335, %v3444
        %v3462 = vmul.f32 %v3337, %v3445
        %v3463 = vmul.f32 %v3339, %v3445
        %v3464 = vmul.f32 %v3341, %v3446
        %v3465 = vmul.f32 %v3343, %v3446
        %v3466 = vmul.f32 %v3345, %v3447
        %v3467 = vmul.f32 %v3347, %v3447
        %v3468 = vmul.f32 %v3349, %v3448
        %v3469 = vmul.f32 %v3351, %v3448
        %v3470 = vmul.f32 %v3353, %v3449
        %v3471 = vmul.f32 %v3355, %v3449
        %v3472 = vmul.f32 %v3357, %v3450
        %v3473 = vmul.f32 %v3359, %v3450
        %v3474 = vmul.f32 %v3361, %v3451
        %v3475 = vmul.f32 %v3363, %v3451
        %v3476 = vmul.f32 %v3365, %v3452
        %v3477 = vmul.f32 %v3367, %v3452
        %v3478 = vmul.f32 %v3369, %v3453
        %v3479 = vmul.f32 %v3371, %v3453
        %v3480 = vmul.f32 %v3373, %v3454
        %v3481 = vmul.f32 %v3375, %v3454
        %v3482 = vmul.f32 %v3377, %v3455
        %v3483 = vmul.f32 %v3379, %v3455
        %v3484 = vmul.f32 %v3381, %v3456
        %v3485 = vmul.f32 %v3383, %v3456
        %v3486 = vmul.f32 %v3385, %v3457
        %v3487 = vmul.f32 %v3387, %v3457
        %v3488 = vmul.f32 %v3389, %v3458
        %v3489 = vmul.f32 %v3391, %v3458
        %v3490 = vmul.f32 %v3393, %v3459
        %v3491 = vmul.f32 %v3395, %v3459
        %v3492 = vpack.c.bf16 %v3462, %v3460
        %v3493 = vpack.c.bf16 %v3463, %v3461
        %v3494 = vpack.c.bf16 %v3466, %v3464
        %v3495 = vpack.c.bf16 %v3467, %v3465
        %v3496 = vpack.c.bf16 %v3470, %v3468
        %v3497 = vpack.c.bf16 %v3471, %v3469
        %v3498 = vpack.c.bf16 %v3474, %v3472
        %v3499 = vpack.c.bf16 %v3475, %v3473
        %v3500 = vpack.c.bf16 %v3478, %v3476
        %v3501 = vpack.c.bf16 %v3479, %v3477
        %v3502 = vpack.c.bf16 %v3482, %v3480
        %v3503 = vpack.c.bf16 %v3483, %v3481
        %v3504 = vpack.c.bf16 %v3486, %v3484
        %v3505 = vpack.c.bf16 %v3487, %v3485
        %v3506 = vpack.c.bf16 %v3490, %v3488
        %v3507 = vpack.c.bf16 %v3491, %v3489
        %3508 = vrot.lane.b32.xlu0 %v2232, 64
        %v3509 = vpop.permute.xlu0 %3508
        %3510 = vrot.lane.b32.xlu0 %v2233, 64
        %v3511 = vpop.permute.xlu0 %3510
        %3512 = vrot.lane.b32.xlu0 %v2234, 64
        %v3513 = vpop.permute.xlu0 %3512
        %3514 = vrot.lane.b32.xlu0 %v2235, 64
        %v3515 = vpop.permute.xlu0 %3514
        %3516 = vrot.lane.b32.xlu0 %v2236, 64
        %v3517 = vpop.permute.xlu0 %3516
        %3518 = vrot.lane.b32.xlu0 %v2237, 64
        %v3519 = vpop.permute.xlu0 %3518
        %3520 = vrot.lane.b32.xlu0 %v2238, 64
        %v3521 = vpop.permute.xlu0 %3520
        %3522 = vrot.lane.b32.xlu0 %v2239, 64
        %v3523 = vpop.permute.xlu0 %3522
        %3524 = vrot.lane.b32.xlu0 %v2240, 64
        %v3525 = vpop.permute.xlu0 %3524
        %3526 = vrot.lane.b32.xlu0 %v2241, 64
        %v3527 = vpop.permute.xlu0 %3526
        %3528 = vrot.lane.b32.xlu0 %v2242, 64
        %v3529 = vpop.permute.xlu0 %3528
        %3530 = vrot.lane.b32.xlu0 %v2243, 64
        %v3531 = vpop.permute.xlu0 %3530
        %3532 = vrot.lane.b32.xlu0 %v2244, 64
        %v3533 = vpop.permute.xlu0 %3532
        %3534 = vrot.lane.b32.xlu0 %v2245, 64
        %v3535 = vpop.permute.xlu0 %3534
        %3536 = vrot.lane.b32.xlu0 %v2246, 64
        %v3537 = vpop.permute.xlu0 %3536
        %3538 = vrot.lane.b32.xlu0 %v2247, 64
        %v3539 = vpop.permute.xlu0 %3538
        %3556 = vmatprep.subr.bf16.mxu0 0
        %3557 = vmatpush1.bf16.msra.mxu0 %v3509
        %3558 = vmatprep.subr.bf16.mxu0 0
        %3559 = vmatpush1.bf16.msra.mxu0 %v3511
        %3560 = vmatprep.subr.bf16.mxu0 0
        %3561 = vmatpush1.bf16.msra.mxu0 %v3513
        %3562 = vmatprep.subr.bf16.mxu0 0
        %3563 = vmatpush1.bf16.msra.mxu0 %v3515
        %3564 = vmatprep.subr.bf16.mxu0 0
        %3565 = vmatpush1.bf16.msra.mxu0 %v3517
        %3566 = vmatprep.subr.bf16.mxu0 0
        %3567 = vmatpush1.bf16.msra.mxu0 %v3519
        %3568 = vmatprep.subr.bf16.mxu0 0
        %3569 = vmatpush1.bf16.msra.mxu0 %v3521
        %3570 = vmatprep.subr.bf16.mxu0 0
        %3571 = vmatpush1.bf16.msra.mxu0 %v3523
        %3572 = vmatprep.subr.bf16.mxu0 0
        %3573 = vmatpush1.bf16.msra.mxu0 %v3525
        %3574 = vmatprep.subr.bf16.mxu0 0
        %3575 = vmatpush1.bf16.msra.mxu0 %v3527
        %3576 = vmatprep.subr.bf16.mxu0 0
        %3577 = vmatpush1.bf16.msra.mxu0 %v3529
        %3578 = vmatprep.subr.bf16.mxu0 0
        %3579 = vmatpush1.bf16.msra.mxu0 %v3531
        %3580 = vmatprep.subr.bf16.mxu0 0
        %3581 = vmatpush1.bf16.msra.mxu0 %v3533
        %3582 = vmatprep.subr.bf16.mxu0 0
        %3583 = vmatpush1.bf16.msra.mxu0 %v3535
        %3584 = vmatprep.subr.bf16.mxu0 0
        %3585 = vmatpush1.bf16.msra.mxu0 %v3537
        %3586 = vmatprep.subr.bf16.mxu0 0
        %3587 = vmatpush1.bf16.msra.mxu0 %v3539
        %3588 = vmatprep.mubr.bf16.mxu0 %v3493
        %3589 = vmatmul.mubr.bf16.gmra.mrb[0].mxu0 %v3492
        %v3590 = vpop.f32.mrb[0].mxu0
        %v3591 = vadd.f32 0.0, %v3590
        %v3592 = vpop.f32.mrb[0].mxu0
        %v3593 = vpop.f32.mrb[0].mxu0
        %v3594 = vadd.f32 0.0, %v3593
        %v3595 = vpop.f32.mrb[0].mxu0
        %3596 = vmatprep.mubr.bf16.mxu0 %v3495
        %3597 = vmatmul.mubr.bf16.gmra.mrb[0].mxu0 %v3494
        %v3598 = vpop.f32.mrb[0].mxu0
        %v3599 = vadd.f32 0.0, %v3598
        %v3600 = vpop.f32.mrb[0].mxu0
        %v3601 = vpop.f32.mrb[0].mxu0
        %v3602 = vadd.f32 0.0, %v3601
        %v3603 = vpop.f32.mrb[0].mxu0
        %3604 = vmatprep.mubr.bf16.mxu0 %v3497
        %3605 = vmatmul.mubr.bf16.gmra.mrb[0].mxu0 %v3496
        %v3606 = vpop.f32.mrb[0].mxu0
        %v3607 = vadd.f32 0.0, %v3606
        %v3608 = vpop.f32.mrb[0].mxu0
        %v3609 = vpop.f32.mrb[0].mxu0
        %v3610 = vadd.f32 0.0, %v3609
        %v3611 = vpop.f32.mrb[0].mxu0
        %3612 = vmatprep.mubr.bf16.mxu0 %v3499
        %3613 = vmatmul.mubr.bf16.gmra.mrb[0].mxu0 %v3498
        %v3614 = vpop.f32.mrb[0].mxu0
        %v3615 = vadd.f32 0.0, %v3614
        %v3616 = vpop.f32.mrb[0].mxu0
        %v3617 = vpop.f32.mrb[0].mxu0
        %v3618 = vadd.f32 0.0, %v3617
        %v3619 = vpop.f32.mrb[0].mxu0
        %3620 = vmatprep.mubr.bf16.mxu0 %v3501
        %3621 = vmatmul.mubr.bf16.gmra.mrb[0].mxu0 %v3500
        %v3622 = vpop.f32.mrb[0].mxu0
        %v3623 = vadd.f32 0.0, %v3622
        %v3624 = vpop.f32.mrb[0].mxu0
        %v3625 = vpop.f32.mrb[0].mxu0
        %v3626 = vadd.f32 0.0, %v3625
        %v3627 = vpop.f32.mrb[0].mxu0
        %3628 = vmatprep.mubr.bf16.mxu0 %v3503
        %3629 = vmatmul.mubr.bf16.gmra.mrb[0].mxu0 %v3502
        %v3630 = vpop.f32.mrb[0].mxu0
        %v3631 = vadd.f32 0.0, %v3630
        %v3632 = vpop.f32.mrb[0].mxu0
        %v3633 = vpop.f32.mrb[0].mxu0
        %v3634 = vadd.f32 0.0, %v3633
        %v3635 = vpop.f32.mrb[0].mxu0
        %3636 = vmatprep.mubr.bf16.mxu0 %v3505
        %3637 = vmatmul.mubr.bf16.gmra.mrb[0].mxu0 %v3504
        %v3638 = vpop.f32.mrb[0].mxu0
        %v3639 = vadd.f32 0.0, %v3638
        %v3640 = vpop.f32.mrb[0].mxu0
        %v3641 = vpop.f32.mrb[0].mxu0
        %v3642 = vadd.f32 0.0, %v3641
        %v3643 = vpop.f32.mrb[0].mxu0
        %3644 = vmatprep.mubr.bf16.mxu0 %v3507
        %3645 = vmatmul.mubr.bf16.gmra.mrb[0].mxu0 %v3506
        %v3646 = vpop.f32.mrb[0].mxu0
        %v3647 = vadd.f32 0.0, %v3646
        %v3648 = vpop.f32.mrb[0].mxu0
        %v3649 = vpop.f32.mrb[0].mxu0
        %v3650 = vadd.f32 0.0, %v3649
        %v3651 = vpop.f32.mrb[0].mxu0
        %3652 = vdwg.mxu0
        %3653 = vrot.lane.b32.xlu0 %v1766, 32
        %v3654 = vpop.permute.xlu0 %3653
        %3655 = vrot.lane.b32.xlu0 %v1767, 32
        %v3656 = vpop.permute.xlu0 %3655
        %3657 = vrot.lane.b32.xlu0 %v1768, 32
        %v3658 = vpop.permute.xlu0 %3657
        %3659 = vrot.lane.b32.xlu0 %v1769, 32
        %v3660 = vpop.permute.xlu0 %3659
        %3661 = vrot.lane.b32.xlu0 %v1770, 32
        %v3662 = vpop.permute.xlu0 %3661
        %3663 = vrot.lane.b32.xlu0 %v1771, 32
        %v3664 = vpop.permute.xlu0 %3663
        %3665 = vrot.lane.b32.xlu0 %v1772, 32
        %v3666 = vpop.permute.xlu0 %3665
        %3667 = vrot.lane.b32.xlu0 %v1773, 32
        %v3668 = vpop.permute.xlu0 %3667
        %3669 = vrot.lane.b32.xlu0 %v1774, 32
        %v3670 = vpop.permute.xlu0 %3669
        %3671 = vrot.lane.b32.xlu0 %v1775, 32
        %v3672 = vpop.permute.xlu0 %3671
        %3673 = vrot.lane.b32.xlu0 %v1776, 32
        %v3674 = vpop.permute.xlu0 %3673
        %3675 = vrot.lane.b32.xlu0 %v1777, 32
        %v3676 = vpop.permute.xlu0 %3675
        %3677 = vrot.lane.b32.xlu0 %v1778, 32
        %v3678 = vpop.permute.xlu0 %3677
        %3679 = vrot.lane.b32.xlu0 %v1779, 32
        %v3680 = vpop.permute.xlu0 %3679
        %3681 = vrot.lane.b32.xlu0 %v1780, 32
        %v3682 = vpop.permute.xlu0 %3681
        %3683 = vrot.lane.b32.xlu0 %v1781, 32
        %v3684 = vpop.permute.xlu0 %3683
        %3685 = vrot.lane.b32.xlu0 %v1782, 32
        %v3686 = vpop.permute.xlu0 %3685
        %3687 = vrot.lane.b32.xlu0 %v1783, 32
        %v3688 = vpop.permute.xlu0 %3687
        %3689 = vrot.lane.b32.xlu0 %v1784, 32
        %v3690 = vpop.permute.xlu0 %3689
        %3691 = vrot.lane.b32.xlu0 %v1785, 32
        %v3692 = vpop.permute.xlu0 %3691
        %3693 = vrot.lane.b32.xlu0 %v1786, 32
        %v3694 = vpop.permute.xlu0 %3693
        %3695 = vrot.lane.b32.xlu0 %v1787, 32
        %v3696 = vpop.permute.xlu0 %3695
        %3697 = vrot.lane.b32.xlu0 %v1788, 32
        %v3698 = vpop.permute.xlu0 %3697
        %3699 = vrot.lane.b32.xlu0 %v1789, 32
        %v3700 = vpop.permute.xlu0 %3699
        %v3702 = vsel %vm1790, %v3654, 0
        %v3705 = vsel %vm1790, %v3656, 0
        %v3708 = vsel %vm1790, %v3658, 0
        %v3711 = vsel %vm1790, %v3660, 0
        %v3714 = vsel %vm1790, %v3662, 0
        %v3717 = vsel %vm1790, %v3664, 0
        %v3720 = vsel %vm1790, %v3666, 0
        %v3723 = vsel %vm1790, %v3668, 0
        %v3726 = vsel %vm1790, %v3670, 0
        %v3729 = vsel %vm1790, %v3672, 0
        %v3732 = vsel %vm1790, %v3674, 0
        %v3735 = vsel %vm1790, %v3676, 0
        %v3738 = vsel %vm1790, %v3678, 0
        %v3741 = vsel %vm1790, %v3680, 0
        %v3744 = vsel %vm1790, %v3682, 0
        %v3747 = vsel %vm1790, %v3684, 0
        %v3750 = vsel %vm1790, %v3686, 0
        %v3753 = vsel %vm1790, %v3688, 0
        %v3756 = vsel %vm1790, %v3690, 0
        %v3759 = vsel %vm1790, %v3692, 0
        %v3762 = vsel %vm1790, %v3694, 0
        %v3765 = vsel %vm1790, %v3696, 0
        %v3768 = vsel %vm1790, %v3698, 0
        %v3771 = vsel %vm1790, %v3700, 0
        %3773 = vmatprep.subr.bf16.mxu0 0
        %3774 = vmatpush1.bf16.xpose.msra.mxu0 %v3726
        %3775 = vmatprep.subr.bf16.mxu0 0
        %3776 = vmatpush1.bf16.xpose.msra.mxu0 %v3729
        %3777 = vmatprep.subr.bf16.mxu0 0
        %3778 = vmatpush1.bf16.xpose.msra.mxu0 %v3732
        %3779 = vmatprep.subr.bf16.mxu0 0
        %3780 = vmatpush1.bf16.xpose.msra.mxu0 %v3735
        %3781 = vmatprep.subr.bf16.mxu0 0
        %3782 = vmatpush1.bf16.xpose.msra.mxu0 %v3738
        %3783 = vmatprep.subr.bf16.mxu0 0
        %3784 = vmatpush1.bf16.xpose.msra.mxu0 %v3741
        %3785 = vmatprep.subr.bf16.mxu0 0
        %3786 = vmatpush1.bf16.xpose.msra.mxu0 %v3744
        %3787 = vmatprep.subr.bf16.mxu0 0
        %3788 = vmatpush1.bf16.xpose.msra.mxu0 %v3747
        %3789 = vmatprep.subr.bf16.mxu0 0
        %3790 = vmatpush1.bf16.xpose.msra.mxu0 %v3750
        %3791 = vmatprep.subr.bf16.mxu0 0
        %3792 = vmatpush1.bf16.xpose.msra.mxu0 %v3753
        %3793 = vmatprep.subr.bf16.mxu0 0
        %3794 = vmatpush1.bf16.xpose.msra.mxu0 %v3756
        %3795 = vmatprep.subr.bf16.mxu0 0
        %3796 = vmatpush1.bf16.xpose.msra.mxu0 %v3759
        %3797 = vmatprep.subr.bf16.mxu0 0
        %3798 = vmatpush1.bf16.xpose.msra.mxu0 %v3762
        %3799 = vmatprep.subr.bf16.mxu0 0
        %3800 = vmatpush1.bf16.xpose.msra.mxu0 %v3765
        %3801 = vmatprep.subr.bf16.mxu0 0
        %3802 = vmatpush1.bf16.xpose.msra.mxu0 %v3768
        %3803 = vmatprep.subr.bf16.mxu0 0
        %3804 = vmatpush1.bf16.xpose.msra.mxu0 %v3771
        %3805 = vmatprep.mubr.bf16.mxu0 0
        %3806 = vmatmul.mubr.bf16.gmra.mrb[0].mxu0 %v3702
        %v3807 = vpop.f32.mrb[0].mxu0
        %v3808 = vadd.f32 0.0, %v3807
        %v3809 = vpop.f32.mrb[0].mxu0
        %v3810 = vadd.f32 0.0, %v3809
        %v3811 = vpop.f32.mrb[0].mxu0
        %v3812 = vadd.f32 0.0, %v3811
        %v3813 = vpop.f32.mrb[0].mxu0
        %v3814 = vadd.f32 0.0, %v3813
        %3815 = vmatprep.mubr.bf16.mxu0 0
        %3816 = vmatmul.mubr.bf16.gmra.mrb[0].mxu0 %v3705
        %v3817 = vpop.f32.mrb[0].mxu0
        %v3818 = vadd.f32 0.0, %v3817
        %v3819 = vpop.f32.mrb[0].mxu0
        %v3820 = vadd.f32 0.0, %v3819
        %v3821 = vpop.f32.mrb[0].mxu0
        %v3822 = vadd.f32 0.0, %v3821
        %v3823 = vpop.f32.mrb[0].mxu0
        %v3824 = vadd.f32 0.0, %v3823
        %3825 = vmatprep.mubr.bf16.mxu0 0
        %3826 = vmatmul.mubr.bf16.gmra.mrb[0].mxu0 %v3708
        %v3827 = vpop.f32.mrb[0].mxu0
        %v3828 = vadd.f32 0.0, %v3827
        %v3829 = vpop.f32.mrb[0].mxu0
        %v3830 = vadd.f32 0.0, %v3829
        %v3831 = vpop.f32.mrb[0].mxu0
        %v3832 = vadd.f32 0.0, %v3831
        %v3833 = vpop.f32.mrb[0].mxu0
        %v3834 = vadd.f32 0.0, %v3833
        %3835 = vmatprep.mubr.bf16.mxu0 0
        %3836 = vmatmul.mubr.bf16.gmra.mrb[0].mxu0 %v3711
        %v3837 = vpop.f32.mrb[0].mxu0
        %v3838 = vadd.f32 0.0, %v3837
        %v3839 = vpop.f32.mrb[0].mxu0
        %v3840 = vadd.f32 0.0, %v3839
        %v3841 = vpop.f32.mrb[0].mxu0
        %v3842 = vadd.f32 0.0, %v3841
        %v3843 = vpop.f32.mrb[0].mxu0
        %v3844 = vadd.f32 0.0, %v3843
        %3845 = vmatprep.mubr.bf16.mxu0 0
        %3846 = vmatmul.mubr.bf16.gmra.mrb[0].mxu0 %v3714
        %v3847 = vpop.f32.mrb[0].mxu0
        %v3848 = vadd.f32 0.0, %v3847
        %v3849 = vpop.f32.mrb[0].mxu0
        %v3850 = vadd.f32 0.0, %v3849
        %v3851 = vpop.f32.mrb[0].mxu0
        %v3852 = vadd.f32 0.0, %v3851
        %v3853 = vpop.f32.mrb[0].mxu0
        %v3854 = vadd.f32 0.0, %v3853
        %3855 = vmatprep.mubr.bf16.mxu0 0
        %3856 = vmatmul.mubr.bf16.gmra.mrb[0].mxu0 %v3717
        %v3857 = vpop.f32.mrb[0].mxu0
        %v3858 = vadd.f32 0.0, %v3857
        %v3859 = vpop.f32.mrb[0].mxu0
        %v3860 = vadd.f32 0.0, %v3859
        %v3861 = vpop.f32.mrb[0].mxu0
        %v3862 = vadd.f32 0.0, %v3861
        %v3863 = vpop.f32.mrb[0].mxu0
        %v3864 = vadd.f32 0.0, %v3863
        %3865 = vmatprep.mubr.bf16.mxu0 0
        %3866 = vmatmul.mubr.bf16.gmra.mrb[0].mxu0 %v3720
        %v3867 = vpop.f32.mrb[0].mxu0
        %v3868 = vadd.f32 0.0, %v3867
        %v3869 = vpop.f32.mrb[0].mxu0
        %v3870 = vadd.f32 0.0, %v3869
        %v3871 = vpop.f32.mrb[0].mxu0
        %v3872 = vadd.f32 0.0, %v3871
        %v3873 = vpop.f32.mrb[0].mxu0
        %v3874 = vadd.f32 0.0, %v3873
        %3875 = vmatprep.mubr.bf16.mxu0 0
        %3876 = vmatmul.mubr.bf16.gmra.mrb[0].mxu0 %v3723
        %v3877 = vpop.f32.mrb[0].mxu0
        %v3878 = vadd.f32 0.0, %v3877
        %v3879 = vpop.f32.mrb[0].mxu0
        %v3880 = vadd.f32 0.0, %v3879
        %v3881 = vpop.f32.mrb[0].mxu0
        %v3882 = vadd.f32 0.0, %v3881
        %v3883 = vpop.f32.mrb[0].mxu0
        %v3884 = vadd.f32 0.0, %v3883
        %3885 = vdwg.mxu0
        %v3886 = vmax.f32 %v3808, %v3810
        %3887 = vmax.xlane.f32.xlu0 %v3886
        %v3888 = vpop.xlane.xlu0 %3887
        %v3889 = vmax.f32 %v3812, %v3814
        %3890 = vmax.xlane.f32.xlu0 %v3889
        %v3891 = vpop.xlane.xlu0 %3890
        %v3892 = vmax.f32 %v3818, %v3820
        %3893 = vmax.xlane.f32.xlu0 %v3892
        %v3894 = vpop.xlane.xlu0 %3893
        %v3895 = vmax.f32 %v3822, %v3824
        %3896 = vmax.xlane.f32.xlu0 %v3895
        %v3897 = vpop.xlane.xlu0 %3896
        %v3898 = vmax.f32 %v3828, %v3830
        %3899 = vmax.xlane.f32.xlu0 %v3898
        %v3900 = vpop.xlane.xlu0 %3899
        %v3901 = vmax.f32 %v3832, %v3834
        %3902 = vmax.xlane.f32.xlu0 %v3901
        %v3903 = vpop.xlane.xlu0 %3902
        %v3904 = vmax.f32 %v3838, %v3840
        %3905 = vmax.xlane.f32.xlu0 %v3904
        %v3906 = vpop.xlane.xlu0 %3905
        %v3907 = vmax.f32 %v3842, %v3844
        %3908 = vmax.xlane.f32.xlu0 %v3907
        %v3909 = vpop.xlane.xlu0 %3908
        %v3910 = vmax.f32 %v3848, %v3850
        %3911 = vmax.xlane.f32.xlu0 %v3910
        %v3912 = vpop.xlane.xlu0 %3911
        %v3913 = vmax.f32 %v3852, %v3854
        %3914 = vmax.xlane.f32.xlu0 %v3913
        %v3915 = vpop.xlane.xlu0 %3914
        %v3916 = vmax.f32 %v3858, %v3860
        %3917 = vmax.xlane.f32.xlu0 %v3916
        %v3918 = vpop.xlane.xlu0 %3917
        %v3919 = vmax.f32 %v3862, %v3864
        %3920 = vmax.xlane.f32.xlu0 %v3919
        %v3921 = vpop.xlane.xlu0 %3920
        %v3922 = vmax.f32 %v3868, %v3870
        %3923 = vmax.xlane.f32.xlu0 %v3922
        %v3924 = vpop.xlane.xlu0 %3923
        %v3925 = vmax.f32 %v3872, %v3874
        %3926 = vmax.xlane.f32.xlu0 %v3925
        %v3927 = vpop.xlane.xlu0 %3926
        %v3928 = vmax.f32 %v3878, %v3880
        %3929 = vmax.xlane.f32.xlu0 %v3928
        %v3930 = vpop.xlane.xlu0 %3929
        %v3931 = vmax.f32 %v3882, %v3884
        %3932 = vmax.xlane.f32.xlu0 %v3931
        %v3933 = vpop.xlane.xlu0 %3932
        %v3934 = vsub.f32 %v3808, %v3888
        %v3935 = vsub.f32 %v3810, %v3888
        %v3936 = vsub.f32 %v3812, %v3891
        %v3937 = vsub.f32 %v3814, %v3891
        %v3938 = vsub.f32 %v3818, %v3894
        %v3939 = vsub.f32 %v3820, %v3894
        %v3940 = vsub.f32 %v3822, %v3897
        %v3941 = vsub.f32 %v3824, %v3897
        %v3942 = vsub.f32 %v3828, %v3900
        %v3943 = vsub.f32 %v3830, %v3900
        %v3944 = vsub.f32 %v3832, %v3903
        %v3945 = vsub.f32 %v3834, %v3903
        %v3946 = vsub.f32 %v3838, %v3906
        %v3947 = vsub.f32 %v3840, %v3906
        %v3948 = vsub.f32 %v3842, %v3909
        %v3949 = vsub.f32 %v3844, %v3909
        %v3950 = vsub.f32 %v3848, %v3912
        %v3951 = vsub.f32 %v3850, %v3912
        %v3952 = vsub.f32 %v3852, %v3915
        %v3953 = vsub.f32 %v3854, %v3915
        %v3954 = vsub.f32 %v3858, %v3918
        %v3955 = vsub.f32 %v3860, %v3918
        %v3956 = vsub.f32 %v3862, %v3921
        %v3957 = vsub.f32 %v3864, %v3921
        %v3958 = vsub.f32 %v3868, %v3924
        %v3959 = vsub.f32 %v3870, %v3924
        %v3960 = vsub.f32 %v3872, %v3927
        %v3961 = vsub.f32 %v3874, %v3927
        %v3962 = vsub.f32 %v3878, %v3930
        %v3963 = vsub.f32 %v3880, %v3930
        %v3964 = vsub.f32 %v3882, %v3933
        %v3965 = vsub.f32 %v3884, %v3933
        %v3966 = vmul.f32 %v3934, 1.442695
        %v3967 = vpow.pop %v3966
        %v3968 = vmul.f32 %v3935, 1.442695
        %v3969 = vpow.pop %v3968
        %v3970 = vmul.f32 %v3936, 1.442695
        %v3971 = vpow.pop %v3970
        %v3972 = vmul.f32 %v3937, 1.442695
        %v3973 = vpow.pop %v3972
        %v3974 = vmul.f32 %v3938, 1.442695
        %v3975 = vpow.pop %v3974
        %v3976 = vmul.f32 %v3939, 1.442695
        %v3977 = vpow.pop %v3976
        %v3978 = vmul.f32 %v3940, 1.442695
        %v3979 = vpow.pop %v3978
        %v3980 = vmul.f32 %v3941, 1.442695
        %v3981 = vpow.pop %v3980
        %v3982 = vmul.f32 %v3942, 1.442695
        %v3983 = vpow.pop %v3982
        %v3984 = vmul.f32 %v3943, 1.442695
        %v3985 = vpow.pop %v3984
        %v3986 = vmul.f32 %v3944, 1.442695
        %v3987 = vpow.pop %v3986
        %v3988 = vmul.f32 %v3945, 1.442695
        %v3989 = vpow.pop %v3988
        %v3990 = vmul.f32 %v3946, 1.442695
        %v3991 = vpow.pop %v3990
        %v3992 = vmul.f32 %v3947, 1.442695
        %v3993 = vpow.pop %v3992
        %v3994 = vmul.f32 %v3948, 1.442695
        %v3995 = vpow.pop %v3994
        %v3996 = vmul.f32 %v3949, 1.442695
        %v3997 = vpow.pop %v3996
        %v3998 = vmul.f32 %v3950, 1.442695
        %v3999 = vpow.pop %v3998
        %v4000 = vmul.f32 %v3951, 1.442695
        %v4001 = vpow.pop %v4000
        %v4002 = vmul.f32 %v3952, 1.442695
        %v4003 = vpow.pop %v4002
        %v4004 = vmul.f32 %v3953, 1.442695
        %v4005 = vpow.pop %v4004
        %v4006 = vmul.f32 %v3954, 1.442695
        %v4007 = vpow.pop %v4006
        %v4008 = vmul.f32 %v3955, 1.442695
        %v4009 = vpow.pop %v4008
        %v4010 = vmul.f32 %v3956, 1.442695
        %v4011 = vpow.pop %v4010
        %v4012 = vmul.f32 %v3957, 1.442695
        %v4013 = vpow.pop %v4012
        %v4014 = vmul.f32 %v3958, 1.442695
        %v4015 = vpow.pop %v4014
        %v4016 = vmul.f32 %v3959, 1.442695
        %v4017 = vpow.pop %v4016
        %v4018 = vmul.f32 %v3960, 1.442695
        %v4019 = vpow.pop %v4018
        %v4020 = vmul.f32 %v3961, 1.442695
        %v4021 = vpow.pop %v4020
        %v4022 = vmul.f32 %v3962, 1.442695
        %v4023 = vpow.pop %v4022
        %v4024 = vmul.f32 %v3963, 1.442695
        %v4025 = vpow.pop %v4024
        %v4026 = vmul.f32 %v3964, 1.442695
        %v4027 = vpow.pop %v4026
        %v4028 = vmul.f32 %v3965, 1.442695
        %v4029 = vpow.pop %v4028
        %v4030 = vadd.f32 %v3967, %v3969
        %4031 = vadd.xlane.f32.xlu0 %v4030
        %v4032 = vpop.xlane.xlu0 %4031
        %v4033 = vadd.f32 %v3971, %v3973
        %4034 = vadd.xlane.f32.xlu0 %v4033
        %v4035 = vpop.xlane.xlu0 %4034
        %v4036 = vadd.f32 %v3975, %v3977
        %4037 = vadd.xlane.f32.xlu0 %v4036
        %v4038 = vpop.xlane.xlu0 %4037
        %v4039 = vadd.f32 %v3979, %v3981
        %4040 = vadd.xlane.f32.xlu0 %v4039
        %v4041 = vpop.xlane.xlu0 %4040
        %v4042 = vadd.f32 %v3983, %v3985
        %4043 = vadd.xlane.f32.xlu0 %v4042
        %v4044 = vpop.xlane.xlu0 %4043
        %v4045 = vadd.f32 %v3987, %v3989
        %4046 = vadd.xlane.f32.xlu0 %v4045
        %v4047 = vpop.xlane.xlu0 %4046
        %v4048 = vadd.f32 %v3991, %v3993
        %4049 = vadd.xlane.f32.xlu0 %v4048
        %v4050 = vpop.xlane.xlu0 %4049
        %v4051 = vadd.f32 %v3995, %v3997
        %4052 = vadd.xlane.f32.xlu0 %v4051
        %v4053 = vpop.xlane.xlu0 %4052
        %v4054 = vadd.f32 %v3999, %v4001
        %4055 = vadd.xlane.f32.xlu0 %v4054
        %v4056 = vpop.xlane.xlu0 %4055
        %v4057 = vadd.f32 %v4003, %v4005
        %4058 = vadd.xlane.f32.xlu0 %v4057
        %v4059 = vpop.xlane.xlu0 %4058
        %v4060 = vadd.f32 %v4007, %v4009
        %4061 = vadd.xlane.f32.xlu0 %v4060
        %v4062 = vpop.xlane.xlu0 %4061
        %v4063 = vadd.f32 %v4011, %v4013
        %4064 = vadd.xlane.f32.xlu0 %v4063
        %v4065 = vpop.xlane.xlu0 %4064
        %v4066 = vadd.f32 %v4015, %v4017
        %4067 = vadd.xlane.f32.xlu0 %v4066
        %v4068 = vpop.xlane.xlu0 %4067
        %v4069 = vadd.f32 %v4019, %v4021
        %4070 = vadd.xlane.f32.xlu0 %v4069
        %v4071 = vpop.xlane.xlu0 %4070
        %v4072 = vadd.f32 %v4023, %v4025
        %4073 = vadd.xlane.f32.xlu0 %v4072
        %v4074 = vpop.xlane.xlu0 %4073
        %v4075 = vadd.f32 %v4027, %v4029
        %4076 = vadd.xlane.f32.xlu0 %v4075
        %v4077 = vpop.xlane.xlu0 %4076
        %v4078 = vrcp.pop %v4032
        %v4079 = vrcp.pop %v4035
        %v4080 = vrcp.pop %v4038
        %v4081 = vrcp.pop %v4041
        %v4082 = vrcp.pop %v4044
        %v4083 = vrcp.pop %v4047
        %v4084 = vrcp.pop %v4050
        %v4085 = vrcp.pop %v4053
        %v4086 = vrcp.pop %v4056
        %v4087 = vrcp.pop %v4059
        %v4088 = vrcp.pop %v4062
        %v4089 = vrcp.pop %v4065
        %v4090 = vrcp.pop %v4068
        %v4091 = vrcp.pop %v4071
        %v4092 = vrcp.pop %v4074
        %v4093 = vrcp.pop %v4077
        %v4094 = vmul.f32 %v3967, %v4078
        %v4095 = vmul.f32 %v3969, %v4078
        %v4096 = vmul.f32 %v3971, %v4079
        %v4097 = vmul.f32 %v3973, %v4079
        %v4098 = vmul.f32 %v3975, %v4080
        %v4099 = vmul.f32 %v3977, %v4080
        %v4100 = vmul.f32 %v3979, %v4081
        %v4101 = vmul.f32 %v3981, %v4081
        %v4102 = vmul.f32 %v3983, %v4082
        %v4103 = vmul.f32 %v3985, %v4082
        %v4104 = vmul.f32 %v3987, %v4083
        %v4105 = vmul.f32 %v3989, %v4083
        %v4106 = vmul.f32 %v3991, %v4084
        %v4107 = vmul.f32 %v3993, %v4084
        %v4108 = vmul.f32 %v3995, %v4085
        %v4109 = vmul.f32 %v3997, %v4085
        %v4110 = vmul.f32 %v3999, %v4086
        %v4111 = vmul.f32 %v4001, %v4086
        %v4112 = vmul.f32 %v4003, %v4087
        %v4113 = vmul.f32 %v4005, %v4087
        %v4114 = vmul.f32 %v4007, %v4088
        %v4115 = vmul.f32 %v4009, %v4088
        %v4116 = vmul.f32 %v4011, %v4089
        %v4117 = vmul.f32 %v4013, %v4089
        %v4118 = vmul.f32 %v4015, %v4090
        %v4119 = vmul.f32 %v4017, %v4090
        %v4120 = vmul.f32 %v4019, %v4091
        %v4121 = vmul.f32 %v4021, %v4091
        %v4122 = vmul.f32 %v4023, %v4092
        %v4123 = vmul.f32 %v4025, %v4092
        %v4124 = vmul.f32 %v4027, %v4093
        %v4125 = vmul.f32 %v4029, %v4093
        %v4126 = vpack.c.bf16 %v4096, %v4094
        %v4127 = vpack.c.bf16 %v4097, %v4095
        %v4128 = vpack.c.bf16 %v4100, %v4098
        %v4129 = vpack.c.bf16 %v4101, %v4099
        %v4130 = vpack.c.bf16 %v4104, %v4102
        %v4131 = vpack.c.bf16 %v4105, %v4103
        %v4132 = vpack.c.bf16 %v4108, %v4106
        %v4133 = vpack.c.bf16 %v4109, %v4107
        %v4134 = vpack.c.bf16 %v4112, %v4110
        %v4135 = vpack.c.bf16 %v4113, %v4111
        %v4136 = vpack.c.bf16 %v4116, %v4114
        %v4137 = vpack.c.bf16 %v4117, %v4115
        %v4138 = vpack.c.bf16 %v4120, %v4118
        %v4139 = vpack.c.bf16 %v4121, %v4119
        %v4140 = vpack.c.bf16 %v4124, %v4122
        %v4141 = vpack.c.bf16 %v4125, %v4123
        %4142 = vrot.lane.b32.xlu0 %v2232, 32
        %v4143 = vpop.permute.xlu0 %4142
        %4144 = vrot.lane.b32.xlu0 %v2233, 32
        %v4145 = vpop.permute.xlu0 %4144
        %4146 = vrot.lane.b32.xlu0 %v2234, 32
        %v4147 = vpop.permute.xlu0 %4146
        %4148 = vrot.lane.b32.xlu0 %v2235, 32
        %v4149 = vpop.permute.xlu0 %4148
        %4150 = vrot.lane.b32.xlu0 %v2236, 32
        %v4151 = vpop.permute.xlu0 %4150
        %4152 = vrot.lane.b32.xlu0 %v2237, 32
        %v4153 = vpop.permute.xlu0 %4152
        %4154 = vrot.lane.b32.xlu0 %v2238, 32
        %v4155 = vpop.permute.xlu0 %4154
        %4156 = vrot.lane.b32.xlu0 %v2239, 32
        %v4157 = vpop.permute.xlu0 %4156
        %4158 = vrot.lane.b32.xlu0 %v2240, 32
        %v4159 = vpop.permute.xlu0 %4158
        %4160 = vrot.lane.b32.xlu0 %v2241, 32
        %v4161 = vpop.permute.xlu0 %4160
        %4162 = vrot.lane.b32.xlu0 %v2242, 32
        %v4163 = vpop.permute.xlu0 %4162
        %4164 = vrot.lane.b32.xlu0 %v2243, 32
        %v4165 = vpop.permute.xlu0 %4164
        %4166 = vrot.lane.b32.xlu0 %v2244, 32
        %v4167 = vpop.permute.xlu0 %4166
        %4168 = vrot.lane.b32.xlu0 %v2245, 32
        %v4169 = vpop.permute.xlu0 %4168
        %4170 = vrot.lane.b32.xlu0 %v2246, 32
        %v4171 = vpop.permute.xlu0 %4170
        %4172 = vrot.lane.b32.xlu0 %v2247, 32
        %v4173 = vpop.permute.xlu0 %4172
        %4190 = vmatprep.subr.bf16.mxu0 0
        %4191 = vmatpush1.bf16.msra.mxu0 %v4143
        %4192 = vmatprep.subr.bf16.mxu0 0
        %4193 = vmatpush1.bf16.msra.mxu0 %v4145
        %4194 = vmatprep.subr.bf16.mxu0 0
        %4195 = vmatpush1.bf16.msra.mxu0 %v4147
        %4196 = vmatprep.subr.bf16.mxu0 0
        %4197 = vmatpush1.bf16.msra.mxu0 %v4149
        %4198 = vmatprep.subr.bf16.mxu0 0
        %4199 = vmatpush1.bf16.msra.mxu0 %v4151
        %4200 = vmatprep.subr.bf16.mxu0 0
        %4201 = vmatpush1.bf16.msra.mxu0 %v4153
        %4202 = vmatprep.subr.bf16.mxu0 0
        %4203 = vmatpush1.bf16.msra.mxu0 %v4155
        %4204 = vmatprep.subr.bf16.mxu0 0
        %4205 = vmatpush1.bf16.msra.mxu0 %v4157
        %4206 = vmatprep.subr.bf16.mxu0 0
        %4207 = vmatpush1.bf16.msra.mxu0 %v4159
        %4208 = vmatprep.subr.bf16.mxu0 0
        %4209 = vmatpush1.bf16.msra.mxu0 %v4161
        %4210 = vmatprep.subr.bf16.mxu0 0
        %4211 = vmatpush1.bf16.msra.mxu0 %v4163
        %4212 = vmatprep.subr.bf16.mxu0 0
        %4213 = vmatpush1.bf16.msra.mxu0 %v4165
        %4214 = vmatprep.subr.bf16.mxu0 0
        %4215 = vmatpush1.bf16.msra.mxu0 %v4167
        %4216 = vmatprep.subr.bf16.mxu0 0
        %4217 = vmatpush1.bf16.msra.mxu0 %v4169
        %4218 = vmatprep.subr.bf16.mxu0 0
        %4219 = vmatpush1.bf16.msra.mxu0 %v4171
        %4220 = vmatprep.subr.bf16.mxu0 0
        %4221 = vmatpush1.bf16.msra.mxu0 %v4173
        %4222 = vmatprep.mubr.bf16.mxu0 %v4127
        %4223 = vmatmul.mubr.bf16.gmra.mrb[0].mxu0 %v4126
        %v4224 = vpop.f32.mrb[0].mxu0
        %v4225 = vadd.f32 0.0, %v4224
        %v4226 = vpop.f32.mrb[0].mxu0
        %v4227 = vpop.f32.mrb[0].mxu0
        %v4228 = vadd.f32 0.0, %v4227
        %v4229 = vpop.f32.mrb[0].mxu0
        %4230 = vmatprep.mubr.bf16.mxu0 %v4129
        %4231 = vmatmul.mubr.bf16.gmra.mrb[0].mxu0 %v4128
        %v4232 = vpop.f32.mrb[0].mxu0
        %v4233 = vadd.f32 0.0, %v4232
        %v4234 = vpop.f32.mrb[0].mxu0
        %v4235 = vpop.f32.mrb[0].mxu0
        %v4236 = vadd.f32 0.0, %v4235
        %v4237 = vpop.f32.mrb[0].mxu0
        %4238 = vmatprep.mubr.bf16.mxu0 %v4131
        %4239 = vmatmul.mubr.bf16.gmra.mrb[0].mxu0 %v4130
        %v4240 = vpop.f32.mrb[0].mxu0
        %v4241 = vadd.f32 0.0, %v4240
        %v4242 = vpop.f32.mrb[0].mxu0
        %v4243 = vpop.f32.mrb[0].mxu0
        %v4244 = vadd.f32 0.0, %v4243
        %v4245 = vpop.f32.mrb[0].mxu0
        %4246 = vmatprep.mubr.bf16.mxu0 %v4133
        %4247 = vmatmul.mubr.bf16.gmra.mrb[0].mxu0 %v4132
        %v4248 = vpop.f32.mrb[0].mxu0
        %v4249 = vadd.f32 0.0, %v4248
        %v4250 = vpop.f32.mrb[0].mxu0
        %v4251 = vpop.f32.mrb[0].mxu0
        %v4252 = vadd.f32 0.0, %v4251
        %v4253 = vpop.f32.mrb[0].mxu0
        %4254 = vmatprep.mubr.bf16.mxu0 %v4135
        %4255 = vmatmul.mubr.bf16.gmra.mrb[0].mxu0 %v4134
        %v4256 = vpop.f32.mrb[0].mxu0
        %v4257 = vadd.f32 0.0, %v4256
        %v4258 = vpop.f32.mrb[0].mxu0
        %v4259 = vpop.f32.mrb[0].mxu0
        %v4260 = vadd.f32 0.0, %v4259
        %v4261 = vpop.f32.mrb[0].mxu0
        %4262 = vmatprep.mubr.bf16.mxu0 %v4137
        %4263 = vmatmul.mubr.bf16.gmra.mrb[0].mxu0 %v4136
        %v4264 = vpop.f32.mrb[0].mxu0
        %v4265 = vadd.f32 0.0, %v4264
        %v4266 = vpop.f32.mrb[0].mxu0
        %v4267 = vpop.f32.mrb[0].mxu0
        %v4268 = vadd.f32 0.0, %v4267
        %v4269 = vpop.f32.mrb[0].mxu0
        %4270 = vmatprep.mubr.bf16.mxu0 %v4139
        %4271 = vmatmul.mubr.bf16.gmra.mrb[0].mxu0 %v4138
        %v4272 = vpop.f32.mrb[0].mxu0
        %v4273 = vadd.f32 0.0, %v4272
        %v4274 = vpop.f32.mrb[0].mxu0
        %v4275 = vpop.f32.mrb[0].mxu0
        %v4276 = vadd.f32 0.0, %v4275
        %v4277 = vpop.f32.mrb[0].mxu0
        %4278 = vmatprep.mubr.bf16.mxu0 %v4141
        %4279 = vmatmul.mubr.bf16.gmra.mrb[0].mxu0 %v4140
        %v4280 = vpop.f32.mrb[0].mxu0
        %v4281 = vadd.f32 0.0, %v4280
        %v4282 = vpop.f32.mrb[0].mxu0
        %v4283 = vpop.f32.mrb[0].mxu0
        %v4284 = vadd.f32 0.0, %v4283
        %v4285 = vpop.f32.mrb[0].mxu0
        %4286 = vdwg.mxu0
        %4303 = vrot.lane.b32.xlu0 %v2957, 32
        %v4304 = vpop.permute.xlu0 %4303
        %4305 = vrot.lane.b32.xlu0 %v2960, 32
        %v4306 = vpop.permute.xlu0 %4305
        %4307 = vrot.lane.b32.xlu0 %v2965, 32
        %v4308 = vpop.permute.xlu0 %4307
        %4309 = vrot.lane.b32.xlu0 %v2968, 32
        %v4310 = vpop.permute.xlu0 %4309
        %4311 = vrot.lane.b32.xlu0 %v2973, 32
        %v4312 = vpop.permute.xlu0 %4311
        %4313 = vrot.lane.b32.xlu0 %v2976, 32
        %v4314 = vpop.permute.xlu0 %4313
        %4315 = vrot.lane.b32.xlu0 %v2981, 32
        %v4316 = vpop.permute.xlu0 %4315
        %4317 = vrot.lane.b32.xlu0 %v2984, 32
        %v4318 = vpop.permute.xlu0 %4317
        %4319 = vrot.lane.b32.xlu0 %v2989, 32
        %v4320 = vpop.permute.xlu0 %4319
        %4321 = vrot.lane.b32.xlu0 %v2992, 32
        %v4322 = vpop.permute.xlu0 %4321
        %4323 = vrot.lane.b32.xlu0 %v2997, 32
        %v4324 = vpop.permute.xlu0 %4323
        %4325 = vrot.lane.b32.xlu0 %v3000, 32
        %v4326 = vpop.permute.xlu0 %4325
        %4327 = vrot.lane.b32.xlu0 %v3005, 32
        %v4328 = vpop.permute.xlu0 %4327
        %4329 = vrot.lane.b32.xlu0 %v3008, 32
        %v4330 = vpop.permute.xlu0 %4329
        %4331 = vrot.lane.b32.xlu0 %v3013, 32
        %v4332 = vpop.permute.xlu0 %4331
        %4333 = vrot.lane.b32.xlu0 %v3016, 32
        %v4334 = vpop.permute.xlu0 %4333
        %4367 = vrot.lane.b32.xlu0 %v3591, 64
        %v4368 = vpop.permute.xlu0 %4367
        %4369 = vrot.lane.b32.xlu0 %v3594, 64
        %v4370 = vpop.permute.xlu0 %4369
        %4371 = vrot.lane.b32.xlu0 %v3599, 64
        %v4372 = vpop.permute.xlu0 %4371
        %4373 = vrot.lane.b32.xlu0 %v3602, 64
        %v4374 = vpop.permute.xlu0 %4373
        %4375 = vrot.lane.b32.xlu0 %v3607, 64
        %v4376 = vpop.permute.xlu0 %4375
        %4377 = vrot.lane.b32.xlu0 %v3610, 64
        %v4378 = vpop.permute.xlu0 %4377
        %4379 = vrot.lane.b32.xlu0 %v3615, 64
        %v4380 = vpop.permute.xlu0 %4379
        %4381 = vrot.lane.b32.xlu0 %v3618, 64
        %v4382 = vpop.permute.xlu0 %4381
        %4383 = vrot.lane.b32.xlu0 %v3623, 64
        %v4384 = vpop.permute.xlu0 %4383
        %4385 = vrot.lane.b32.xlu0 %v3626, 64
        %v4386 = vpop.permute.xlu0 %4385
        %4387 = vrot.lane.b32.xlu0 %v3631, 64
        %v4388 = vpop.permute.xlu0 %4387
        %4389 = vrot.lane.b32.xlu0 %v3634, 64
        %v4390 = vpop.permute.xlu0 %4389
        %4391 = vrot.lane.b32.xlu0 %v3639, 64
        %v4392 = vpop.permute.xlu0 %4391
        %4393 = vrot.lane.b32.xlu0 %v3642, 64
        %v4394 = vpop.permute.xlu0 %4393
        %4395 = vrot.lane.b32.xlu0 %v3647, 64
        %v4396 = vpop.permute.xlu0 %4395
        %4397 = vrot.lane.b32.xlu0 %v3650, 64
        %v4398 = vpop.permute.xlu0 %4397
        %4431 = vrot.lane.b32.xlu0 %v4225, 96
        %v4432 = vpop.permute.xlu0 %4431
        %4433 = vrot.lane.b32.xlu0 %v4228, 96
        %v4434 = vpop.permute.xlu0 %4433
        %4435 = vrot.lane.b32.xlu0 %v4233, 96
        %v4436 = vpop.permute.xlu0 %4435
        %4437 = vrot.lane.b32.xlu0 %v4236, 96
        %v4438 = vpop.permute.xlu0 %4437
        %4439 = vrot.lane.b32.xlu0 %v4241, 96
        %v4440 = vpop.permute.xlu0 %4439
        %4441 = vrot.lane.b32.xlu0 %v4244, 96
        %v4442 = vpop.permute.xlu0 %4441
        %4443 = vrot.lane.b32.xlu0 %v4249, 96
        %v4444 = vpop.permute.xlu0 %4443
        %4445 = vrot.lane.b32.xlu0 %v4252, 96
        %v4446 = vpop.permute.xlu0 %4445
        %4447 = vrot.lane.b32.xlu0 %v4257, 96
        %v4448 = vpop.permute.xlu0 %4447
        %4449 = vrot.lane.b32.xlu0 %v4260, 96
        %v4450 = vpop.permute.xlu0 %4449
        %4451 = vrot.lane.b32.xlu0 %v4265, 96
        %v4452 = vpop.permute.xlu0 %4451
        %4453 = vrot.lane.b32.xlu0 %v4268, 96
        %v4454 = vpop.permute.xlu0 %4453
        %4455 = vrot.lane.b32.xlu0 %v4273, 96
        %v4456 = vpop.permute.xlu0 %4455
        %4457 = vrot.lane.b32.xlu0 %v4276, 96
        %v4458 = vpop.permute.xlu0 %4457
        %4459 = vrot.lane.b32.xlu0 %v4281, 96
        %v4460 = vpop.permute.xlu0 %4459
        %4461 = vrot.lane.b32.xlu0 %v4284, 96
        %v4462 = vpop.permute.xlu0 %4461
        %v4479 = vsel %vm1790, %v2283, %v4304
        %v4480 = vsel %vm1790, %v2286, %v4306
        %v4481 = vsel %vm1790, %v2291, %v4308
        %v4482 = vsel %vm1790, %v2294, %v4310
        %v4483 = vsel %vm1790, %v2299, %v4312
        %v4484 = vsel %vm1790, %v2302, %v4314
        %v4485 = vsel %vm1790, %v2307, %v4316
        %v4486 = vsel %vm1790, %v2310, %v4318
        %v4487 = vsel %vm1790, %v2315, %v4320
        %v4488 = vsel %vm1790, %v2318, %v4322
        %v4489 = vsel %vm1790, %v2323, %v4324
        %v4490 = vsel %vm1790, %v2326, %v4326
        %v4491 = vsel %vm1790, %v2331, %v4328
        %v4492 = vsel %vm1790, %v2334, %v4330
        %v4493 = vsel %vm1790, %v2339, %v4332
        %v4494 = vsel %vm1790, %v2342, %v4334
        %vm4495 = vcmask 523264
        %v4496 = vsel %vm4495, %v4479, %v4368
        %v4497 = vsel %vm4495, %v4480, %v4370
        %v4498 = vsel %vm4495, %v4481, %v4372
        %v4499 = vsel %vm4495, %v4482, %v4374
        %v4500 = vsel %vm4495, %v4483, %v4376
        %v4501 = vsel %vm4495, %v4484, %v4378
        %v4502 = vsel %vm4495, %v4485, %v4380
        %v4503 = vsel %vm4495, %v4486, %v4382
        %v4504 = vsel %vm4495, %v4487, %v4384
        %v4505 = vsel %vm4495, %v4488, %v4386
        %v4506 = vsel %vm4495, %v4489, %v4388
        %v4507 = vsel %vm4495, %v4490, %v4390
        %v4508 = vsel %vm4495, %v4491, %v4392
        %v4509 = vsel %vm4495, %v4492, %v4394
        %v4510 = vsel %vm4495, %v4493, %v4396
        %v4511 = vsel %vm4495, %v4494, %v4398
        %vm4512 = vcmask 785408
        %v4513 = vsel %vm4512, %v4496, %v4432
        %v4514 = vsel %vm4512, %v4497, %v4434
        %v4515 = vsel %vm4512, %v4498, %v4436
        %v4516 = vsel %vm4512, %v4499, %v4438
        %v4517 = vsel %vm4512, %v4500, %v4440
        %v4518 = vsel %vm4512, %v4501, %v4442
        %v4519 = vsel %vm4512, %v4502, %v4444
        %v4520 = vsel %vm4512, %v4503, %v4446
        %v4521 = vsel %vm4512, %v4504, %v4448
        %v4522 = vsel %vm4512, %v4505, %v4450
        %v4523 = vsel %vm4512, %v4506, %v4452
        %v4524 = vsel %vm4512, %v4507, %v4454
        %v4525 = vsel %vm4512, %v4508, %v4456
        %v4526 = vsel %vm4512, %v4509, %v4458
        %v4527 = vsel %vm4512, %v4510, %v4460
        %v4528 = vsel %vm4512, %v4511, %v4462
        %v4529 = vpack.c.bf16 %v4514, %v4513
        %v4530 = vpack.c.bf16 %v4516, %v4515
        %v4531 = vpack.c.bf16 %v4518, %v4517
        %v4532 = vpack.c.bf16 %v4520, %v4519
        %v4533 = vpack.c.bf16 %v4522, %v4521
        %v4534 = vpack.c.bf16 %v4524, %v4523
        %v4535 = vpack.c.bf16 %v4526, %v4525
        %v4536 = vpack.c.bf16 %v4528, %v4527
        %v4537 = vld [vmem:[#allocation9] sm:$0xf]
        %v4538 = vld [vmem:[#allocation9 + $0x4] sm:$0xf]
        %v4539 = vld [vmem:[#allocation9 + $0x8] sm:$0xf]
        %v4540 = vld [vmem:[#allocation9 + $0xc] sm:$0xf]
        %v4541 = vld [vmem:[#allocation9 + $0x10] sm:$0xf]
        %v4542 = vld [vmem:[#allocation9 + $0x14] sm:$0xf]
        %v4543 = vld [vmem:[#allocation9 + $0x18] sm:$0xf]
        %v4544 = vld [vmem:[#allocation9 + $0x1c] sm:$0xf]
        %v4545 = vld [vmem:[#allocation9 + $0x20] sm:$0xf]
        %v4546 = vld [vmem:[#allocation9 + $0x24] sm:$0xf]
        %v4547 = vld [vmem:[#allocation9 + $0x28] sm:$0xf]
        %v4548 = vld [vmem:[#allocation9 + $0x2c] sm:$0xf]
        %v4549 = vld [vmem:[#allocation9 + $0x30] sm:$0xf]
        %v4550 = vld [vmem:[#allocation9 + $0x34] sm:$0xf]
        %v4551 = vld [vmem:[#allocation9 + $0x38] sm:$0xf]
        %v4552 = vld [vmem:[#allocation9 + $0x3c] sm:$0xf]
        %v4553 = vld [vmem:[%s5] sm:$0x1]
        %v4555 = vlaneseq
        %v4556 = vshrl.u32 %v4555, 7
        %v4557 = vsub.s32 0, %v4556
        %v4558 = vrot.slane %v4553, %v4557
        %v4576 = vunpack.c.l.b16 %v4537
        %v4577 = vunpack.c.l.b16 %v4538
        %v4578 = vunpack.c.l.b16 %v4539
        %v4579 = vunpack.c.l.b16 %v4540
        %v4580 = vunpack.c.l.b16 %v4541
        %v4581 = vunpack.c.l.b16 %v4542
        %v4582 = vunpack.c.l.b16 %v4543
        %v4583 = vunpack.c.l.b16 %v4544
        %v4584 = vunpack.c.l.b16 %v4545
        %v4585 = vunpack.c.l.b16 %v4546
        %v4586 = vunpack.c.l.b16 %v4547
        %v4587 = vunpack.c.l.b16 %v4548
        %v4588 = vunpack.c.l.b16 %v4549
        %v4589 = vunpack.c.l.b16 %v4550
        %v4590 = vunpack.c.l.b16 %v4551
        %v4591 = vunpack.c.l.b16 %v4552
        %v4592 = vpack.c.b16 %v4577, %v4576
        %v4593 = vpack.c.b16 %v4579, %v4578
        %v4594 = vpack.c.b16 %v4581, %v4580
        %v4595 = vpack.c.b16 %v4583, %v4582
        %v4596 = vpack.c.b16 %v4585, %v4584
        %v4597 = vpack.c.b16 %v4587, %v4586
        %v4598 = vpack.c.b16 %v4589, %v4588
        %v4599 = vpack.c.b16 %v4591, %v4590
        %4608 = vmatprep.subr.bf16.mxu0 0
        %4609 = vmatpush1.bf16.msra.mxu0 %v4592
        %4610 = vmatprep.subr.bf16.mxu0 0
        %4611 = vmatpush1.bf16.msra.mxu0 %v4593
        %4612 = vmatprep.subr.bf16.mxu0 0
        %4613 = vmatpush1.bf16.msra.mxu0 %v4594
        %4614 = vmatprep.subr.bf16.mxu0 0
        %4615 = vmatpush1.bf16.msra.mxu0 %v4595
        %4616 = vmatprep.subr.bf16.mxu0 0
        %4617 = vmatpush1.bf16.msra.mxu0 %v4596
        %4618 = vmatprep.subr.bf16.mxu0 0
        %4619 = vmatpush1.bf16.msra.mxu0 %v4597
        %4620 = vmatprep.subr.bf16.mxu0 0
        %4621 = vmatpush1.bf16.msra.mxu0 %v4598
        %4622 = vmatprep.subr.bf16.mxu0 0
        %4623 = vmatpush1.bf16.msra.mxu0 %v4599
        %4624 = vmatprep.subr.bf16.mxu0 0
        %4625 = vmatpush1.bf16.msra.mxu0 0
        %4626 = vmatprep.subr.bf16.mxu0 0
        %4627 = vmatpush1.bf16.msra.mxu0 0
        %4628 = vmatprep.subr.bf16.mxu0 0
        %4629 = vmatpush1.bf16.msra.mxu0 0
        %4630 = vmatprep.subr.bf16.mxu0 0
        %4631 = vmatpush1.bf16.msra.mxu0 0
        %4632 = vmatprep.subr.bf16.mxu0 0
        %4633 = vmatpush1.bf16.msra.mxu0 0
        %4634 = vmatprep.subr.bf16.mxu0 0
        %4635 = vmatpush1.bf16.msra.mxu0 0
        %4636 = vmatprep.subr.bf16.mxu0 0
        %4637 = vmatpush1.bf16.msra.mxu0 0
        %4638 = vmatprep.subr.bf16.mxu0 0
        %4639 = vmatpush1.bf16.msra.mxu0 0
        %4640 = vmatprep.mubr.bf16.mxu0 0
        %4641 = vmatmul.mubr.bf16.gmra.mrb[0].mxu0 %v4529
        %v4642 = vpop.f32.mrb[0].mxu0
        %v4643 = vadd.f32 %v4558, %v4642
        %v4644 = vpop.f32.mrb[0].mxu0
        %v4645 = vpop.f32.mrb[0].mxu0
        %v4646 = vadd.f32 %v4558, %v4645
        %v4647 = vpop.f32.mrb[0].mxu0
        %4648 = vmatprep.mubr.bf16.mxu0 0
        %4649 = vmatmul.mubr.bf16.gmra.mrb[0].mxu0 %v4530
        %v4650 = vpop.f32.mrb[0].mxu0
        %v4651 = vadd.f32 %v4558, %v4650
        %v4652 = vpop.f32.mrb[0].mxu0
        %v4653 = vpop.f32.mrb[0].mxu0
        %v4654 = vadd.f32 %v4558, %v4653
        %v4655 = vpop.f32.mrb[0].mxu0
        %4656 = vmatprep.mubr.bf16.mxu0 0
        %4657 = vmatmul.mubr.bf16.gmra.mrb[0].mxu0 %v4531
        %v4658 = vpop.f32.mrb[0].mxu0
        %v4659 = vadd.f32 %v4558, %v4658
        %v4660 = vpop.f32.mrb[0].mxu0
        %v4661 = vpop.f32.mrb[0].mxu0
        %v4662 = vadd.f32 %v4558, %v4661
        %v4663 = vpop.f32.mrb[0].mxu0
        %4664 = vmatprep.mubr.bf16.mxu0 0
        %4665 = vmatmul.mubr.bf16.gmra.mrb[0].mxu0 %v4532
        %v4666 = vpop.f32.mrb[0].mxu0
        %v4667 = vadd.f32 %v4558, %v4666
        %v4668 = vpop.f32.mrb[0].mxu0
        %v4669 = vpop.f32.mrb[0].mxu0
        %v4670 = vadd.f32 %v4558, %v4669
        %v4671 = vpop.f32.mrb[0].mxu0
        %4672 = vmatprep.mubr.bf16.mxu0 0
        %4673 = vmatmul.mubr.bf16.gmra.mrb[0].mxu0 %v4533
        %v4674 = vpop.f32.mrb[0].mxu0
        %v4675 = vadd.f32 %v4558, %v4674
        %v4676 = vpop.f32.mrb[0].mxu0
        %v4677 = vpop.f32.mrb[0].mxu0
        %v4678 = vadd.f32 %v4558, %v4677
        %v4679 = vpop.f32.mrb[0].mxu0
        %4680 = vmatprep.mubr.bf16.mxu0 0
        %4681 = vmatmul.mubr.bf16.gmra.mrb[0].mxu0 %v4534
        %v4682 = vpop.f32.mrb[0].mxu0
        %v4683 = vadd.f32 %v4558, %v4682
        %v4684 = vpop.f32.mrb[0].mxu0
        %v4685 = vpop.f32.mrb[0].mxu0
        %v4686 = vadd.f32 %v4558, %v4685
        %v4687 = vpop.f32.mrb[0].mxu0
        %4688 = vmatprep.mubr.bf16.mxu0 0
        %4689 = vmatmul.mubr.bf16.gmra.mrb[0].mxu0 %v4535
        %v4690 = vpop.f32.mrb[0].mxu0
        %v4691 = vadd.f32 %v4558, %v4690
        %v4692 = vpop.f32.mrb[0].mxu0
        %v4693 = vpop.f32.mrb[0].mxu0
        %v4694 = vadd.f32 %v4558, %v4693
        %v4695 = vpop.f32.mrb[0].mxu0
        %4696 = vmatprep.mubr.bf16.mxu0 0
        %4697 = vmatmul.mubr.bf16.gmra.mrb[0].mxu0 %v4536
        %v4698 = vpop.f32.mrb[0].mxu0
        %v4699 = vadd.f32 %v4558, %v4698
        %v4700 = vpop.f32.mrb[0].mxu0
        %v4701 = vpop.f32.mrb[0].mxu0
        %v4702 = vadd.f32 %v4558, %v4701
        %v4703 = vpop.f32.mrb[0].mxu0
        %4704 = vdwg.mxu0
        %v4705 = vadd.f32 %v1344, %v4643
        %v4706 = vadd.f32 %v1345, %v4646
        %v4707 = vadd.f32 %v1346, %v4651
        %v4708 = vadd.f32 %v1347, %v4654
        %v4709 = vadd.f32 %v1348, %v4659
        %v4710 = vadd.f32 %v1349, %v4662
        %v4711 = vadd.f32 %v1350, %v4667
        %v4712 = vadd.f32 %v1351, %v4670
        %v4713 = vadd.f32 %v1352, %v4675
        %v4714 = vadd.f32 %v1353, %v4678
        %v4715 = vadd.f32 %v1354, %v4683
        %v4716 = vadd.f32 %v1355, %v4686
        %v4717 = vadd.f32 %v1356, %v4691
        %v4718 = vadd.f32 %v1357, %v4694
        %v4719 = vadd.f32 %v1358, %v4699
        %v4720 = vadd.f32 %v1359, %v4702
        %v4721 = vld [vmem:[%s6] sm:$0x1]
        %v4722 = vld [vmem:[%s7] sm:$0x1]
        %4723 = vadd.xlane.f32.xlu0 %v4705
        %v4724 = vpop.xlane.xlu0 %4723
        %4725 = vadd.xlane.f32.xlu0 %v4706
        %v4726 = vpop.xlane.xlu0 %4725
        %4727 = vadd.xlane.f32.xlu0 %v4707
        %v4728 = vpop.xlane.xlu0 %4727
        %4729 = vadd.xlane.f32.xlu0 %v4708
        %v4730 = vpop.xlane.xlu0 %4729
        %4731 = vadd.xlane.f32.xlu0 %v4709
        %v4732 = vpop.xlane.xlu0 %4731
        %4733 = vadd.xlane.f32.xlu0 %v4710
        %v4734 = vpop.xlane.xlu0 %4733
        %4735 = vadd.xlane.f32.xlu0 %v4711
        %v4736 = vpop.xlane.xlu0 %4735
        %4737 = vadd.xlane.f32.xlu0 %v4712
        %v4738 = vpop.xlane.xlu0 %4737
        %4739 = vadd.xlane.f32.xlu0 %v4713
        %v4740 = vpop.xlane.xlu0 %4739
        %4741 = vadd.xlane.f32.xlu0 %v4714
        %v4742 = vpop.xlane.xlu0 %4741
        %4743 = vadd.xlane.f32.xlu0 %v4715
        %v4744 = vpop.xlane.xlu0 %4743
        %4745 = vadd.xlane.f32.xlu0 %v4716
        %v4746 = vpop.xlane.xlu0 %4745
        %4747 = vadd.xlane.f32.xlu0 %v4717
        %v4748 = vpop.xlane.xlu0 %4747
        %4749 = vadd.xlane.f32.xlu0 %v4718
        %v4750 = vpop.xlane.xlu0 %4749
        %4751 = vadd.xlane.f32.xlu0 %v4719
        %v4752 = vpop.xlane.xlu0 %4751
        %4753 = vadd.xlane.f32.xlu0 %v4720
        %v4754 = vpop.xlane.xlu0 %4753
        %v4755 = vmul.f32 %v4724, %v1392
        %v4756 = vmul.f32 %v4726, %v1392
        %v4757 = vmul.f32 %v4728, %v1392
        %v4758 = vmul.f32 %v4730, %v1392
        %v4759 = vmul.f32 %v4732, %v1392
        %v4760 = vmul.f32 %v4734, %v1392
        %v4761 = vmul.f32 %v4736, %v1392
        %v4762 = vmul.f32 %v4738, %v1392
        %v4763 = vmul.f32 %v4740, %v1392
        %v4764 = vmul.f32 %v4742, %v1392
        %v4765 = vmul.f32 %v4744, %v1392
        %v4766 = vmul.f32 %v4746, %v1392
        %v4767 = vmul.f32 %v4748, %v1392
        %v4768 = vmul.f32 %v4750, %v1392
        %v4769 = vmul.f32 %v4752, %v1392
        %v4770 = vmul.f32 %v4754, %v1392
        %v4771 = vsub.f32 %v4705, %v4755
        %v4772 = vsub.f32 %v4706, %v4756
        %v4773 = vsub.f32 %v4707, %v4757
        %v4774 = vsub.f32 %v4708, %v4758
        %v4775 = vsub.f32 %v4709, %v4759
        %v4776 = vsub.f32 %v4710, %v4760
        %v4777 = vsub.f32 %v4711, %v4761
        %v4778 = vsub.f32 %v4712, %v4762
        %v4779 = vsub.f32 %v4713, %v4763
        %v4780 = vsub.f32 %v4714, %v4764
        %v4781 = vsub.f32 %v4715, %v4765
        %v4782 = vsub.f32 %v4716, %v4766
        %v4783 = vsub.f32 %v4717, %v4767
        %v4784 = vsub.f32 %v4718, %v4768
        %v4785 = vsub.f32 %v4719, %v4769
        %v4786 = vsub.f32 %v4720, %v4770
        %v4787 = vmul.f32 %v4771, %v4771
        %v4788 = vmul.f32 %v4772, %v4772
        %v4789 = vmul.f32 %v4773, %v4773
        %v4790 = vmul.f32 %v4774, %v4774
        %v4791 = vmul.f32 %v4775, %v4775
        %v4792 = vmul.f32 %v4776, %v4776
        %v4793 = vmul.f32 %v4777, %v4777
        %v4794 = vmul.f32 %v4778, %v4778
        %v4795 = vmul.f32 %v4779, %v4779
        %v4796 = vmul.f32 %v4780, %v4780
        %v4797 = vmul.f32 %v4781, %v4781
        %v4798 = vmul.f32 %v4782, %v4782
        %v4799 = vmul.f32 %v4783, %v4783
        %v4800 = vmul.f32 %v4784, %v4784
        %v4801 = vmul.f32 %v4785, %v4785
        %v4802 = vmul.f32 %v4786, %v4786
        %4803 = vadd.xlane.f32.xlu0 %v4787
        %v4804 = vpop.xlane.xlu0 %4803
        %4805 = vadd.xlane.f32.xlu0 %v4788
        %v4806 = vpop.xlane.xlu0 %4805
        %4807 = vadd.xlane.f32.xlu0 %v4789
        %v4808 = vpop.xlane.xlu0 %4807
        %4809 = vadd.xlane.f32.xlu0 %v4790
        %v4810 = vpop.xlane.xlu0 %4809
        %4811 = vadd.xlane.f32.xlu0 %v4791
        %v4812 = vpop.xlane.xlu0 %4811
        %4813 = vadd.xlane.f32.xlu0 %v4792
        %v4814 = vpop.xlane.xlu0 %4813
        %4815 = vadd.xlane.f32.xlu0 %v4793
        %v4816 = vpop.xlane.xlu0 %4815
        %4817 = vadd.xlane.f32.xlu0 %v4794
        %v4818 = vpop.xlane.xlu0 %4817
        %4819 = vadd.xlane.f32.xlu0 %v4795
        %v4820 = vpop.xlane.xlu0 %4819
        %4821 = vadd.xlane.f32.xlu0 %v4796
        %v4822 = vpop.xlane.xlu0 %4821
        %4823 = vadd.xlane.f32.xlu0 %v4797
        %v4824 = vpop.xlane.xlu0 %4823
        %4825 = vadd.xlane.f32.xlu0 %v4798
        %v4826 = vpop.xlane.xlu0 %4825
        %4827 = vadd.xlane.f32.xlu0 %v4799
        %v4828 = vpop.xlane.xlu0 %4827
        %4829 = vadd.xlane.f32.xlu0 %v4800
        %v4830 = vpop.xlane.xlu0 %4829
        %4831 = vadd.xlane.f32.xlu0 %v4801
        %v4832 = vpop.xlane.xlu0 %4831
        %4833 = vadd.xlane.f32.xlu0 %v4802
        %v4834 = vpop.xlane.xlu0 %4833
        %v4835 = vmul.f32 %v4804, %v1392
        %v4836 = vmul.f32 %v4806, %v1392
        %v4837 = vmul.f32 %v4808, %v1392
        %v4838 = vmul.f32 %v4810, %v1392
        %v4839 = vmul.f32 %v4812, %v1392
        %v4840 = vmul.f32 %v4814, %v1392
        %v4841 = vmul.f32 %v4816, %v1392
        %v4842 = vmul.f32 %v4818, %v1392
        %v4843 = vmul.f32 %v4820, %v1392
        %v4844 = vmul.f32 %v4822, %v1392
        %v4845 = vmul.f32 %v4824, %v1392
        %v4846 = vmul.f32 %v4826, %v1392
        %v4847 = vmul.f32 %v4828, %v1392
        %v4848 = vmul.f32 %v4830, %v1392
        %v4849 = vmul.f32 %v4832, %v1392
        %v4850 = vmul.f32 %v4834, %v1392
        %v4851 = vadd.f32 %v4835, 1e-05
        %v4852 = vadd.f32 %v4836, 1e-05
        %v4853 = vadd.f32 %v4837, 1e-05
        %v4854 = vadd.f32 %v4838, 1e-05
        %v4855 = vadd.f32 %v4839, 1e-05
        %v4856 = vadd.f32 %v4840, 1e-05
        %v4857 = vadd.f32 %v4841, 1e-05
        %v4858 = vadd.f32 %v4842, 1e-05
        %v4859 = vadd.f32 %v4843, 1e-05
        %v4860 = vadd.f32 %v4844, 1e-05
        %v4861 = vadd.f32 %v4845, 1e-05
        %v4862 = vadd.f32 %v4846, 1e-05
        %v4863 = vadd.f32 %v4847, 1e-05
        %v4864 = vadd.f32 %v4848, 1e-05
        %v4865 = vadd.f32 %v4849, 1e-05
        %v4866 = vadd.f32 %v4850, 1e-05
        %v4867 = vrsqrt.pop %v4851
        %v4868 = vrsqrt.pop %v4852
        %v4869 = vrsqrt.pop %v4853
        %v4870 = vrsqrt.pop %v4854
        %v4871 = vrsqrt.pop %v4855
        %v4872 = vrsqrt.pop %v4856
        %v4873 = vrsqrt.pop %v4857
        %v4874 = vrsqrt.pop %v4858
        %v4875 = vrsqrt.pop %v4859
        %v4876 = vrsqrt.pop %v4860
        %v4877 = vrsqrt.pop %v4861
        %v4878 = vrsqrt.pop %v4862
        %v4879 = vrsqrt.pop %v4863
        %v4880 = vrsqrt.pop %v4864
        %v4881 = vrsqrt.pop %v4865
        %v4882 = vrsqrt.pop %v4866
        %v4883 = vmul.f32 %v4771, %v4867
        %v4884 = vmul.f32 %v4772, %v4868
        %v4885 = vmul.f32 %v4773, %v4869
        %v4886 = vmul.f32 %v4774, %v4870
        %v4887 = vmul.f32 %v4775, %v4871
        %v4888 = vmul.f32 %v4776, %v4872
        %v4889 = vmul.f32 %v4777, %v4873
        %v4890 = vmul.f32 %v4778, %v4874
        %v4891 = vmul.f32 %v4779, %v4875
        %v4892 = vmul.f32 %v4780, %v4876
        %v4893 = vmul.f32 %v4781, %v4877
        %v4894 = vmul.f32 %v4782, %v4878
        %v4895 = vmul.f32 %v4783, %v4879
        %v4896 = vmul.f32 %v4784, %v4880
        %v4897 = vmul.f32 %v4785, %v4881
        %v4898 = vmul.f32 %v4786, %v4882
        %v4900 = vlaneseq
        %v4901 = vshrl.u32 %v4900, 7
        %v4902 = vsub.s32 0, %v4901
        %v4903 = vrot.slane %v4721, %v4902
        %v4905 = vmul.f32 %v4883, %v4903
        %v4906 = vmul.f32 %v4884, %v4903
        %v4907 = vmul.f32 %v4885, %v4903
        %v4908 = vmul.f32 %v4886, %v4903
        %v4909 = vmul.f32 %v4887, %v4903
        %v4910 = vmul.f32 %v4888, %v4903
        %v4911 = vmul.f32 %v4889, %v4903
        %v4912 = vmul.f32 %v4890, %v4903
        %v4913 = vmul.f32 %v4891, %v4903
        %v4914 = vmul.f32 %v4892, %v4903
        %v4915 = vmul.f32 %v4893, %v4903
        %v4916 = vmul.f32 %v4894, %v4903
        %v4917 = vmul.f32 %v4895, %v4903
        %v4918 = vmul.f32 %v4896, %v4903
        %v4919 = vmul.f32 %v4897, %v4903
        %v4920 = vmul.f32 %v4898, %v4903
        %v4922 = vlaneseq
        %v4923 = vshrl.u32 %v4922, 7
        %v4924 = vsub.s32 0, %v4923
        %v4925 = vrot.slane %v4722, %v4924
        %v4927 = vadd.f32 %v4905, %v4925
        %v4928 = vadd.f32 %v4906, %v4925
        %v4929 = vadd.f32 %v4907, %v4925
        %v4930 = vadd.f32 %v4908, %v4925
        %v4931 = vadd.f32 %v4909, %v4925
        %v4932 = vadd.f32 %v4910, %v4925
        %v4933 = vadd.f32 %v4911, %v4925
        %v4934 = vadd.f32 %v4912, %v4925
        %v4935 = vadd.f32 %v4913, %v4925
        %v4936 = vadd.f32 %v4914, %v4925
        %v4937 = vadd.f32 %v4915, %v4925
        %v4938 = vadd.f32 %v4916, %v4925
        %v4939 = vadd.f32 %v4917, %v4925
        %v4940 = vadd.f32 %v4918, %v4925
        %v4941 = vadd.f32 %v4919, %v4925
        %v4942 = vadd.f32 %v4920, %v4925
        %v4943 = vpack.c.bf16 %v4928, %v4927
        %v4944 = vpack.c.bf16 %v4930, %v4929
        %v4945 = vpack.c.bf16 %v4932, %v4931
        %v4946 = vpack.c.bf16 %v4934, %v4933
        %v4947 = vpack.c.bf16 %v4936, %v4935
        %v4948 = vpack.c.bf16 %v4938, %v4937
        %v4949 = vpack.c.bf16 %v4940, %v4939
        %v4950 = vpack.c.bf16 %v4942, %v4941
        %v4951 = vld [vmem:[#allocation10] sm:$0xff]
        %v4952 = vld [vmem:[#allocation10 + $0x8] sm:$0xff]
        %v4953 = vld [vmem:[#allocation10 + $0x10] sm:$0xff]
        %v4954 = vld [vmem:[#allocation10 + $0x18] sm:$0xff]
        %v4955 = vld [vmem:[#allocation10 + $0x20] sm:$0xff]
        %v4956 = vld [vmem:[#allocation10 + $0x28] sm:$0xff]
        %v4957 = vld [vmem:[#allocation10 + $0x30] sm:$0xff]
        %v4958 = vld [vmem:[#allocation10 + $0x38] sm:$0xff]
        %v4959 = vld [vmem:[#allocation10 + $0x40] sm:$0xff]
        %v4960 = vld [vmem:[#allocation10 + $0x48] sm:$0xff]
        %v4961 = vld [vmem:[#allocation10 + $0x50] sm:$0xff]
        %v4962 = vld [vmem:[#allocation10 + $0x58] sm:$0xff]
        %v4963 = vld [vmem:[#allocation10 + $0x60] sm:$0xff]
        %v4964 = vld [vmem:[#allocation10 + $0x68] sm:$0xff]
        %v4965 = vld [vmem:[#allocation10 + $0x70] sm:$0xff]
        %v4966 = vld [vmem:[#allocation10 + $0x78] sm:$0xff]
        %v4967 = vld [vmem:[#allocation10 + $0x80] sm:$0xff]
        %v4968 = vld [vmem:[#allocation10 + $0x88] sm:$0xff]
        %v4969 = vld [vmem:[#allocation10 + $0x90] sm:$0xff]
        %v4970 = vld [vmem:[#allocation10 + $0x98] sm:$0xff]
        %v4971 = vld [vmem:[#allocation10 + $0xa0] sm:$0xff]
        %v4972 = vld [vmem:[#allocation10 + $0xa8] sm:$0xff]
        %v4973 = vld [vmem:[#allocation10 + $0xb0] sm:$0xff]
        %v4974 = vld [vmem:[#allocation10 + $0xb8] sm:$0xff]
        %v4975 = vld [vmem:[#allocation10 + $0xc0] sm:$0xff]
        %v4976 = vld [vmem:[#allocation10 + $0xc8] sm:$0xff]
        %v4977 = vld [vmem:[#allocation10 + $0xd0] sm:$0xff]
        %v4978 = vld [vmem:[#allocation10 + $0xd8] sm:$0xff]
        %v4979 = vld [vmem:[#allocation10 + $0xe0] sm:$0xff]
        %v4980 = vld [vmem:[#allocation10 + $0xe8] sm:$0xff]
        %v4981 = vld [vmem:[#allocation10 + $0xf0] sm:$0xff]
        %v4982 = vld [vmem:[#allocation10 + $0xf8] sm:$0xff]
        %v4983 = vld [vmem:[%s9] sm:$0xf]
        %v4985 = vlaneseq
        %v4986 = vshrl.u32 %v4985, 7
        %v4987 = vsub.s32 0, %v4986
        %v4988 = vrot.slane %v4983, %v4987
        %v4989 = vlaneseq
        %v4990 = vshrl.u32 %v4989, 7
        %v4991 = vsub.s32 1, %v4990
        %v4992 = vrot.slane %v4983, %v4991
        %v4993 = vlaneseq
        %v4994 = vshrl.u32 %v4993, 7
        %v4995 = vsub.s32 2, %v4994
        %v4996 = vrot.slane %v4983, %v4995
        %v4997 = vlaneseq
        %v4998 = vshrl.u32 %v4997, 7
        %v4999 = vsub.s32 3, %v4998
        %v5000 = vrot.slane %v4983, %v4999
        %v5037 = vunpack.c.l.b16 %v4951
        %v5038 = vunpack.c.h.b16 %v4951
        %v5039 = vunpack.c.l.b16 %v4952
        %v5040 = vunpack.c.h.b16 %v4952
        %v5041 = vunpack.c.l.b16 %v4953
        %v5042 = vunpack.c.h.b16 %v4953
        %v5043 = vunpack.c.l.b16 %v4954
        %v5044 = vunpack.c.h.b16 %v4954
        %v5045 = vunpack.c.l.b16 %v4955
        %v5046 = vunpack.c.h.b16 %v4955
        %v5047 = vunpack.c.l.b16 %v4956
        %v5048 = vunpack.c.h.b16 %v4956
        %v5049 = vunpack.c.l.b16 %v4957
        %v5050 = vunpack.c.h.b16 %v4957
        %v5051 = vunpack.c.l.b16 %v4958
        %v5052 = vunpack.c.h.b16 %v4958
        %v5053 = vunpack.c.l.b16 %v4959
        %v5054 = vunpack.c.h.b16 %v4959
        %v5055 = vunpack.c.l.b16 %v4960
        %v5056 = vunpack.c.h.b16 %v4960
        %v5057 = vunpack.c.l.b16 %v4961
        %v5058 = vunpack.c.h.b16 %v4961
        %v5059 = vunpack.c.l.b16 %v4962
        %v5060 = vunpack.c.h.b16 %v4962
        %v5061 = vunpack.c.l.b16 %v4963
        %v5062 = vunpack.c.h.b16 %v4963
        %v5063 = vunpack.c.l.b16 %v4964
        %v5064 = vunpack.c.h.b16 %v4964
        %v5065 = vunpack.c.l.b16 %v4965
        %v5066 = vunpack.c.h.b16 %v4965
        %v5067 = vunpack.c.l.b16 %v4966
        %v5068 = vunpack.c.h.b16 %v4966
        %v5069 = vunpack.c.l.b16 %v4967
        %v5070 = vunpack.c.h.b16 %v4967
        %v5071 = vunpack.c.l.b16 %v4968
        %v5072 = vunpack.c.h.b16 %v4968
        %v5073 = vunpack.c.l.b16 %v4969
        %v5074 = vunpack.c.h.b16 %v4969
        %v5075 = vunpack.c.l.b16 %v4970
        %v5076 = vunpack.c.h.b16 %v4970
        %v5077 = vunpack.c.l.b16 %v4971
        %v5078 = vunpack.c.h.b16 %v4971
        %v5079 = vunpack.c.l.b16 %v4972
        %v5080 = vunpack.c.h.b16 %v4972
        %v5081 = vunpack.c.l.b16 %v4973
        %v5082 = vunpack.c.h.b16 %v4973
        %v5083 = vunpack.c.l.b16 %v4974
        %v5084 = vunpack.c.h.b16 %v4974
        %v5085 = vunpack.c.l.b16 %v4975
        %v5086 = vunpack.c.h.b16 %v4975
        %v5087 = vunpack.c.l.b16 %v4976
        %v5088 = vunpack.c.h.b16 %v4976
        %v5089 = vunpack.c.l.b16 %v4977
        %v5090 = vunpack.c.h.b16 %v4977
        %v5091 = vunpack.c.l.b16 %v4978
        %v5092 = vunpack.c.h.b16 %v4978
        %v5093 = vunpack.c.l.b16 %v4979
        %v5094 = vunpack.c.h.b16 %v4979
        %v5095 = vunpack.c.l.b16 %v4980
        %v5096 = vunpack.c.h.b16 %v4980
        %v5097 = vunpack.c.l.b16 %v4981
        %v5098 = vunpack.c.h.b16 %v4981
        %v5099 = vunpack.c.l.b16 %v4982
        %v5100 = vunpack.c.h.b16 %v4982
        %v5101 = vpack.c.b16 %v5041, %v5037
        %v5102 = vpack.c.b16 %v5042, %v5038
        %v5103 = vpack.c.b16 %v5043, %v5039
        %v5104 = vpack.c.b16 %v5044, %v5040
        %v5105 = vpack.c.b16 %v5049, %v5045
        %v5106 = vpack.c.b16 %v5050, %v5046
        %v5107 = vpack.c.b16 %v5051, %v5047
        %v5108 = vpack.c.b16 %v5052, %v5048
        %v5109 = vpack.c.b16 %v5057, %v5053
        %v5110 = vpack.c.b16 %v5058, %v5054
        %v5111 = vpack.c.b16 %v5059, %v5055
        %v5112 = vpack.c.b16 %v5060, %v5056
        %v5113 = vpack.c.b16 %v5065, %v5061
        %v5114 = vpack.c.b16 %v5066, %v5062
        %v5115 = vpack.c.b16 %v5067, %v5063
        %v5116 = vpack.c.b16 %v5068, %v5064
        %v5117 = vpack.c.b16 %v5073, %v5069
        %v5118 = vpack.c.b16 %v5074, %v5070
        %v5119 = vpack.c.b16 %v5075, %v5071
        %v5120 = vpack.c.b16 %v5076, %v5072
        %v5121 = vpack.c.b16 %v5081, %v5077
        %v5122 = vpack.c.b16 %v5082, %v5078
        %v5123 = vpack.c.b16 %v5083, %v5079
        %v5124 = vpack.c.b16 %v5084, %v5080
        %v5125 = vpack.c.b16 %v5089, %v5085
        %v5126 = vpack.c.b16 %v5090, %v5086
        %v5127 = vpack.c.b16 %v5091, %v5087
        %v5128 = vpack.c.b16 %v5092, %v5088
        %v5129 = vpack.c.b16 %v5097, %v5093
        %v5130 = vpack.c.b16 %v5098, %v5094
        %v5131 = vpack.c.b16 %v5099, %v5095
        %v5132 = vpack.c.b16 %v5100, %v5096
        %5165 = vmatprep.subr.bf16.mxu0 %v5102
        %5166 = vmatpush1.bf16.msra.mxu0 %v5101
        %5167 = vmatprep.subr.bf16.mxu0 %v5106
        %5168 = vmatpush1.bf16.msra.mxu0 %v5105
        %5169 = vmatprep.subr.bf16.mxu0 %v5110
        %5170 = vmatpush1.bf16.msra.mxu0 %v5109
        %5171 = vmatprep.subr.bf16.mxu0 %v5114
        %5172 = vmatpush1.bf16.msra.mxu0 %v5113
        %5173 = vmatprep.subr.bf16.mxu0 %v5118
        %5174 = vmatpush1.bf16.msra.mxu0 %v5117
        %5175 = vmatprep.subr.bf16.mxu0 %v5122
        %5176 = vmatpush1.bf16.msra.mxu0 %v5121
        %5177 = vmatprep.subr.bf16.mxu0 %v5126
        %5178 = vmatpush1.bf16.msra.mxu0 %v5125
        %5179 = vmatprep.subr.bf16.mxu0 %v5130
        %5180 = vmatpush1.bf16.msra.mxu0 %v5129
        %5181 = vmatprep.subr.bf16.mxu0 0
        %5182 = vmatpush1.bf16.msra.mxu0 0
        %5183 = vmatprep.subr.bf16.mxu0 0
        %5184 = vmatpush1.bf16.msra.mxu0 0
        %5185 = vmatprep.subr.bf16.mxu0 0
        %5186 = vmatpush1.bf16.msra.mxu0 0
        %5187 = vmatprep.subr.bf16.mxu0 0
        %5188 = vmatpush1.bf16.msra.mxu0 0
        %5189 = vmatprep.subr.bf16.mxu0 0
        %5190 = vmatpush1.bf16.msra.mxu0 0
        %5191 = vmatprep.subr.bf16.mxu0 0
        %5192 = vmatpush1.bf16.msra.mxu0 0
        %5193 = vmatprep.subr.bf16.mxu0 0
        %5194 = vmatpush1.bf16.msra.mxu0 0
        %5195 = vmatprep.subr.bf16.mxu0 0
        %5196 = vmatpush1.bf16.msra.mxu0 0
        %5197 = vmatprep.mubr.bf16.mxu0 0
        %5198 = vmatmul.mubr.bf16.gmra.mrb[0].mxu0 %v4943
        %v5199 = vpop.f32.mrb[0].mxu0
        %v5200 = vadd.f32 %v4988, %v5199
        %v5201 = vpop.f32.mrb[0].mxu0
        %v5202 = vadd.f32 %v4992, %v5201
        %v5203 = vpop.f32.mrb[0].mxu0
        %v5204 = vadd.f32 %v4988, %v5203
        %v5205 = vpop.f32.mrb[0].mxu0
        %v5206 = vadd.f32 %v4992, %v5205
        %5207 = vmatprep.mubr.bf16.mxu0 0
        %5208 = vmatmul.mubr.bf16.gmra.mrb[0].mxu0 %v4944
        %v5209 = vpop.f32.mrb[0].mxu0
        %v5210 = vadd.f32 %v4988, %v5209
        %v5211 = vpop.f32.mrb[0].mxu0
        %v5212 = vadd.f32 %v4992, %v5211
        %v5213 = vpop.f32.mrb[0].mxu0
        %v5214 = vadd.f32 %v4988, %v5213
        %v5215 = vpop.f32.mrb[0].mxu0
        %v5216 = vadd.f32 %v4992, %v5215
        %5217 = vmatprep.mubr.bf16.mxu0 0
        %5218 = vmatmul.mubr.bf16.gmra.mrb[0].mxu0 %v4945
        %v5219 = vpop.f32.mrb[0].mxu0
        %v5220 = vadd.f32 %v4988, %v5219
        %v5221 = vpop.f32.mrb[0].mxu0
        %v5222 = vadd.f32 %v4992, %v5221
        %v5223 = vpop.f32.mrb[0].mxu0
        %v5224 = vadd.f32 %v4988, %v5223
        %v5225 = vpop.f32.mrb[0].mxu0
        %v5226 = vadd.f32 %v4992, %v5225
        %5227 = vmatprep.mubr.bf16.mxu0 0
        %5228 = vmatmul.mubr.bf16.gmra.mrb[0].mxu0 %v4946
        %v5229 = vpop.f32.mrb[0].mxu0
        %v5230 = vadd.f32 %v4988, %v5229
        %v5231 = vpop.f32.mrb[0].mxu0
        %v5232 = vadd.f32 %v4992, %v5231
        %v5233 = vpop.f32.mrb[0].mxu0
        %v5234 = vadd.f32 %v4988, %v5233
        %v5235 = vpop.f32.mrb[0].mxu0
        %v5236 = vadd.f32 %v4992, %v5235
        %5237 = vmatprep.mubr.bf16.mxu0 0
        %5238 = vmatmul.mubr.bf16.gmra.mrb[0].mxu0 %v4947
        %v5239 = vpop.f32.mrb[0].mxu0
        %v5240 = vadd.f32 %v4988, %v5239
        %v5241 = vpop.f32.mrb[0].mxu0
        %v5242 = vadd.f32 %v4992, %v5241
        %v5243 = vpop.f32.mrb[0].mxu0
        %v5244 = vadd.f32 %v4988, %v5243
        %v5245 = vpop.f32.mrb[0].mxu0
        %v5246 = vadd.f32 %v4992, %v5245
        %5247 = vmatprep.mubr.bf16.mxu0 0
        %5248 = vmatmul.mubr.bf16.gmra.mrb[0].mxu0 %v4948
        %v5249 = vpop.f32.mrb[0].mxu0
        %v5250 = vadd.f32 %v4988, %v5249
        %v5251 = vpop.f32.mrb[0].mxu0
        %v5252 = vadd.f32 %v4992, %v5251
        %v5253 = vpop.f32.mrb[0].mxu0
        %v5254 = vadd.f32 %v4988, %v5253
        %v5255 = vpop.f32.mrb[0].mxu0
        %v5256 = vadd.f32 %v4992, %v5255
        %5257 = vmatprep.mubr.bf16.mxu0 0
        %5258 = vmatmul.mubr.bf16.gmra.mrb[0].mxu0 %v4949
        %v5259 = vpop.f32.mrb[0].mxu0
        %v5260 = vadd.f32 %v4988, %v5259
        %v5261 = vpop.f32.mrb[0].mxu0
        %v5262 = vadd.f32 %v4992, %v5261
        %v5263 = vpop.f32.mrb[0].mxu0
        %v5264 = vadd.f32 %v4988, %v5263
        %v5265 = vpop.f32.mrb[0].mxu0
        %v5266 = vadd.f32 %v4992, %v5265
        %5267 = vmatprep.mubr.bf16.mxu0 0
        %5268 = vmatmul.mubr.bf16.gmra.mrb[0].mxu0 %v4950
        %v5269 = vpop.f32.mrb[0].mxu0
        %v5270 = vadd.f32 %v4988, %v5269
        %v5271 = vpop.f32.mrb[0].mxu0
        %v5272 = vadd.f32 %v4992, %v5271
        %v5273 = vpop.f32.mrb[0].mxu0
        %v5274 = vadd.f32 %v4988, %v5273
        %v5275 = vpop.f32.mrb[0].mxu0
        %v5276 = vadd.f32 %v4992, %v5275
        %5277 = vdwg.mxu0
        %5278 = vmatprep.subr.bf16.mxu0 %v5104
        %5279 = vmatpush1.bf16.msra.mxu0 %v5103
        %5280 = vmatprep.subr.bf16.mxu0 %v5108
        %5281 = vmatpush1.bf16.msra.mxu0 %v5107
        %5282 = vmatprep.subr.bf16.mxu0 %v5112
        %5283 = vmatpush1.bf16.msra.mxu0 %v5111
        %5284 = vmatprep.subr.bf16.mxu0 %v5116
        %5285 = vmatpush1.bf16.msra.mxu0 %v5115
        %5286 = vmatprep.subr.bf16.mxu0 %v5120
        %5287 = vmatpush1.bf16.msra.mxu0 %v5119
        %5288 = vmatprep.subr.bf16.mxu0 %v5124
        %5289 = vmatpush1.bf16.msra.mxu0 %v5123
        %5290 = vmatprep.subr.bf16.mxu0 %v5128
        %5291 = vmatpush1.bf16.msra.mxu0 %v5127
        %5292 = vmatprep.subr.bf16.mxu0 %v5132
        %5293 = vmatpush1.bf16.msra.mxu0 %v5131
        %5294 = vmatprep.subr.bf16.mxu0 0
        %5295 = vmatpush1.bf16.msra.mxu0 0
        %5296 = vmatprep.subr.bf16.mxu0 0
        %5297 = vmatpush1.bf16.msra.mxu0 0
        %5298 = vmatprep.subr.bf16.mxu0 0
        %5299 = vmatpush1.bf16.msra.mxu0 0
        %5300 = vmatprep.subr.bf16.mxu0 0
        %5301 = vmatpush1.bf16.msra.mxu0 0
        %5302 = vmatprep.subr.bf16.mxu0 0
        %5303 = vmatpush1.bf16.msra.mxu0 0
        %5304 = vmatprep.subr.bf16.mxu0 0
        %5305 = vmatpush1.bf16.msra.mxu0 0
        %5306 = vmatprep.subr.bf16.mxu0 0
        %5307 = vmatpush1.bf16.msra.mxu0 0
        %5308 = vmatprep.subr.bf16.mxu0 0
        %5309 = vmatpush1.bf16.msra.mxu0 0
        %5310 = vmatprep.mubr.bf16.mxu0 0
        %5311 = vmatmul.mubr.bf16.gmra.mrb[0].mxu0 %v4943
        %v5312 = vpop.f32.mrb[0].mxu0
        %v5313 = vadd.f32 %v4996, %v5312
        %v5314 = vpop.f32.mrb[0].mxu0
        %v5315 = vadd.f32 %v5000, %v5314
        %v5316 = vpop.f32.mrb[0].mxu0
        %v5317 = vadd.f32 %v4996, %v5316
        %v5318 = vpop.f32.mrb[0].mxu0
        %v5319 = vadd.f32 %v5000, %v5318
        %5320 = vmatprep.mubr.bf16.mxu0 0
        %5321 = vmatmul.mubr.bf16.gmra.mrb[0].mxu0 %v4944
        %v5322 = vpop.f32.mrb[0].mxu0
        %v5323 = vadd.f32 %v4996, %v5322
        %v5324 = vpop.f32.mrb[0].mxu0
        %v5325 = vadd.f32 %v5000, %v5324
        %v5326 = vpop.f32.mrb[0].mxu0
        %v5327 = vadd.f32 %v4996, %v5326
        %v5328 = vpop.f32.mrb[0].mxu0
        %v5329 = vadd.f32 %v5000, %v5328
        %5330 = vmatprep.mubr.bf16.mxu0 0
        %5331 = vmatmul.mubr.bf16.gmra.mrb[0].mxu0 %v4945
        %v5332 = vpop.f32.mrb[0].mxu0
        %v5333 = vadd.f32 %v4996, %v5332
        %v5334 = vpop.f32.mrb[0].mxu0
        %v5335 = vadd.f32 %v5000, %v5334
        %v5336 = vpop.f32.mrb[0].mxu0
        %v5337 = vadd.f32 %v4996, %v5336
        %v5338 = vpop.f32.mrb[0].mxu0
        %v5339 = vadd.f32 %v5000, %v5338
        %5340 = vmatprep.mubr.bf16.mxu0 0
        %5341 = vmatmul.mubr.bf16.gmra.mrb[0].mxu0 %v4946
        %v5342 = vpop.f32.mrb[0].mxu0
        %v5343 = vadd.f32 %v4996, %v5342
        %v5344 = vpop.f32.mrb[0].mxu0
        %v5345 = vadd.f32 %v5000, %v5344
        %v5346 = vpop.f32.mrb[0].mxu0
        %v5347 = vadd.f32 %v4996, %v5346
        %v5348 = vpop.f32.mrb[0].mxu0
        %v5349 = vadd.f32 %v5000, %v5348
        %5350 = vmatprep.mubr.bf16.mxu0 0
        %5351 = vmatmul.mubr.bf16.gmra.mrb[0].mxu0 %v4947
        %v5352 = vpop.f32.mrb[0].mxu0
        %v5353 = vadd.f32 %v4996, %v5352
        %v5354 = vpop.f32.mrb[0].mxu0
        %v5355 = vadd.f32 %v5000, %v5354
        %v5356 = vpop.f32.mrb[0].mxu0
        %v5357 = vadd.f32 %v4996, %v5356
        %v5358 = vpop.f32.mrb[0].mxu0
        %v5359 = vadd.f32 %v5000, %v5358
        %5360 = vmatprep.mubr.bf16.mxu0 0
        %5361 = vmatmul.mubr.bf16.gmra.mrb[0].mxu0 %v4948
        %v5362 = vpop.f32.mrb[0].mxu0
        %v5363 = vadd.f32 %v4996, %v5362
        %v5364 = vpop.f32.mrb[0].mxu0
        %v5365 = vadd.f32 %v5000, %v5364
        %v5366 = vpop.f32.mrb[0].mxu0
        %v5367 = vadd.f32 %v4996, %v5366
        %v5368 = vpop.f32.mrb[0].mxu0
        %v5369 = vadd.f32 %v5000, %v5368
        %5370 = vmatprep.mubr.bf16.mxu0 0
        %5371 = vmatmul.mubr.bf16.gmra.mrb[0].mxu0 %v4949
        %v5372 = vpop.f32.mrb[0].mxu0
        %v5373 = vadd.f32 %v4996, %v5372
        %v5374 = vpop.f32.mrb[0].mxu0
        %v5375 = vadd.f32 %v5000, %v5374
        %v5376 = vpop.f32.mrb[0].mxu0
        %v5377 = vadd.f32 %v4996, %v5376
        %v5378 = vpop.f32.mrb[0].mxu0
        %v5379 = vadd.f32 %v5000, %v5378
        %5380 = vmatprep.mubr.bf16.mxu0 0
        %5381 = vmatmul.mubr.bf16.gmra.mrb[0].mxu0 %v4950
        %v5382 = vpop.f32.mrb[0].mxu0
        %v5383 = vadd.f32 %v4996, %v5382
        %v5384 = vpop.f32.mrb[0].mxu0
        %v5385 = vadd.f32 %v5000, %v5384
        %v5386 = vpop.f32.mrb[0].mxu0
        %v5387 = vadd.f32 %v4996, %v5386
        %v5388 = vpop.f32.mrb[0].mxu0
        %v5389 = vadd.f32 %v5000, %v5388
        %5390 = vdwg.mxu0
        %v5391 = vmul.f32 %v5200, 0.5
        %v5392 = vmul.f32 %v5202, 0.5
        %v5393 = vmul.f32 %v5313, 0.5
        %v5394 = vmul.f32 %v5315, 0.5
        %v5395 = vmul.f32 %v5204, 0.5
        %v5396 = vmul.f32 %v5206, 0.5
        %v5397 = vmul.f32 %v5317, 0.5
        %v5398 = vmul.f32 %v5319, 0.5
        %v5399 = vmul.f32 %v5210, 0.5
        %v5400 = vmul.f32 %v5212, 0.5
        %v5401 = vmul.f32 %v5323, 0.5
        %v5402 = vmul.f32 %v5325, 0.5
        %v5403 = vmul.f32 %v5214, 0.5
        %v5404 = vmul.f32 %v5216, 0.5
        %v5405 = vmul.f32 %v5327, 0.5
        %v5406 = vmul.f32 %v5329, 0.5
        %v5407 = vmul.f32 %v5220, 0.5
        %v5408 = vmul.f32 %v5222, 0.5
        %v5409 = vmul.f32 %v5333, 0.5
        %v5410 = vmul.f32 %v5335, 0.5
        %v5411 = vmul.f32 %v5224, 0.5
        %v5412 = vmul.f32 %v5226, 0.5
        %v5413 = vmul.f32 %v5337, 0.5
        %v5414 = vmul.f32 %v5339, 0.5
        %v5415 = vmul.f32 %v5230, 0.5
        %v5416 = vmul.f32 %v5232, 0.5
        %v5417 = vmul.f32 %v5343, 0.5
        %v5418 = vmul.f32 %v5345, 0.5
        %v5419 = vmul.f32 %v5234, 0.5
        %v5420 = vmul.f32 %v5236, 0.5
        %v5421 = vmul.f32 %v5347, 0.5
        %v5422 = vmul.f32 %v5349, 0.5
        %v5423 = vmul.f32 %v5240, 0.5
        %v5424 = vmul.f32 %v5242, 0.5
        %v5425 = vmul.f32 %v5353, 0.5
        %v5426 = vmul.f32 %v5355, 0.5
        %v5427 = vmul.f32 %v5244, 0.5
        %v5428 = vmul.f32 %v5246, 0.5
        %v5429 = vmul.f32 %v5357, 0.5
        %v5430 = vmul.f32 %v5359, 0.5
        %v5431 = vmul.f32 %v5250, 0.5
        %v5432 = vmul.f32 %v5252, 0.5
        %v5433 = vmul.f32 %v5363, 0.5
        %v5434 = vmul.f32 %v5365, 0.5
        %v5435 = vmul.f32 %v5254, 0.5
        %v5436 = vmul.f32 %v5256, 0.5
        %v5437 = vmul.f32 %v5367, 0.5
        %v5438 = vmul.f32 %v5369, 0.5
        %v5439 = vmul.f32 %v5260, 0.5
        %v5440 = vmul.f32 %v5262, 0.5
        %v5441 = vmul.f32 %v5373, 0.5
        %v5442 = vmul.f32 %v5375, 0.5
        %v5443 = vmul.f32 %v5264, 0.5
        %v5444 = vmul.f32 %v5266, 0.5
        %v5445 = vmul.f32 %v5377, 0.5
        %v5446 = vmul.f32 %v5379, 0.5
        %v5447 = vmul.f32 %v5270, 0.5
        %v5448 = vmul.f32 %v5272, 0.5
        %v5449 = vmul.f32 %v5383, 0.5
        %v5450 = vmul.f32 %v5385, 0.5
        %v5451 = vmul.f32 %v5274, 0.5
        %v5452 = vmul.f32 %v5276, 0.5
        %v5453 = vmul.f32 %v5387, 0.5
        %v5454 = vmul.f32 %v5389, 0.5
        %v5455 = vmul.f32 %v5200, 0.70710677
        %v5456 = vmul.f32 %v5202, 0.70710677
        %v5457 = vmul.f32 %v5313, 0.70710677
        %v5458 = vmul.f32 %v5315, 0.70710677
        %v5459 = vmul.f32 %v5204, 0.70710677
        %v5460 = vmul.f32 %v5206, 0.70710677
        %v5461 = vmul.f32 %v5317, 0.70710677
        %v5462 = vmul.f32 %v5319, 0.70710677
        %v5463 = vmul.f32 %v5210, 0.70710677
        %v5464 = vmul.f32 %v5212, 0.70710677
        %v5465 = vmul.f32 %v5323, 0.70710677
        %v5466 = vmul.f32 %v5325, 0.70710677
        %v5467 = vmul.f32 %v5214, 0.70710677
        %v5468 = vmul.f32 %v5216, 0.70710677
        %v5469 = vmul.f32 %v5327, 0.70710677
        %v5470 = vmul.f32 %v5329, 0.70710677
        %v5471 = vmul.f32 %v5220, 0.70710677
        %v5472 = vmul.f32 %v5222, 0.70710677
        %v5473 = vmul.f32 %v5333, 0.70710677
        %v5474 = vmul.f32 %v5335, 0.70710677
        %v5475 = vmul.f32 %v5224, 0.70710677
        %v5476 = vmul.f32 %v5226, 0.70710677
        %v5477 = vmul.f32 %v5337, 0.70710677
        %v5478 = vmul.f32 %v5339, 0.70710677
        %v5479 = vmul.f32 %v5230, 0.70710677
        %v5480 = vmul.f32 %v5232, 0.70710677
        %v5481 = vmul.f32 %v5343, 0.70710677
        %v5482 = vmul.f32 %v5345, 0.70710677
        %v5483 = vmul.f32 %v5234, 0.70710677
        %v5484 = vmul.f32 %v5236, 0.70710677
        %v5485 = vmul.f32 %v5347, 0.70710677
        %v5486 = vmul.f32 %v5349, 0.70710677
        %v5487 = vmul.f32 %v5240, 0.70710677
        %v5488 = vmul.f32 %v5242, 0.70710677
        %v5489 = vmul.f32 %v5353, 0.70710677
        %v5490 = vmul.f32 %v5355, 0.70710677
        %v5491 = vmul.f32 %v5244, 0.70710677
        %v5492 = vmul.f32 %v5246, 0.70710677
        %v5493 = vmul.f32 %v5357, 0.70710677
        %v5494 = vmul.f32 %v5359, 0.70710677
        %v5495 = vmul.f32 %v5250, 0.70710677
        %v5496 = vmul.f32 %v5252, 0.70710677
        %v5497 = vmul.f32 %v5363, 0.70710677
        %v5498 = vmul.f32 %v5365, 0.70710677
        %v5499 = vmul.f32 %v5254, 0.70710677
        %v5500 = vmul.f32 %v5256, 0.70710677
        %v5501 = vmul.f32 %v5367, 0.70710677
        %v5502 = vmul.f32 %v5369, 0.70710677
        %v5503 = vmul.f32 %v5260, 0.70710677
        %v5504 = vmul.f32 %v5262, 0.70710677
        %v5505 = vmul.f32 %v5373, 0.70710677
        %v5506 = vmul.f32 %v5375, 0.70710677
        %v5507 = vmul.f32 %v5264, 0.70710677
        %v5508 = vmul.f32 %v5266, 0.70710677
        %v5509 = vmul.f32 %v5377, 0.70710677
        %v5510 = vmul.f32 %v5379, 0.70710677
        %v5511 = vmul.f32 %v5270, 0.70710677
        %v5512 = vmul.f32 %v5272, 0.70710677
        %v5513 = vmul.f32 %v5383, 0.70710677
        %v5514 = vmul.f32 %v5385, 0.70710677
        %v5515 = vmul.f32 %v5274, 0.70710677
        %v5516 = vmul.f32 %v5276, 0.70710677
        %v5517 = vmul.f32 %v5387, 0.70710677
        %v5518 = vmul.f32 %v5389, 0.70710677
        %v5519 = verf.f32.pop %v5455
        %v5520 = verf.f32.pop %v5456
        %v5521 = verf.f32.pop %v5457
        %v5522 = verf.f32.pop %v5458
        %v5523 = verf.f32.pop %v5459
        %v5524 = verf.f32.pop %v5460
        %v5525 = verf.f32.pop %v5461
        %v5526 = verf.f32.pop %v5462
        %v5527 = verf.f32.pop %v5463
        %v5528 = verf.f32.pop %v5464
        %v5529 = verf.f32.pop %v5465
        %v5530 = verf.f32.pop %v5466
        %v5531 = verf.f32.pop %v5467
        %v5532 = verf.f32.pop %v5468
        %v5533 = verf.f32.pop %v5469
        %v5534 = verf.f32.pop %v5470
        %v5535 = verf.f32.pop %v5471
        %v5536 = verf.f32.pop %v5472
        %v5537 = verf.f32.pop %v5473
        %v5538 = verf.f32.pop %v5474
        %v5539 = verf.f32.pop %v5475
        %v5540 = verf.f32.pop %v5476
        %v5541 = verf.f32.pop %v5477
        %v5542 = verf.f32.pop %v5478
        %v5543 = verf.f32.pop %v5479
        %v5544 = verf.f32.pop %v5480
        %v5545 = verf.f32.pop %v5481
        %v5546 = verf.f32.pop %v5482
        %v5547 = verf.f32.pop %v5483
        %v5548 = verf.f32.pop %v5484
        %v5549 = verf.f32.pop %v5485
        %v5550 = verf.f32.pop %v5486
        %v5551 = verf.f32.pop %v5487
        %v5552 = verf.f32.pop %v5488
        %v5553 = verf.f32.pop %v5489
        %v5554 = verf.f32.pop %v5490
        %v5555 = verf.f32.pop %v5491
        %v5556 = verf.f32.pop %v5492
        %v5557 = verf.f32.pop %v5493
        %v5558 = verf.f32.pop %v5494
        %v5559 = verf.f32.pop %v5495
        %v5560 = verf.f32.pop %v5496
        %v5561 = verf.f32.pop %v5497
        %v5562 = verf.f32.pop %v5498
        %v5563 = verf.f32.pop %v5499
        %v5564 = verf.f32.pop %v5500
        %v5565 = verf.f32.pop %v5501
        %v5566 = verf.f32.pop %v5502
        %v5567 = verf.f32.pop %v5503
        %v5568 = verf.f32.pop %v5504
        %v5569 = verf.f32.pop %v5505
        %v5570 = verf.f32.pop %v5506
        %v5571 = verf.f32.pop %v5507
        %v5572 = verf.f32.pop %v5508
        %v5573 = verf.f32.pop %v5509
        %v5574 = verf.f32.pop %v5510
        %v5575 = verf.f32.pop %v5511
        %v5576 = verf.f32.pop %v5512
        %v5577 = verf.f32.pop %v5513
        %v5578 = verf.f32.pop %v5514
        %v5579 = verf.f32.pop %v5515
        %v5580 = verf.f32.pop %v5516
        %v5581 = verf.f32.pop %v5517
        %v5582 = verf.f32.pop %v5518
        %v5583 = vadd.f32 %v5519, 1.0
        %v5584 = vadd.f32 %v5520, 1.0
        %v5585 = vadd.f32 %v5521, 1.0
        %v5586 = vadd.f32 %v5522, 1.0
        %v5587 = vadd.f32 %v5523, 1.0
        %v5588 = vadd.f32 %v5524, 1.0
        %v5589 = vadd.f32 %v5525, 1.0
        %v5590 = vadd.f32 %v5526, 1.0
        %v5591 = vadd.f32 %v5527, 1.0
        %v5592 = vadd.f32 %v5528, 1.0
        %v5593 = vadd.f32 %v5529, 1.0
        %v5594 = vadd.f32 %v5530, 1.0
        %v5595 = vadd.f32 %v5531, 1.0
        %v5596 = vadd.f32 %v5532, 1.0
        %v5597 = vadd.f32 %v5533, 1.0
        %v5598 = vadd.f32 %v5534, 1.0
        %v5599 = vadd.f32 %v5535, 1.0
        %v5600 = vadd.f32 %v5536, 1.0
        %v5601 = vadd.f32 %v5537, 1.0
        %v5602 = vadd.f32 %v5538, 1.0
        %v5603 = vadd.f32 %v5539, 1.0
        %v5604 = vadd.f32 %v5540, 1.0
        %v5605 = vadd.f32 %v5541, 1.0
        %v5606 = vadd.f32 %v5542, 1.0
        %v5607 = vadd.f32 %v5543, 1.0
        %v5608 = vadd.f32 %v5544, 1.0
        %v5609 = vadd.f32 %v5545, 1.0
        %v5610 = vadd.f32 %v5546, 1.0
        %v5611 = vadd.f32 %v5547, 1.0
        %v5612 = vadd.f32 %v5548, 1.0
        %v5613 = vadd.f32 %v5549, 1.0
        %v5614 = vadd.f32 %v5550, 1.0
        %v5615 = vadd.f32 %v5551, 1.0
        %v5616 = vadd.f32 %v5552, 1.0
        %v5617 = vadd.f32 %v5553, 1.0
        %v5618 = vadd.f32 %v5554, 1.0
        %v5619 = vadd.f32 %v5555, 1.0
        %v5620 = vadd.f32 %v5556, 1.0
        %v5621 = vadd.f32 %v5557, 1.0
        %v5622 = vadd.f32 %v5558, 1.0
        %v5623 = vadd.f32 %v5559, 1.0
        %v5624 = vadd.f32 %v5560, 1.0
        %v5625 = vadd.f32 %v5561, 1.0
        %v5626 = vadd.f32 %v5562, 1.0
        %v5627 = vadd.f32 %v5563, 1.0
        %v5628 = vadd.f32 %v5564, 1.0
        %v5629 = vadd.f32 %v5565, 1.0
        %v5630 = vadd.f32 %v5566, 1.0
        %v5631 = vadd.f32 %v5567, 1.0
        %v5632 = vadd.f32 %v5568, 1.0
        %v5633 = vadd.f32 %v5569, 1.0
        %v5634 = vadd.f32 %v5570, 1.0
        %v5635 = vadd.f32 %v5571, 1.0
        %v5636 = vadd.f32 %v5572, 1.0
        %v5637 = vadd.f32 %v5573, 1.0
        %v5638 = vadd.f32 %v5574, 1.0
        %v5639 = vadd.f32 %v5575, 1.0
        %v5640 = vadd.f32 %v5576, 1.0
        %v5641 = vadd.f32 %v5577, 1.0
        %v5642 = vadd.f32 %v5578, 1.0
        %v5643 = vadd.f32 %v5579, 1.0
        %v5644 = vadd.f32 %v5580, 1.0
        %v5645 = vadd.f32 %v5581, 1.0
        %v5646 = vadd.f32 %v5582, 1.0
        %v5647 = vmul.f32 %v5391, %v5583
        %v5648 = vmul.f32 %v5392, %v5584
        %v5649 = vmul.f32 %v5393, %v5585
        %v5650 = vmul.f32 %v5394, %v5586
        %v5651 = vmul.f32 %v5395, %v5587
        %v5652 = vmul.f32 %v5396, %v5588
        %v5653 = vmul.f32 %v5397, %v5589
        %v5654 = vmul.f32 %v5398, %v5590
        %v5655 = vmul.f32 %v5399, %v5591
        %v5656 = vmul.f32 %v5400, %v5592
        %v5657 = vmul.f32 %v5401, %v5593
        %v5658 = vmul.f32 %v5402, %v5594
        %v5659 = vmul.f32 %v5403, %v5595
        %v5660 = vmul.f32 %v5404, %v5596
        %v5661 = vmul.f32 %v5405, %v5597
        %v5662 = vmul.f32 %v5406, %v5598
        %v5663 = vmul.f32 %v5407, %v5599
        %v5664 = vmul.f32 %v5408, %v5600
        %v5665 = vmul.f32 %v5409, %v5601
        %v5666 = vmul.f32 %v5410, %v5602
        %v5667 = vmul.f32 %v5411, %v5603
        %v5668 = vmul.f32 %v5412, %v5604
        %v5669 = vmul.f32 %v5413, %v5605
        %v5670 = vmul.f32 %v5414, %v5606
        %v5671 = vmul.f32 %v5415, %v5607
        %v5672 = vmul.f32 %v5416, %v5608
        %v5673 = vmul.f32 %v5417, %v5609
        %v5674 = vmul.f32 %v5418, %v5610
        %v5675 = vmul.f32 %v5419, %v5611
        %v5676 = vmul.f32 %v5420, %v5612
        %v5677 = vmul.f32 %v5421, %v5613
        %v5678 = vmul.f32 %v5422, %v5614
        %v5679 = vmul.f32 %v5423, %v5615
        %v5680 = vmul.f32 %v5424, %v5616
        %v5681 = vmul.f32 %v5425, %v5617
        %v5682 = vmul.f32 %v5426, %v5618
        %v5683 = vmul.f32 %v5427, %v5619
        %v5684 = vmul.f32 %v5428, %v5620
        %v5685 = vmul.f32 %v5429, %v5621
        %v5686 = vmul.f32 %v5430, %v5622
        %v5687 = vmul.f32 %v5431, %v5623
        %v5688 = vmul.f32 %v5432, %v5624
        %v5689 = vmul.f32 %v5433, %v5625
        %v5690 = vmul.f32 %v5434, %v5626
        %v5691 = vmul.f32 %v5435, %v5627
        %v5692 = vmul.f32 %v5436, %v5628
        %v5693 = vmul.f32 %v5437, %v5629
        %v5694 = vmul.f32 %v5438, %v5630
        %v5695 = vmul.f32 %v5439, %v5631
        %v5696 = vmul.f32 %v5440, %v5632
        %v5697 = vmul.f32 %v5441, %v5633
        %v5698 = vmul.f32 %v5442, %v5634
        %v5699 = vmul.f32 %v5443, %v5635
        %v5700 = vmul.f32 %v5444, %v5636
        %v5701 = vmul.f32 %v5445, %v5637
        %v5702 = vmul.f32 %v5446, %v5638
        %v5703 = vmul.f32 %v5447, %v5639
        %v5704 = vmul.f32 %v5448, %v5640
        %v5705 = vmul.f32 %v5449, %v5641
        %v5706 = vmul.f32 %v5450, %v5642
        %v5707 = vmul.f32 %v5451, %v5643
        %v5708 = vmul.f32 %v5452, %v5644
        %v5709 = vmul.f32 %v5453, %v5645
        %v5710 = vmul.f32 %v5454, %v5646
        %v5711 = vpack.c.bf16 %v5651, %v5647
        %v5712 = vpack.c.bf16 %v5652, %v5648
        %v5713 = vpack.c.bf16 %v5653, %v5649
        %v5714 = vpack.c.bf16 %v5654, %v5650
        %v5715 = vpack.c.bf16 %v5659, %v5655
        %v5716 = vpack.c.bf16 %v5660, %v5656
        %v5717 = vpack.c.bf16 %v5661, %v5657
        %v5718 = vpack.c.bf16 %v5662, %v5658
        %v5719 = vpack.c.bf16 %v5667, %v5663
        %v5720 = vpack.c.bf16 %v5668, %v5664
        %v5721 = vpack.c.bf16 %v5669, %v5665
        %v5722 = vpack.c.bf16 %v5670, %v5666
        %v5723 = vpack.c.bf16 %v5675, %v5671
        %v5724 = vpack.c.bf16 %v5676, %v5672
        %v5725 = vpack.c.bf16 %v5677, %v5673
        %v5726 = vpack.c.bf16 %v5678, %v5674
        %v5727 = vpack.c.bf16 %v5683, %v5679
        %v5728 = vpack.c.bf16 %v5684, %v5680
        %v5729 = vpack.c.bf16 %v5685, %v5681
        %v5730 = vpack.c.bf16 %v5686, %v5682
        %v5731 = vpack.c.bf16 %v5691, %v5687
        %v5732 = vpack.c.bf16 %v5692, %v5688
        %v5733 = vpack.c.bf16 %v5693, %v5689
        %v5734 = vpack.c.bf16 %v5694, %v5690
        %v5735 = vpack.c.bf16 %v5699, %v5695
        %v5736 = vpack.c.bf16 %v5700, %v5696
        %v5737 = vpack.c.bf16 %v5701, %v5697
        %v5738 = vpack.c.bf16 %v5702, %v5698
        %v5739 = vpack.c.bf16 %v5707, %v5703
        %v5740 = vpack.c.bf16 %v5708, %v5704
        %v5741 = vpack.c.bf16 %v5709, %v5705
        %v5742 = vpack.c.bf16 %v5710, %v5706
        %v5743 = vld [vmem:[#allocation12] sm:$0xf]
        %v5744 = vld [vmem:[#allocation12 + $0x4] sm:$0xf]
        %v5745 = vld [vmem:[#allocation12 + $0x8] sm:$0xf]
        %v5746 = vld [vmem:[#allocation12 + $0xc] sm:$0xf]
        %v5747 = vld [vmem:[#allocation12 + $0x10] sm:$0xf]
        %v5748 = vld [vmem:[#allocation12 + $0x14] sm:$0xf]
        %v5749 = vld [vmem:[#allocation12 + $0x18] sm:$0xf]
        %v5750 = vld [vmem:[#allocation12 + $0x1c] sm:$0xf]
        %v5751 = vld [vmem:[#allocation12 + $0x20] sm:$0xf]
        %v5752 = vld [vmem:[#allocation12 + $0x24] sm:$0xf]
        %v5753 = vld [vmem:[#allocation12 + $0x28] sm:$0xf]
        %v5754 = vld [vmem:[#allocation12 + $0x2c] sm:$0xf]
        %v5755 = vld [vmem:[#allocation12 + $0x30] sm:$0xf]
        %v5756 = vld [vmem:[#allocation12 + $0x34] sm:$0xf]
        %v5757 = vld [vmem:[#allocation12 + $0x38] sm:$0xf]
        %v5758 = vld [vmem:[#allocation12 + $0x3c] sm:$0xf]
        %v5759 = vld [vmem:[#allocation12 + $0x40] sm:$0xf]
        %v5760 = vld [vmem:[#allocation12 + $0x44] sm:$0xf]
        %v5761 = vld [vmem:[#allocation12 + $0x48] sm:$0xf]
        %v5762 = vld [vmem:[#allocation12 + $0x4c] sm:$0xf]
        %v5763 = vld [vmem:[#allocation12 + $0x50] sm:$0xf]
        %v5764 = vld [vmem:[#allocation12 + $0x54] sm:$0xf]
        %v5765 = vld [vmem:[#allocation12 + $0x58] sm:$0xf]
        %v5766 = vld [vmem:[#allocation12 + $0x5c] sm:$0xf]
        %v5767 = vld [vmem:[#allocation12 + $0x60] sm:$0xf]
        %v5768 = vld [vmem:[#allocation12 + $0x64] sm:$0xf]
        %v5769 = vld [vmem:[#allocation12 + $0x68] sm:$0xf]
        %v5770 = vld [vmem:[#allocation12 + $0x6c] sm:$0xf]
        %v5771 = vld [vmem:[#allocation12 + $0x70] sm:$0xf]
        %v5772 = vld [vmem:[#allocation12 + $0x74] sm:$0xf]
        %v5773 = vld [vmem:[#allocation12 + $0x78] sm:$0xf]
        %v5774 = vld [vmem:[#allocation12 + $0x7c] sm:$0xf]
        %v5775 = vld [vmem:[#allocation12 + $0x80] sm:$0xf]
        %v5776 = vld [vmem:[#allocation12 + $0x84] sm:$0xf]
        %v5777 = vld [vmem:[#allocation12 + $0x88] sm:$0xf]
        %v5778 = vld [vmem:[#allocation12 + $0x8c] sm:$0xf]
        %v5779 = vld [vmem:[#allocation12 + $0x90] sm:$0xf]
        %v5780 = vld [vmem:[#allocation12 + $0x94] sm:$0xf]
        %v5781 = vld [vmem:[#allocation12 + $0x98] sm:$0xf]
        %v5782 = vld [vmem:[#allocation12 + $0x9c] sm:$0xf]
        %v5783 = vld [vmem:[#allocation12 + $0xa0] sm:$0xf]
        %v5784 = vld [vmem:[#allocation12 + $0xa4] sm:$0xf]
        %v5785 = vld [vmem:[#allocation12 + $0xa8] sm:$0xf]
        %v5786 = vld [vmem:[#allocation12 + $0xac] sm:$0xf]
        %v5787 = vld [vmem:[#allocation12 + $0xb0] sm:$0xf]
        %v5788 = vld [vmem:[#allocation12 + $0xb4] sm:$0xf]
        %v5789 = vld [vmem:[#allocation12 + $0xb8] sm:$0xf]
        %v5790 = vld [vmem:[#allocation12 + $0xbc] sm:$0xf]
        %v5791 = vld [vmem:[#allocation12 + $0xc0] sm:$0xf]
        %v5792 = vld [vmem:[#allocation12 + $0xc4] sm:$0xf]
        %v5793 = vld [vmem:[#allocation12 + $0xc8] sm:$0xf]
        %v5794 = vld [vmem:[#allocation12 + $0xcc] sm:$0xf]
        %v5795 = vld [vmem:[#allocation12 + $0xd0] sm:$0xf]
        %v5796 = vld [vmem:[#allocation12 + $0xd4] sm:$0xf]
        %v5797 = vld [vmem:[#allocation12 + $0xd8] sm:$0xf]
        %v5798 = vld [vmem:[#allocation12 + $0xdc] sm:$0xf]
        %v5799 = vld [vmem:[#allocation12 + $0xe0] sm:$0xf]
        %v5800 = vld [vmem:[#allocation12 + $0xe4] sm:$0xf]
        %v5801 = vld [vmem:[#allocation12 + $0xe8] sm:$0xf]
        %v5802 = vld [vmem:[#allocation12 + $0xec] sm:$0xf]
        %v5803 = vld [vmem:[#allocation12 + $0xf0] sm:$0xf]
        %v5804 = vld [vmem:[#allocation12 + $0xf4] sm:$0xf]
        %v5805 = vld [vmem:[#allocation12 + $0xf8] sm:$0xf]
        %v5806 = vld [vmem:[#allocation12 + $0xfc] sm:$0xf]
        %v5807 = vld [vmem:[%s11] sm:$0x1]
        %v5809 = vlaneseq
        %v5810 = vshrl.u32 %v5809, 7
        %v5811 = vsub.s32 0, %v5810
        %v5812 = vrot.slane %v5807, %v5811
        %v5878 = vunpack.c.l.b16 %v5743
        %v5879 = vunpack.c.l.b16 %v5744
        %v5880 = vunpack.c.l.b16 %v5745
        %v5881 = vunpack.c.l.b16 %v5746
        %v5882 = vunpack.c.l.b16 %v5747
        %v5883 = vunpack.c.l.b16 %v5748
        %v5884 = vunpack.c.l.b16 %v5749
        %v5885 = vunpack.c.l.b16 %v5750
        %v5886 = vunpack.c.l.b16 %v5751
        %v5887 = vunpack.c.l.b16 %v5752
        %v5888 = vunpack.c.l.b16 %v5753
        %v5889 = vunpack.c.l.b16 %v5754
        %v5890 = vunpack.c.l.b16 %v5755
        %v5891 = vunpack.c.l.b16 %v5756
        %v5892 = vunpack.c.l.b16 %v5757
        %v5893 = vunpack.c.l.b16 %v5758
        %v5894 = vunpack.c.l.b16 %v5759
        %v5895 = vunpack.c.l.b16 %v5760
        %v5896 = vunpack.c.l.b16 %v5761
        %v5897 = vunpack.c.l.b16 %v5762
        %v5898 = vunpack.c.l.b16 %v5763
        %v5899 = vunpack.c.l.b16 %v5764
        %v5900 = vunpack.c.l.b16 %v5765
        %v5901 = vunpack.c.l.b16 %v5766
        %v5902 = vunpack.c.l.b16 %v5767
        %v5903 = vunpack.c.l.b16 %v5768
        %v5904 = vunpack.c.l.b16 %v5769
        %v5905 = vunpack.c.l.b16 %v5770
        %v5906 = vunpack.c.l.b16 %v5771
        %v5907 = vunpack.c.l.b16 %v5772
        %v5908 = vunpack.c.l.b16 %v5773
        %v5909 = vunpack.c.l.b16 %v5774
        %v5910 = vunpack.c.l.b16 %v5775
        %v5911 = vunpack.c.l.b16 %v5776
        %v5912 = vunpack.c.l.b16 %v5777
        %v5913 = vunpack.c.l.b16 %v5778
        %v5914 = vunpack.c.l.b16 %v5779
        %v5915 = vunpack.c.l.b16 %v5780
        %v5916 = vunpack.c.l.b16 %v5781
        %v5917 = vunpack.c.l.b16 %v5782
        %v5918 = vunpack.c.l.b16 %v5783
        %v5919 = vunpack.c.l.b16 %v5784
        %v5920 = vunpack.c.l.b16 %v5785
        %v5921 = vunpack.c.l.b16 %v5786
        %v5922 = vunpack.c.l.b16 %v5787
        %v5923 = vunpack.c.l.b16 %v5788
        %v5924 = vunpack.c.l.b16 %v5789
        %v5925 = vunpack.c.l.b16 %v5790
        %v5926 = vunpack.c.l.b16 %v5791
        %v5927 = vunpack.c.l.b16 %v5792
        %v5928 = vunpack.c.l.b16 %v5793
        %v5929 = vunpack.c.l.b16 %v5794
        %v5930 = vunpack.c.l.b16 %v5795
        %v5931 = vunpack.c.l.b16 %v5796
        %v5932 = vunpack.c.l.b16 %v5797
        %v5933 = vunpack.c.l.b16 %v5798
        %v5934 = vunpack.c.l.b16 %v5799
        %v5935 = vunpack.c.l.b16 %v5800
        %v5936 = vunpack.c.l.b16 %v5801
        %v5937 = vunpack.c.l.b16 %v5802
        %v5938 = vunpack.c.l.b16 %v5803
        %v5939 = vunpack.c.l.b16 %v5804
        %v5940 = vunpack.c.l.b16 %v5805
        %v5941 = vunpack.c.l.b16 %v5806
        %v5942 = vpack.c.b16 %v5879, %v5878
        %v5943 = vpack.c.b16 %v5881, %v5880
        %v5944 = vpack.c.b16 %v5883, %v5882
        %v5945 = vpack.c.b16 %v5885, %v5884
        %v5946 = vpack.c.b16 %v5887, %v5886
        %v5947 = vpack.c.b16 %v5889, %v5888
        %v5948 = vpack.c.b16 %v5891, %v5890
        %v5949 = vpack.c.b16 %v5893, %v5892
        %v5950 = vpack.c.b16 %v5895, %v5894
        %v5951 = vpack.c.b16 %v5897, %v5896
        %v5952 = vpack.c.b16 %v5899, %v5898
        %v5953 = vpack.c.b16 %v5901, %v5900
        %v5954 = vpack.c.b16 %v5903, %v5902
        %v5955 = vpack.c.b16 %v5905, %v5904
        %v5956 = vpack.c.b16 %v5907, %v5906
        %v5957 = vpack.c.b16 %v5909, %v5908
        %v5958 = vpack.c.b16 %v5911, %v5910
        %v5959 = vpack.c.b16 %v5913, %v5912
        %v5960 = vpack.c.b16 %v5915, %v5914
        %v5961 = vpack.c.b16 %v5917, %v5916
        %v5962 = vpack.c.b16 %v5919, %v5918
        %v5963 = vpack.c.b16 %v5921, %v5920
        %v5964 = vpack.c.b16 %v5923, %v5922
        %v5965 = vpack.c.b16 %v5925, %v5924
        %v5966 = vpack.c.b16 %v5927, %v5926
        %v5967 = vpack.c.b16 %v5929, %v5928
        %v5968 = vpack.c.b16 %v5931, %v5930
        %v5969 = vpack.c.b16 %v5933, %v5932
        %v5970 = vpack.c.b16 %v5935, %v5934
        %v5971 = vpack.c.b16 %v5937, %v5936
        %v5972 = vpack.c.b16 %v5939, %v5938
        %v5973 = vpack.c.b16 %v5941, %v5940
        %6006 = vmatprep.subr.bf16.mxu0 0
        %6007 = vmatpush1.bf16.msra.mxu0 %v5942
        %6008 = vmatprep.subr.bf16.mxu0 0
        %6009 = vmatpush1.bf16.msra.mxu0 %v5943
        %6010 = vmatprep.subr.bf16.mxu0 0
        %6011 = vmatpush1.bf16.msra.mxu0 %v5944
        %6012 = vmatprep.subr.bf16.mxu0 0
        %6013 = vmatpush1.bf16.msra.mxu0 %v5945
        %6014 = vmatprep.subr.bf16.mxu0 0
        %6015 = vmatpush1.bf16.msra.mxu0 %v5946
        %6016 = vmatprep.subr.bf16.mxu0 0
        %6017 = vmatpush1.bf16.msra.mxu0 %v5947
        %6018 = vmatprep.subr.bf16.mxu0 0
        %6019 = vmatpush1.bf16.msra.mxu0 %v5948
        %6020 = vmatprep.subr.bf16.mxu0 0
        %6021 = vmatpush1.bf16.msra.mxu0 %v5949
        %6022 = vmatprep.subr.bf16.mxu0 0
        %6023 = vmatpush1.bf16.msra.mxu0 %v5950
        %6024 = vmatprep.subr.bf16.mxu0 0
        %6025 = vmatpush1.bf16.msra.mxu0 %v5951
        %6026 = vmatprep.subr.bf16.mxu0 0
        %6027 = vmatpush1.bf16.msra.mxu0 %v5952
        %6028 = vmatprep.subr.bf16.mxu0 0
        %6029 = vmatpush1.bf16.msra.mxu0 %v5953
        %6030 = vmatprep.subr.bf16.mxu0 0
        %6031 = vmatpush1.bf16.msra.mxu0 %v5954
        %6032 = vmatprep.subr.bf16.mxu0 0
        %6033 = vmatpush1.bf16.msra.mxu0 %v5955
        %6034 = vmatprep.subr.bf16.mxu0 0
        %6035 = vmatpush1.bf16.msra.mxu0 %v5956
        %6036 = vmatprep.subr.bf16.mxu0 0
        %6037 = vmatpush1.bf16.msra.mxu0 %v5957
        %6038 = vmatprep.mubr.bf16.mxu0 %v5712
        %6039 = vmatmul.mubr.bf16.gmra.mrb[0].mxu0 %v5711
        %v6040 = vpop.f32.mrb[0].mxu0
        %v6041 = vadd.f32 %v5812, %v6040
        %v6042 = vpop.f32.mrb[0].mxu0
        %v6043 = vpop.f32.mrb[0].mxu0
        %v6044 = vadd.f32 %v5812, %v6043
        %v6045 = vpop.f32.mrb[0].mxu0
        %6046 = vmatprep.mubr.bf16.mxu0 %v5716
        %6047 = vmatmul.mubr.bf16.gmra.mrb[0].mxu0 %v5715
        %v6048 = vpop.f32.mrb[0].mxu0
        %v6049 = vadd.f32 %v5812, %v6048
        %v6050 = vpop.f32.mrb[0].mxu0
        %v6051 = vpop.f32.mrb[0].mxu0
        %v6052 = vadd.f32 %v5812, %v6051
        %v6053 = vpop.f32.mrb[0].mxu0
        %6054 = vmatprep.mubr.bf16.mxu0 %v5720
        %6055 = vmatmul.mubr.bf16.gmra.mrb[0].mxu0 %v5719
        %v6056 = vpop.f32.mrb[0].mxu0
        %v6057 = vadd.f32 %v5812, %v6056
        %v6058 = vpop.f32.mrb[0].mxu0
        %v6059 = vpop.f32.mrb[0].mxu0
        %v6060 = vadd.f32 %v5812, %v6059
        %v6061 = vpop.f32.mrb[0].mxu0
        %6062 = vmatprep.mubr.bf16.mxu0 %v5724
        %6063 = vmatmul.mubr.bf16.gmra.mrb[0].mxu0 %v5723
        %v6064 = vpop.f32.mrb[0].mxu0
        %v6065 = vadd.f32 %v5812, %v6064
        %v6066 = vpop.f32.mrb[0].mxu0
        %v6067 = vpop.f32.mrb[0].mxu0
        %v6068 = vadd.f32 %v5812, %v6067
        %v6069 = vpop.f32.mrb[0].mxu0
        %6070 = vmatprep.mubr.bf16.mxu0 %v5728
        %6071 = vmatmul.mubr.bf16.gmra.mrb[0].mxu0 %v5727
        %v6072 = vpop.f32.mrb[0].mxu0
        %v6073 = vadd.f32 %v5812, %v6072
        %v6074 = vpop.f32.mrb[0].mxu0
        %v6075 = vpop.f32.mrb[0].mxu0
        %v6076 = vadd.f32 %v5812, %v6075
        %v6077 = vpop.f32.mrb[0].mxu0
        %6078 = vmatprep.mubr.bf16.mxu0 %v5732
        %6079 = vmatmul.mubr.bf16.gmra.mrb[0].mxu0 %v5731
        %v6080 = vpop.f32.mrb[0].mxu0
        %v6081 = vadd.f32 %v5812, %v6080
        %v6082 = vpop.f32.mrb[0].mxu0
        %v6083 = vpop.f32.mrb[0].mxu0
        %v6084 = vadd.f32 %v5812, %v6083
        %v6085 = vpop.f32.mrb[0].mxu0
        %6086 = vmatprep.mubr.bf16.mxu0 %v5736
        %6087 = vmatmul.mubr.bf16.gmra.mrb[0].mxu0 %v5735
        %v6088 = vpop.f32.mrb[0].mxu0
        %v6089 = vadd.f32 %v5812, %v6088
        %v6090 = vpop.f32.mrb[0].mxu0
        %v6091 = vpop.f32.mrb[0].mxu0
        %v6092 = vadd.f32 %v5812, %v6091
        %v6093 = vpop.f32.mrb[0].mxu0
        %6094 = vmatprep.mubr.bf16.mxu0 %v5740
        %6095 = vmatmul.mubr.bf16.gmra.mrb[0].mxu0 %v5739
        %v6096 = vpop.f32.mrb[0].mxu0
        %v6097 = vadd.f32 %v5812, %v6096
        %v6098 = vpop.f32.mrb[0].mxu0
        %v6099 = vpop.f32.mrb[0].mxu0
        %v6100 = vadd.f32 %v5812, %v6099
        %v6101 = vpop.f32.mrb[0].mxu0
        %6102 = vdwg.mxu0
        %6103 = vmatprep.subr.bf16.mxu0 0
        %6104 = vmatpush1.bf16.msra.mxu0 %v5958
        %6105 = vmatprep.subr.bf16.mxu0 0
        %6106 = vmatpush1.bf16.msra.mxu0 %v5959
        %6107 = vmatprep.subr.bf16.mxu0 0
        %6108 = vmatpush1.bf16.msra.mxu0 %v5960
        %6109 = vmatprep.subr.bf16.mxu0 0
        %6110 = vmatpush1.bf16.msra.mxu0 %v5961
        %6111 = vmatprep.subr.bf16.mxu0 0
        %6112 = vmatpush1.bf16.msra.mxu0 %v5962
        %6113 = vmatprep.subr.bf16.mxu0 0
        %6114 = vmatpush1.bf16.msra.mxu0 %v5963
        %6115 = vmatprep.subr.bf16.mxu0 0
        %6116 = vmatpush1.bf16.msra.mxu0 %v5964
        %6117 = vmatprep.subr.bf16.mxu0 0
        %6118 = vmatpush1.bf16.msra.mxu0 %v5965
        %6119 = vmatprep.subr.bf16.mxu0 0
        %6120 = vmatpush1.bf16.msra.mxu0 %v5966
        %6121 = vmatprep.subr.bf16.mxu0 0
        %6122 = vmatpush1.bf16.msra.mxu0 %v5967
        %6123 = vmatprep.subr.bf16.mxu0 0
        %6124 = vmatpush1.bf16.msra.mxu0 %v5968
        %6125 = vmatprep.subr.bf16.mxu0 0
        %6126 = vmatpush1.bf16.msra.mxu0 %v5969
        %6127 = vmatprep.subr.bf16.mxu0 0
        %6128 = vmatpush1.bf16.msra.mxu0 %v5970
        %6129 = vmatprep.subr.bf16.mxu0 0
        %6130 = vmatpush1.bf16.msra.mxu0 %v5971
        %6131 = vmatprep.subr.bf16.mxu0 0
        %6132 = vmatpush1.bf16.msra.mxu0 %v5972
        %6133 = vmatprep.subr.bf16.mxu0 0
        %6134 = vmatpush1.bf16.msra.mxu0 %v5973
        %6135 = vmatprep.mubr.bf16.mxu0 %v5714
        %6136 = vmatmul.mubr.bf16.gmra.mrb[0].mxu0 %v5713
        %v6137 = vpop.f32.mrb[0].mxu0
        %v6138 = vadd.f32 %v6041, %v6137
        %v6139 = vpop.f32.mrb[0].mxu0
        %v6140 = vpop.f32.mrb[0].mxu0
        %v6141 = vadd.f32 %v6044, %v6140
        %v6142 = vpop.f32.mrb[0].mxu0
        %6143 = vmatprep.mubr.bf16.mxu0 %v5718
        %6144 = vmatmul.mubr.bf16.gmra.mrb[0].mxu0 %v5717
        %v6145 = vpop.f32.mrb[0].mxu0
        %v6146 = vadd.f32 %v6049, %v6145
        %v6147 = vpop.f32.mrb[0].mxu0
        %v6148 = vpop.f32.mrb[0].mxu0
        %v6149 = vadd.f32 %v6052, %v6148
        %v6150 = vpop.f32.mrb[0].mxu0
        %6151 = vmatprep.mubr.bf16.mxu0 %v5722
        %6152 = vmatmul.mubr.bf16.gmra.mrb[0].mxu0 %v5721
        %v6153 = vpop.f32.mrb[0].mxu0
        %v6154 = vadd.f32 %v6057, %v6153
        %v6155 = vpop.f32.mrb[0].mxu0
        %v6156 = vpop.f32.mrb[0].mxu0
        %v6157 = vadd.f32 %v6060, %v6156
        %v6158 = vpop.f32.mrb[0].mxu0
        %6159 = vmatprep.mubr.bf16.mxu0 %v5726
        %6160 = vmatmul.mubr.bf16.gmra.mrb[0].mxu0 %v5725
        %v6161 = vpop.f32.mrb[0].mxu0
        %v6162 = vadd.f32 %v6065, %v6161
        %v6163 = vpop.f32.mrb[0].mxu0
        %v6164 = vpop.f32.mrb[0].mxu0
        %v6165 = vadd.f32 %v6068, %v6164
        %v6166 = vpop.f32.mrb[0].mxu0
        %6167 = vmatprep.mubr.bf16.mxu0 %v5730
        %6168 = vmatmul.mubr.bf16.gmra.mrb[0].mxu0 %v5729
        %v6169 = vpop.f32.mrb[0].mxu0
        %v6170 = vadd.f32 %v6073, %v6169
        %v6171 = vpop.f32.mrb[0].mxu0
        %v6172 = vpop.f32.mrb[0].mxu0
        %v6173 = vadd.f32 %v6076, %v6172
        %v6174 = vpop.f32.mrb[0].mxu0
        %6175 = vmatprep.mubr.bf16.mxu0 %v5734
        %6176 = vmatmul.mubr.bf16.gmra.mrb[0].mxu0 %v5733
        %v6177 = vpop.f32.mrb[0].mxu0
        %v6178 = vadd.f32 %v6081, %v6177
        %v6179 = vpop.f32.mrb[0].mxu0
        %v6180 = vpop.f32.mrb[0].mxu0
        %v6181 = vadd.f32 %v6084, %v6180
        %v6182 = vpop.f32.mrb[0].mxu0
        %6183 = vmatprep.mubr.bf16.mxu0 %v5738
        %6184 = vmatmul.mubr.bf16.gmra.mrb[0].mxu0 %v5737
        %v6185 = vpop.f32.mrb[0].mxu0
        %v6186 = vadd.f32 %v6089, %v6185
        %v6187 = vpop.f32.mrb[0].mxu0
        %v6188 = vpop.f32.mrb[0].mxu0
        %v6189 = vadd.f32 %v6092, %v6188
        %v6190 = vpop.f32.mrb[0].mxu0
        %6191 = vmatprep.mubr.bf16.mxu0 %v5742
        %6192 = vmatmul.mubr.bf16.gmra.mrb[0].mxu0 %v5741
        %v6193 = vpop.f32.mrb[0].mxu0
        %v6194 = vadd.f32 %v6097, %v6193
        %v6195 = vpop.f32.mrb[0].mxu0
        %v6196 = vpop.f32.mrb[0].mxu0
        %v6197 = vadd.f32 %v6100, %v6196
        %v6198 = vpop.f32.mrb[0].mxu0
        %6199 = vdwg.mxu0
        %v6200 = vadd.f32 %v4705, %v6138
        %v6201 = vadd.f32 %v4706, %v6141
        %v6202 = vadd.f32 %v4707, %v6146
        %v6203 = vadd.f32 %v4708, %v6149
        %v6204 = vadd.f32 %v4709, %v6154
        %v6205 = vadd.f32 %v4710, %v6157
        %v6206 = vadd.f32 %v4711, %v6162
        %v6207 = vadd.f32 %v4712, %v6165
        %v6208 = vadd.f32 %v4713, %v6170
        %v6209 = vadd.f32 %v4714, %v6173
        %v6210 = vadd.f32 %v4715, %v6178
        %v6211 = vadd.f32 %v4716, %v6181
        %v6212 = vadd.f32 %v4717, %v6186
        %v6213 = vadd.f32 %v4718, %v6189
        %v6214 = vadd.f32 %v4719, %v6194
        %v6215 = vadd.f32 %v4720, %v6197
        %6216 = vst [vmem:[%s503] sm:$0xff] %v6200
        %6217 = vst [vmem:[%s503 + $0x8] sm:$0xff] %v6201
        %6218 = vst [vmem:[%s503 + $0x10] sm:$0xff] %v6202
        %6219 = vst [vmem:[%s503 + $0x18] sm:$0xff] %v6203
        %6220 = vst [vmem:[%s503 + $0x20] sm:$0xff] %v6204
        %6221 = vst [vmem:[%s503 + $0x28] sm:$0xff] %v6205
        %6222 = vst [vmem:[%s503 + $0x30] sm:$0xff] %v6206
        %6223 = vst [vmem:[%s503 + $0x38] sm:$0xff] %v6207
        %6224 = vst [vmem:[%s503 + $0x40] sm:$0xff] %v6208
        %6225 = vst [vmem:[%s503 + $0x48] sm:$0xff] %v6209
        %6226 = vst [vmem:[%s503 + $0x50] sm:$0xff] %v6210
        %6227 = vst [vmem:[%s503 + $0x58] sm:$0xff] %v6211
        %6228 = vst [vmem:[%s503 + $0x60] sm:$0xff] %v6212
        %6229 = vst [vmem:[%s503 + $0x68] sm:$0xff] %v6213
        %6230 = vst [vmem:[%s503 + $0x70] sm:$0xff] %v6214
        %6231 = vst [vmem:[%s503 + $0x78] sm:$0xff] %v6215
        %s6232 = sand.u32 %s310, 1
        %s6233 = scalar_lea.sflag [#allocation6], %s6232
        %s6234 = sand.u32 %s310, 1
        %s6235 = smul.addr %s6234, 128
        %s6236 = scalar_lea.vmem [#allocation13], %s6235
        // Predicated region
        $region93: #{tpu_custom_call.1} parent=67 // pred_check
          %p6237 = pneg %p320
        $region94: #{tpu_custom_call.1} parent=67 // pred_check_branch
          %6239 = sbr.rel (%p6237) target = $region96
        $region95: #{tpu_custom_call.1} parent=67 // pred_region
          %s6240 = smul.u32 16, %s36
          %s6242 = ssub.s32 2048, 2048
          %6243 = vsyncadd %s6233, %s6242
          %s6244 = smul.addr %s35, 32
          %s6245 = sadd.s32 %s6240, %s6244
          %s6246 = smul.addr %s6245, 128
          %s6247 = scalar_lea.hbm %s12, %s6246
          %s6248 = sshll.u32 %s6236, 4
          %s6249 = int_to_ptr.vmem [resolvable:$true] %s6248
          %6254 = dma.vmem_to_hbm [thread:$0]  %s6249, 2048, %s6247, %s6233, 128, 128, 8
        $region96: #{tpu_custom_call.1} parent=67 // pred_fallthru
          _
      $region68: #{tpu_custom_call.1} parent=5 // pred_fallthru
        _
      %p6255 = scmp.le.s32.totalorder 2, %s26
      // Predicated region
      $region97: #{tpu_custom_call.1} parent=5 // pred_check
        %p6256 = pneg %p6255
      $region98: #{tpu_custom_call.1} parent=5 // pred_check_branch
        %6258 = sbr.rel (%p6256) target = $region100
      $region99: #{tpu_custom_call.1} parent=5 // pred_region
        %s6259 = ssub.s32 %s26, 2
        // Predicated region
        $region101: #{tpu_custom_call.1} parent=99 // pred_check
          %p6260 = pneg %p326
        $region102: #{tpu_custom_call.1} parent=99 // pred_check_branch
          %6262 = sbr.rel (%p6260) target = $region104
        $region103: #{tpu_custom_call.1} parent=99 // pred_region
          %s6263 = sand.u32 %s311, 1
          %s6264 = scalar_lea.sflag [#allocation6], %s6263
          %s6265 = sand.u32 %s311, 1
          %s6266 = smul.addr %s6265, 128
          %s6267 = scalar_lea.vmem [#allocation13], %s6266
          %6268 = dma.done %s6264, 2048
        $region104: #{tpu_custom_call.1} parent=99 // pred_fallthru
          _
      $region100: #{tpu_custom_call.1} parent=5 // pred_fallthru
        _
    $region6: #{tpu_custom_call.1} parent=1 // loop_footer
      %s30 = sadd.s32 1, %s26
    $region7: #{tpu_custom_call.1} parent=1 // loop_footer_branch
      %25 = sbr.rel target = $region3
    $region8: #{tpu_custom_call.1} parent=1 // loop_exit
      _
    %6269 = vsyncpa [#allocation5], 1
    %s6270 = scalar_lea.sflag [#allocation5], 1
    %6271 = vsyncpa %s6270, 1
    %6272 = vsyncpa [#allocation8], 1
    %6273 = vsyncpa [#allocation11], 1
    %6274 = vsyncpa [#allocation6], 1
    %s6275 = scalar_lea.sflag [#allocation6], 1
    %6276 = vsyncpa %s6275, 1

</llo_original>
